<compile_context>
chip_gen: v7x
topology: tpu7x:2x2x1
jax: 0.10.0
libtpu: 0.0.40
codegen_flags: <defaults>
</compile_context>

<pallas_src>
import functools
import math

import jax
import jax.numpy as jnp
from jax import lax
from jax.experimental import pallas as pl
from jax.experimental.pallas import tpu as pltpu


def _round_up(x, m):
    return ((x + m - 1) // m) * m


# ----------------------------------------------------------------------------
# Tiled GEMM (+bias, optional tanh) kernels used for the hoisted input
# projection (x @ W_ih + b) and the final Linear+tanh projection.
# ----------------------------------------------------------------------------
def _mm1_kernel(a_ref, w_ref, b_ref, o_ref, *, apply_tanh):
    acc = (jnp.dot(a_ref[...], w_ref[...], preferred_element_type=jnp.float32)
           + b_ref[...])
    o_ref[...] = jnp.tanh(acc) if apply_tanh else acc


def _mm2_kernel(a_ref, c_ref, wa_ref, wc_ref, b_ref, o_ref, *, apply_tanh):
    acc = (jnp.dot(a_ref[...], wa_ref[...], preferred_element_type=jnp.float32)
           + jnp.dot(c_ref[...], wc_ref[...], preferred_element_type=jnp.float32)
           + b_ref[...])
    o_ref[...] = jnp.tanh(acc) if apply_tanh else acc


def _matmul_bias(a, w, b, *, apply_tanh=False, tile_n=512):
    """out = act(a @ w + b), tiled over rows of `a`."""
    n, d = a.shape
    dout = w.shape[1]
    tn = min(tile_n, _round_up(n, 8))
    n_pad = _round_up(n, tn)
    if n_pad != n:
        a = jnp.pad(a, ((0, n_pad - n), (0, 0)))
    out = pl.pallas_call(
        functools.partial(_mm1_kernel, apply_tanh=apply_tanh),
        out_shape=jax.ShapeDtypeStruct((n_pad, dout), jnp.float32),
        grid_spec=pltpu.PrefetchScalarGridSpec(
            num_scalar_prefetch=0,
            grid=(n_pad // tn,),
            in_specs=[pl.BlockSpec((tn, d), lambda i: (i, 0)),
                      pl.BlockSpec((d, dout), lambda i: (0, 0)),
                      pl.BlockSpec((1, dout), lambda i: (0, 0))],
            out_specs=pl.BlockSpec((tn, dout), lambda i: (i, 0)),
        ),
        compiler_params=pltpu.CompilerParams(
            dimension_semantics=("parallel",)),
    )(a, w, b)
    return out[:n] if n_pad != n else out


def _matmul2_bias(a, c, wa, wc, b, *, apply_tanh=False, tile_n=512):
    """out = act(a @ wa + c @ wc + b)  (avoids concat of the two operands)."""
    n, da = a.shape
    dc = c.shape[1]
    dout = wa.shape[1]
    tn = min(tile_n, _round_up(n, 8))
    n_pad = _round_up(n, tn)
    if n_pad != n:
        a = jnp.pad(a, ((0, n_pad - n), (0, 0)))
        c = jnp.pad(c, ((0, n_pad - n), (0, 0)))
    out = pl.pallas_call(
        functools.partial(_mm2_kernel, apply_tanh=apply_tanh),
        out_shape=jax.ShapeDtypeStruct((n_pad, dout), jnp.float32),
        grid_spec=pltpu.PrefetchScalarGridSpec(
            num_scalar_prefetch=0,
            grid=(n_pad // tn,),
            in_specs=[pl.BlockSpec((tn, da), lambda i: (i, 0)),
                      pl.BlockSpec((tn, dc), lambda i: (i, 0)),
                      pl.BlockSpec((da, dout), lambda i: (0, 0)),
                      pl.BlockSpec((dc, dout), lambda i: (0, 0)),
                      pl.BlockSpec((1, dout), lambda i: (0, 0))],
            out_specs=pl.BlockSpec((tn, dout), lambda i: (i, 0)),
        ),
        compiler_params=pltpu.CompilerParams(
            dimension_semantics=("parallel",)),
    )(a, c, wa, wc, b)
    return out[:n] if n_pad != n else out


# ----------------------------------------------------------------------------
# Fused bidirectional LSTM recurrence kernel.
# Grid iterates over blocks of TT time steps (sequential / "arbitrary").
# Per grid step: forward direction processes times [g*TT, (g+1)*TT), backward
# direction processes the mirrored times [T-1-g*TT, ...] via reversed
# index_maps on its gate input and its output.
# ----------------------------------------------------------------------------
def _bilstm_kernel(gx_f_ref, gx_b_ref, whh_f_ref, whh_b_ref, ilens_ref,
                   out_f_ref, out_b_ref, h_f, c_f, h_b, c_b, *, tt, t_total):
    g = pl.program_id(0)

    @pl.when(g == 0)
    def _():
        h_f[...] = jnp.zeros_like(h_f)
        c_f[...] = jnp.zeros_like(c_f)
        h_b[...] = jnp.zeros_like(h_b)
        c_b[...] = jnp.zeros_like(c_b)

    lens = ilens_ref[...]                      # (B, 1) int32
    H = h_f.shape[-1]

    def gate_math(gates, c_prev):
        i_g = jax.nn.sigmoid(gates[:, 0 * H:1 * H])
        f_g = jax.nn.sigmoid(gates[:, 1 * H:2 * H])
        g_g = jnp.tanh(gates[:, 2 * H:3 * H])
        o_g = jax.nn.sigmoid(gates[:, 3 * H:4 * H])
        c_new = f_g * c_prev + i_g * g_g
        h_new = o_g * jnp.tanh(c_new)
        return h_new, c_new

    def body(j, carry):
        # ---- forward direction, global time t = g*tt + j ----
        t_fwd = g * tt + j
        hp, cp = h_f[...], c_f[...]
        gates = gx_f_ref[j] + jnp.dot(hp, whh_f_ref[...],
                                      preferred_element_type=jnp.float32)
        h_new, c_new = gate_math(gates, cp)
        m = t_fwd < lens                       # (B, 1) bool
        c_f[...] = jnp.where(m, c_new, cp)
        h_f[...] = jnp.where(m, h_new, hp)
        out_f_ref[j] = jnp.where(m, h_new, 0.0)

        # ---- backward direction, global time t = T-1 - (g*tt + j) ----
        t_bwd = t_total - 1 - t_fwd
        hp, cp = h_b[...], c_b[...]
        gates = gx_b_ref[tt - 1 - j] + jnp.dot(hp, whh_b_ref[...],
                                               preferred_element_type=jnp.float32)
        h_new, c_new = gate_math(gates, cp)
        m = t_bwd < lens
        c_b[...] = jnp.where(m, c_new, cp)
        h_b[...] = jnp.where(m, h_new, hp)
        out_b_ref[tt - 1 - j] = jnp.where(m, h_new, 0.0)
        return carry

    lax.fori_loop(0, tt, body, 0, unroll=True)


def _bilstm_layer(gx_f, gx_b, w_hh_f, w_hh_b, ilens_2d, tt):
    """One fused bidirectional LSTM layer.

    gx_f / gx_b: (Tp, B, 4H) pre-projected gate inputs (x@W_ih + b) for the
    forward / backward direction (time-major, padded to multiple of tt).
    Returns (out_f, out_b), each (Tp, B, H), zeros past each ilen.
    """
    Tp, B, G = gx_f.shape
    H = w_hh_f.shape[0]
    nblk = Tp // tt
    kernel = functools.partial(_bilstm_kernel, tt=tt, t_total=Tp)
    return pl.pallas_call(
        kernel,
        out_shape=(jax.ShapeDtypeStruct((Tp, B, H), jnp.float32),
                   jax.ShapeDtypeStruct((Tp, B, H), jnp.float32)),
        grid_spec=pltpu.PrefetchScalarGridSpec(
            num_scalar_prefetch=0,
            grid=(nblk,),
            in_specs=[
                pl.BlockSpec((tt, B, G), lambda g: (g, 0, 0)),
                pl.BlockSpec((tt, B, G), lambda g: (nblk - 1 - g, 0, 0)),
                pl.BlockSpec((H, G), lambda g: (0, 0)),
                pl.BlockSpec((H, G), lambda g: (0, 0)),
                pl.BlockSpec((B, 1), lambda g: (0, 0)),
            ],
            out_specs=(
                pl.BlockSpec((tt, B, H), lambda g: (g, 0, 0)),
                pl.BlockSpec((tt, B, H), lambda g: (nblk - 1 - g, 0, 0)),
            ),
            scratch_shapes=[pltpu.VMEM((B, H), jnp.float32)
                            for _ in range(4)],
        ),
        compiler_params=pltpu.CompilerParams(
            dimension_semantics=("arbitrary",)),
    )(gx_f, gx_b, w_hh_f, w_hh_b, ilens_2d)


# ----------------------------------------------------------------------------
# Parameter construction (deterministic, PyTorch-style uniform(-k, k))
# ----------------------------------------------------------------------------
def init_blstm_params(key, idim, elayers, cdim, hdim):
    params = {"layers": []}
    k_lstm = 1.0 / math.sqrt(cdim)
    for layer in range(elayers):
        d_in = idim if layer == 0 else 2 * cdim
        dirs = []
        for _ in range(2):  # forward, backward
            key, k1, k2, k3, k4 = jax.random.split(key, 5)
            w_ih = jax.random.uniform(k1, (d_in, 4 * cdim), jnp.float32,
                                      -k_lstm, k_lstm)
            w_hh = jax.random.uniform(k2, (cdim, 4 * cdim), jnp.float32,
                                      -k_lstm, k_lstm)
            b_ih = jax.random.uniform(k3, (4 * cdim,), jnp.float32,
                                      -k_lstm, k_lstm)
            b_hh = jax.random.uniform(k4, (4 * cdim,), jnp.float32,
                                      -k_lstm, k_lstm)
            dirs.append({"w_ih": w_ih, "w_hh": w_hh,
                         "b": (b_ih + b_hh)[None, :]})
        params["layers"].append(dirs)
    k_lin = 1.0 / math.sqrt(2 * cdim)
    key, k1, k2 = jax.random.split(key, 3)
    params["w_last"] = jax.random.uniform(k1, (2 * cdim, hdim), jnp.float32,
                                          -k_lin, k_lin)   # stored as W^T
    params["b_last"] = jax.random.uniform(k2, (1, hdim), jnp.float32,
                                          -k_lin, k_lin)
    return params


# ----------------------------------------------------------------------------
# Forward (== BLSTM.forward): xpad (B, T, idim) batch-first, ilens (B,)
# ----------------------------------------------------------------------------
_TT = 8  # time steps processed per recurrence grid iteration


@jax.jit
def blstm_forward(params, xpad, ilens):
    B, T, idim = xpad.shape
    Tp = _round_up(T, _TT)

    x = jnp.transpose(xpad, (1, 0, 2)).astype(jnp.float32)      # (T, B, idim)
    if Tp != T:
        x = jnp.pad(x, ((0, Tp - T), (0, 0), (0, 0)))
    ilens_2d = ilens.astype(jnp.int32).reshape(B, 1)

    out_f = out_b = None
    for li, dirs in enumerate(params["layers"]):
        H = dirs[0]["w_hh"].shape[0]
        if li == 0:
            a2d = x.reshape(Tp * B, idim)
            gx_f = _matmul_bias(a2d, dirs[0]["w_ih"], dirs[0]["b"])
            gx_b = _matmul_bias(a2d, dirs[1]["w_ih"], dirs[1]["b"])
        else:
            Hp = out_f.shape[-1]
            af = out_f.reshape(Tp * B, Hp)
            ab = out_b.reshape(Tp * B, Hp)
            wf, wb = dirs[0]["w_ih"], dirs[1]["w_ih"]
            gx_f = _matmul2_bias(af, ab, wf[:Hp], wf[Hp:], dirs[0]["b"])
            gx_b = _matmul2_bias(af, ab, wb[:Hp], wb[Hp:], dirs[1]["b"])
        gx_f = gx_f.reshape(Tp, B, 4 * H)
        gx_b = gx_b.reshape(Tp, B, 4 * H)
        out_f, out_b = _bilstm_layer(gx_f, gx_b, dirs[0]["w_hh"],
                                     dirs[1]["w_hh"], ilens_2d, _TT)
        # TODO(synk): inter-layer dropout skipped (inference semantics).

    # Final projection: tanh([out_f, out_b] @ W_last + b) without the concat.
    H = out_f.shape[-1]
    wl = params["w_last"]
    proj = _matmul2_bias(out_f.reshape(Tp * B, H), out_b.reshape(Tp * B, H),
                         wl[:H], wl[H:], params["b_last"], apply_tanh=True)
    out = proj.reshape(Tp, B, -1)[:T]                            # (T, B, hdim)
    out = jnp.transpose(out, (1, 0, 2))                          # (B, T, hdim)
    return out, ilens


if __name__ == "__main__":
    # Small shapes consistent with the module.
    B, T = 2, 8
    idim, elayers, cdim, hdim, dropout = 16, 2, 32, 32, 0.0

    key = jax.random.PRNGKey(0)
    kx, kp = jax.random.split(key)
    xpad = jax.random.normal(kx, (B, T, idim), dtype=jnp.float32)
    ilens = jnp.array([8, 6], dtype=jnp.int32)   # sorted descending, max == T

    params = init_blstm_params(kp, idim, elayers, cdim, hdim)

    out, out_lens = blstm_forward(params, xpad, ilens)
    jax.block_until_ready(out)

    assert out.shape == (B, T, hdim)
    assert out_lens.shape == (B,)
    print("KERNEL_OK")
</pallas_src>

<mosaic_0001>
module attributes {stable_mosaic.version = 11 : i64} {
  func.func @_mm1_kernel(%arg0: i32, %arg1: memref<16x16xf32, #tpu.memory_space<vmem>>, %arg2: memref<16x128xf32, #tpu.memory_space<vmem>>, %arg3: memref<1x128xf32, #tpu.memory_space<vmem>>, %arg4: memref<16x128xf32, #tpu.memory_space<vmem>>) attributes {dimension_semantics = [#tpu.dimension_semantics<parallel>], iteration_bounds = array<i64: 1>, scalar_prefetch = 0 : i64, scratch_operands = 0 : i64, tpu.core_type = #tpu.core_type<tc>, window_params = [{transform_indices = @transform_0, window_bounds = array<i64: 16, 16>}, {pipeline_mode = #tpu.pipeline_mode<synchronous>, transform_indices = @transform_1, window_bounds = array<i64: 16, 128>}, {pipeline_mode = #tpu.pipeline_mode<synchronous>, transform_indices = @transform_2, window_bounds = array<i64: 1, 128>}, {transform_indices = @transform_3, window_bounds = array<i64: 16, 128>}]} {
    %c0 = arith.constant 0 : index
    %c0_0 = arith.constant 0 : index
    %0 = vector.load %arg1[%c0, %c0_0] : memref<16x16xf32, #tpu.memory_space<vmem>>, vector<16x16xf32>
    %c0_1 = arith.constant 0 : index
    %c0_2 = arith.constant 0 : index
    %1 = vector.load %arg2[%c0_1, %c0_2] : memref<16x128xf32, #tpu.memory_space<vmem>>, vector<16x128xf32>
    %cst = arith.constant dense<0.000000e+00> : vector<16x128xf32>
    %2 = tpu.matmul %0, %1, %cst {dimension_numbers = #tpu.dot_dimension_numbers<[1], [0], [0], [1], [0, 0, 1, 1], [], []>} : vector<16x16xf32>, vector<16x128xf32>, vector<16x128xf32> -> vector<16x128xf32>
    %c0_3 = arith.constant 0 : index
    %c0_4 = arith.constant 0 : index
    %3 = vector.load %arg3[%c0_3, %c0_4] : memref<1x128xf32, #tpu.memory_space<vmem>>, vector<1x128xf32>
    %4 = vector.broadcast %3 : vector<1x128xf32> to vector<16x128xf32>
    %5 = arith.addf %2, %4 : vector<16x128xf32>
    %c0_5 = arith.constant 0 : index
    %c0_6 = arith.constant 0 : index
    %6 = vector.load %arg4[%c0_5, %c0_6] : memref<16x128xf32, #tpu.memory_space<vmem>>, vector<16x128xf32>
    tpu.vector_store %arg4[%c0_5, %c0_6], %5 {strides = array<i32>} : memref<16x128xf32, #tpu.memory_space<vmem>>, vector<16x128xf32>,
    return
  }
  func.func @transform_0(%arg0: i32) -> (i32, i32) {
    %c0_i32 = arith.constant 0 : i32
    %c0_i32_0 = arith.constant 0 : i32
    return %arg0, %c0_i32 : i32, i32
  }
  func.func @transform_1(%arg0: i32) -> (i32, i32) {
    %c0_i32 = arith.constant 0 : i32
    %c0_i32_0 = arith.constant 0 : i32
    %c0_i32_1 = arith.constant 0 : i32
    return %c0_i32, %c0_i32_0 : i32, i32
  }
  func.func @transform_2(%arg0: i32) -> (i32, i32) {
    %c0_i32 = arith.constant 0 : i32
    %c0_i32_0 = arith.constant 0 : i32
    %c0_i32_1 = arith.constant 0 : i32
    return %c0_i32, %c0_i32_0 : i32, i32
  }
  func.func @transform_3(%arg0: i32) -> (i32, i32) {
    %c0_i32 = arith.constant 0 : i32
    %c0_i32_0 = arith.constant 0 : i32
    return %arg0, %c0_i32 : i32, i32
  }
}

module attributes {stable_mosaic.version = 11 : i64} {
  func.func @_bilstm_kernel(%arg0: i32, %arg1: memref<8x2x128xf32, #tpu.memory_space<vmem>>, %arg2: memref<8x2x128xf32, #tpu.memory_space<vmem>>, %arg3: memref<32x128xf32, #tpu.memory_space<vmem>>, %arg4: memref<32x128xf32, #tpu.memory_space<vmem>>, %arg5: memref<2x1xi32, #tpu.memory_space<vmem>>, %arg6: memref<8x2x32xf32, #tpu.memory_space<vmem>>, %arg7: memref<8x2x32xf32, #tpu.memory_space<vmem>>, %arg8: memref<2x32xf32, #tpu.memory_space<vmem>>, %arg9: memref<2x32xf32, #tpu.memory_space<vmem>>, %arg10: memref<2x32xf32, #tpu.memory_space<vmem>>, %arg11: memref<2x32xf32, #tpu.memory_space<vmem>>) attributes {dimension_semantics = [#tpu.dimension_semantics<arbitrary>], iteration_bounds = array<i64: 1>, scalar_prefetch = 0 : i64, scratch_operands = 4 : i64, tpu.core_type = #tpu.core_type<tc>, window_params = [{transform_indices = @transform_0, window_bounds = array<i64: 8, 2, 128>}, {transform_indices = @transform_1, window_bounds = array<i64: 8, 2, 128>}, {pipeline_mode = #tpu.pipeline_mode<synchronous>, transform_indices = @transform_2, window_bounds = array<i64: 32, 128>}, {pipeline_mode = #tpu.pipeline_mode<synchronous>, transform_indices = @transform_3, window_bounds = array<i64: 32, 128>}, {pipeline_mode = #tpu.pipeline_mode<synchronous>, transform_indices = @transform_4, window_bounds = array<i64: 2, 1>}, {transform_indices = @transform_5, window_bounds = array<i64: 8, 2, 32>}, {transform_indices = @transform_6, window_bounds = array<i64: 8, 2, 32>}]} {
    %c0_i32 = arith.constant 0 : i32
    %0 = arith.cmpi eq, %arg0, %c0_i32 : i32
    %1 = arith.extui %0 : i1 to i32
    %c0_i32_0 = arith.constant 0 : i32
    %2 = arith.cmpi ne, %1, %c0_i32_0 : i32
    scf.if %2 {
      %cst_338 = arith.constant 0.000000e+00 : f32
      %860 = vector.broadcast %cst_338 : f32 to vector<2x32xf32>
      %c0_339 = arith.constant 0 : index
      %c0_340 = arith.constant 0 : index
      %861 = vector.load %arg8[%c0_339, %c0_340] : memref<2x32xf32, #tpu.memory_space<vmem>>, vector<2x32xf32>
      tpu.vector_store %arg8[%c0_339, %c0_340], %860 {strides = array<i32>} : memref<2x32xf32, #tpu.memory_space<vmem>>, vector<2x32xf32>,
      %cst_341 = arith.constant 0.000000e+00 : f32
      %862 = vector.broadcast %cst_341 : f32 to vector<2x32xf32>
      %c0_342 = arith.constant 0 : index
      %c0_343 = arith.constant 0 : index
      %863 = vector.load %arg9[%c0_342, %c0_343] : memref<2x32xf32, #tpu.memory_space<vmem>>, vector<2x32xf32>
      tpu.vector_store %arg9[%c0_342, %c0_343], %862 {strides = array<i32>} : memref<2x32xf32, #tpu.memory_space<vmem>>, vector<2x32xf32>,
      %cst_344 = arith.constant 0.000000e+00 : f32
      %864 = vector.broadcast %cst_344 : f32 to vector<2x32xf32>
      %c0_345 = arith.constant 0 : index
      %c0_346 = arith.constant 0 : index
      %865 = vector.load %arg10[%c0_345, %c0_346] : memref<2x32xf32, #tpu.memory_space<vmem>>, vector<2x32xf32>
      tpu.vector_store %arg10[%c0_345, %c0_346], %864 {strides = array<i32>} : memref<2x32xf32, #tpu.memory_space<vmem>>, vector<2x32xf32>,
      %cst_347 = arith.constant 0.000000e+00 : f32
      %866 = vector.broadcast %cst_347 : f32 to vector<2x32xf32>
      %c0_348 = arith.constant 0 : index
      %c0_349 = arith.constant 0 : index
      %867 = vector.load %arg11[%c0_348, %c0_349] : memref<2x32xf32, #tpu.memory_space<vmem>>, vector<2x32xf32>
      tpu.vector_store %arg11[%c0_348, %c0_349], %866 {strides = array<i32>} : memref<2x32xf32, #tpu.memory_space<vmem>>, vector<2x32xf32>,
    } else {
    }
    %c0 = arith.constant 0 : index
    %c0_1 = arith.constant 0 : index
    %3 = vector.load %arg5[%c0, %c0_1] : memref<2x1xi32, #tpu.memory_space<vmem>>, vector<2x1xi32>
    %c0_i32_2 = arith.constant 0 : i32
    %c8_i32 = arith.constant 8 : i32
    %4 = arith.muli %arg0, %c8_i32 : i32
    %5 = arith.addi %4, %c0_i32_2 : i32
    %c0_3 = arith.constant 0 : index
    %c0_4 = arith.constant 0 : index
    %6 = vector.load %arg8[%c0_3, %c0_4] : memref<2x32xf32, #tpu.memory_space<vmem>>, vector<2x32xf32>
    %c0_5 = arith.constant 0 : index
    %c0_6 = arith.constant 0 : index
    %7 = vector.load %arg9[%c0_5, %c0_6] : memref<2x32xf32, #tpu.memory_space<vmem>>, vector<2x32xf32>
    %8 = arith.index_cast %c0_i32_2 : i32 to index
    %c0_7 = arith.constant 0 : index
    %c0_8 = arith.constant 0 : index
    %9 = vector.load %arg1[%8, %c0_7, %c0_8] : memref<8x2x128xf32, #tpu.memory_space<vmem>>, vector<1x2x128xf32>
    %10 = vector.shape_cast %9 : vector<1x2x128xf32> to vector<2x128xf32>
    %c0_9 = arith.constant 0 : index
    %c0_10 = arith.constant 0 : index
    %11 = vector.load %arg3[%c0_9, %c0_10] : memref<32x128xf32, #tpu.memory_space<vmem>>, vector<32x128xf32>
    %cst = arith.constant dense<0.000000e+00> : vector<2x128xf32>
    %12 = tpu.matmul %6, %11, %cst {dimension_numbers = #tpu.dot_dimension_numbers<[1], [0], [0], [1], [0, 0, 1, 1], [], []>} : vector<2x32xf32>, vector<32x128xf32>, vector<2x128xf32> -> vector<2x128xf32>
    %13 = arith.addf %10, %12 : vector<2x128xf32>
    %14 = vector.extract_strided_slice %13 {offsets = [0, 0], sizes = [2, 32], strides = [1, 1]} : vector<2x128xf32> to vector<2x32xf32>
    %15 = arith.negf %14 : vector<2x32xf32>
    %16 = math.exp %15 : vector<2x32xf32>
    %cst_11 = arith.constant 1.000000e+00 : f32
    %17 = vector.broadcast %cst_11 : f32 to vector<2x32xf32>
    %18 = arith.addf %17, %16 : vector<2x32xf32>
    %19 = arith.divf %17, %18 : vector<2x32xf32>
    %20 = vector.extract_strided_slice %13 {offsets = [0, 32], sizes = [2, 32], strides = [1, 1]} : vector<2x128xf32> to vector<2x32xf32>
    %21 = arith.negf %20 : vector<2x32xf32>
    %22 = math.exp %21 : vector<2x32xf32>
    %cst_12 = arith.constant 1.000000e+00 : f32
    %23 = vector.broadcast %cst_12 : f32 to vector<2x32xf32>
    %24 = arith.addf %23, %22 : vector<2x32xf32>
    %25 = arith.divf %23, %24 : vector<2x32xf32>
    %26 = vector.extract_strided_slice %13 {offsets = [0, 64], sizes = [2, 32], strides = [1, 1]} : vector<2x128xf32> to vector<2x32xf32>
    %27 = math.tanh %26 : vector<2x32xf32>
    %28 = vector.extract_strided_slice %13 {offsets = [0, 96], sizes = [2, 32], strides = [1, 1]} : vector<2x128xf32> to vector<2x32xf32>
    %29 = arith.negf %28 : vector<2x32xf32>
    %30 = math.exp %29 : vector<2x32xf32>
    %cst_13 = arith.constant 1.000000e+00 : f32
    %31 = vector.broadcast %cst_13 : f32 to vector<2x32xf32>
    %32 = arith.addf %31, %30 : vector<2x32xf32>
    %33 = arith.divf %31, %32 : vector<2x32xf32>
    %34 = arith.mulf %25, %7 : vector<2x32xf32>
    %35 = arith.mulf %19, %27 : vector<2x32xf32>
    %36 = arith.addf %34, %35 : vector<2x32xf32>
    %37 = math.tanh %36 : vector<2x32xf32>
    %38 = arith.mulf %33, %37 : vector<2x32xf32>
    %39 = vector.broadcast %5 : i32 to vector<2x1xi32>
    %40 = arith.cmpi slt, %39, %3 : vector<2x1xi32>
    %41 = vector.shape_cast %40 : vector<2x1xi1> to vector<2x1xi1>
    %42 = vector.broadcast %41 : vector<2x1xi1> to vector<2x32xi1>
    %43 = arith.select %42, %36, %7 : vector<2x32xi1>, vector<2x32xf32>
    %c0_14 = arith.constant 0 : index
    %c0_15 = arith.constant 0 : index
    %44 = vector.load %arg9[%c0_14, %c0_15] : memref<2x32xf32, #tpu.memory_space<vmem>>, vector<2x32xf32>
    tpu.vector_store %arg9[%c0_14, %c0_15], %43 {strides = array<i32>} : memref<2x32xf32, #tpu.memory_space<vmem>>, vector<2x32xf32>,
    %45 = vector.shape_cast %40 : vector<2x1xi1> to vector<2x1xi1>
    %46 = vector.broadcast %45 : vector<2x1xi1> to vector<2x32xi1>
    %47 = arith.select %46, %38, %6 : vector<2x32xi1>, vector<2x32xf32>
    %c0_16 = arith.constant 0 : index
    %c0_17 = arith.constant 0 : index
    %48 = vector.load %arg8[%c0_16, %c0_17] : memref<2x32xf32, #tpu.memory_space<vmem>>, vector<2x32xf32>
    tpu.vector_store %arg8[%c0_16, %c0_17], %47 {strides = array<i32>} : memref<2x32xf32, #tpu.memory_space<vmem>>, vector<2x32xf32>,
    %cst_18 = arith.constant 0.000000e+00 : f32
    %49 = vector.shape_cast %40 : vector<2x1xi1> to vector<2x1xi1>
    %50 = vector.broadcast %49 : vector<2x1xi1> to vector<2x32xi1>
    %51 = vector.broadcast %cst_18 : f32 to vector<2x32xf32>
    %52 = arith.select %50, %38, %51 : vector<2x32xi1>, vector<2x32xf32>
    %53 = arith.index_cast %c0_i32_2 : i32 to index
    %c0_19 = arith.constant 0 : index
    %c0_20 = arith.constant 0 : index
    %54 = vector.load %arg6[%53, %c0_19, %c0_20] : memref<8x2x32xf32, #tpu.memory_space<vmem>>, vector<1x2x32xf32>
    %55 = vector.shape_cast %54 : vector<1x2x32xf32> to vector<2x32xf32>
    %56 = vector.shape_cast %52 : vector<2x32xf32> to vector<1x2x32xf32>
    tpu.vector_store %arg6[%53, %c0_19, %c0_20], %56 {strides = array<i32>} : memref<8x2x32xf32, #tpu.memory_space<vmem>>, vector<1x2x32xf32>,
    %c7_i32 = arith.constant 7 : i32
    %57 = arith.subi %c7_i32, %5 : i32
    %c0_21 = arith.constant 0 : index
    %c0_22 = arith.constant 0 : index
    %58 = vector.load %arg10[%c0_21, %c0_22] : memref<2x32xf32, #tpu.memory_space<vmem>>, vector<2x32xf32>
    %c0_23 = arith.constant 0 : index
    %c0_24 = arith.constant 0 : index
    %59 = vector.load %arg11[%c0_23, %c0_24] : memref<2x32xf32, #tpu.memory_space<vmem>>, vector<2x32xf32>
    %c7_i32_25 = arith.constant 7 : i32
    %60 = arith.subi %c7_i32_25, %c0_i32_2 : i32
    %61 = arith.index_cast %60 : i32 to index
    %c0_26 = arith.constant 0 : index
    %c0_27 = arith.constant 0 : index
    %62 = vector.load %arg2[%61, %c0_26, %c0_27] : memref<8x2x128xf32, #tpu.memory_space<vmem>>, vector<1x2x128xf32>
    %63 = vector.shape_cast %62 : vector<1x2x128xf32> to vector<2x128xf32>
    %c0_28 = arith.constant 0 : index
    %c0_29 = arith.constant 0 : index
    %64 = vector.load %arg4[%c0_28, %c0_29] : memref<32x128xf32, #tpu.memory_space<vmem>>, vector<32x128xf32>
    %cst_30 = arith.constant dense<0.000000e+00> : vector<2x128xf32>
    %65 = tpu.matmul %58, %64, %cst_30 {dimension_numbers = #tpu.dot_dimension_numbers<[1], [0], [0], [1], [0, 0, 1, 1], [], []>} : vector<2x32xf32>, vector<32x128xf32>, vector<2x128xf32> -> vector<2x128xf32>
    %66 = arith.addf %63, %65 : vector<2x128xf32>
    %67 = vector.extract_strided_slice %66 {offsets = [0, 0], sizes = [2, 32], strides = [1, 1]} : vector<2x128xf32> to vector<2x32xf32>
    %68 = arith.negf %67 : vector<2x32xf32>
    %69 = math.exp %68 : vector<2x32xf32>
    %cst_31 = arith.constant 1.000000e+00 : f32
    %70 = vector.broadcast %cst_31 : f32 to vector<2x32xf32>
    %71 = arith.addf %70, %69 : vector<2x32xf32>
    %72 = arith.divf %70, %71 : vector<2x32xf32>
    %73 = vector.extract_strided_slice %66 {offsets = [0, 32], sizes = [2, 32], strides = [1, 1]} : vector<2x128xf32> to vector<2x32xf32>
    %74 = arith.negf %73 : vector<2x32xf32>
    %75 = math.exp %74 : vector<2x32xf32>
    %cst_32 = arith.constant 1.000000e+00 : f32
    %76 = vector.broadcast %cst_32 : f32 to vector<2x32xf32>
    %77 = arith.addf %76, %75 : vector<2x32xf32>
    %78 = arith.divf %76, %77 : vector<2x32xf32>
    %79 = vector.extract_strided_slice %66 {offsets = [0, 64], sizes = [2, 32], strides = [1, 1]} : vector<2x128xf32> to vector<2x32xf32>
    %80 = math.tanh %79 : vector<2x32xf32>
    %81 = vector.extract_strided_slice %66 {offsets = [0, 96], sizes = [2, 32], strides = [1, 1]} : vector<2x128xf32> to vector<2x32xf32>
    %82 = arith.negf %81 : vector<2x32xf32>
    %83 = math.exp %82 : vector<2x32xf32>
    %cst_33 = arith.constant 1.000000e+00 : f32
    %84 = vector.broadcast %cst_33 : f32 to vector<2x32xf32>
    %85 = arith.addf %84, %83 : vector<2x32xf32>
    %86 = arith.divf %84, %85 : vector<2x32xf32>
    %87 = arith.mulf %78, %59 : vector<2x32xf32>
    %88 = arith.mulf %72, %80 : vector<2x32xf32>
    %89 = arith.addf %87, %88 : vector<2x32xf32>
    %90 = math.tanh %89 : vector<2x32xf32>
    %91 = arith.mulf %86, %90 : vector<2x32xf32>
    %92 = vector.broadcast %57 : i32 to vector<2x1xi32>
    %93 = arith.cmpi slt, %92, %3 : vector<2x1xi32>
    %94 = vector.shape_cast %93 : vector<2x1xi1> to vector<2x1xi1>
    %95 = vector.broadcast %94 : vector<2x1xi1> to vector<2x32xi1>
    %96 = arith.select %95, %89, %59 : vector<2x32xi1>, vector<2x32xf32>
    %c0_34 = arith.constant 0 : index
    %c0_35 = arith.constant 0 : index
    %97 = vector.load %arg11[%c0_34, %c0_35] : memref<2x32xf32, #tpu.memory_space<vmem>>, vector<2x32xf32>
    tpu.vector_store %arg11[%c0_34, %c0_35], %96 {strides = array<i32>} : memref<2x32xf32, #tpu.memory_space<vmem>>, vector<2x32xf32>,
    %98 = vector.shape_cast %93 : vector<2x1xi1> to vector<2x1xi1>
    %99 = vector.broadcast %98 : vector<2x1xi1> to vector<2x32xi1>
    %100 = arith.select %99, %91, %58 : vector<2x32xi1>, vector<2x32xf32>
    %c0_36 = arith.constant 0 : index
    %c0_37 = arith.constant 0 : index
    %101 = vector.load %arg10[%c0_36, %c0_37] : memref<2x32xf32, #tpu.memory_space<vmem>>, vector<2x32xf32>
    tpu.vector_store %arg10[%c0_36, %c0_37], %100 {strides = array<i32>} : memref<2x32xf32, #tpu.memory_space<vmem>>, vector<2x32xf32>,
    %cst_38 = arith.constant 0.000000e+00 : f32
    %102 = vector.shape_cast %93 : vector<2x1xi1> to vector<2x1xi1>
    %103 = vector.broadcast %102 : vector<2x1xi1> to vector<2x32xi1>
    %104 = vector.broadcast %cst_38 : f32 to vector<2x32xf32>
    %105 = arith.select %103, %91, %104 : vector<2x32xi1>, vector<2x32xf32>
    %c7_i32_39 = arith.constant 7 : i32
    %106 = arith.subi %c7_i32_39, %c0_i32_2 : i32
    %107 = arith.index_cast %106 : i32 to index
    %c0_40 = arith.constant 0 : index
    %c0_41 = arith.constant 0 : index
    %108 = vector.load %arg7[%107, %c0_40, %c0_41] : memref<8x2x32xf32, #tpu.memory_space<vmem>>, vector<1x2x32xf32>
    %109 = vector.shape_cast %108 : vector<1x2x32xf32> to vector<2x32xf32>
    %110 = vector.shape_cast %105 : vector<2x32xf32> to vector<1x2x32xf32>
    tpu.vector_store %arg7[%107, %c0_40, %c0_41], %110 {strides = array<i32>} : memref<8x2x32xf32, #tpu.memory_space<vmem>>, vector<1x2x32xf32>,
    %c1_i32 = arith.constant 1 : i32
    %c8_i32_42 = arith.constant 8 : i32
    %111 = arith.muli %arg0, %c8_i32_42 : i32
    %112 = arith.addi %111, %c1_i32 : i32
    %c0_43 = arith.constant 0 : index
    %c0_44 = arith.constant 0 : index
    %113 = vector.load %arg8[%c0_43, %c0_44] : memref<2x32xf32, #tpu.memory_space<vmem>>, vector<2x32xf32>
    %c0_45 = arith.constant 0 : index
    %c0_46 = arith.constant 0 : index
    %114 = vector.load %arg9[%c0_45, %c0_46] : memref<2x32xf32, #tpu.memory_space<vmem>>, vector<2x32xf32>
    %115 = arith.index_cast %c1_i32 : i32 to index
    %c0_47 = arith.constant 0 : index
    %c0_48 = arith.constant 0 : index
    %116 = vector.load %arg1[%115, %c0_47, %c0_48] : memref<8x2x128xf32, #tpu.memory_space<vmem>>, vector<1x2x128xf32>
    %117 = vector.shape_cast %116 : vector<1x2x128xf32> to vector<2x128xf32>
    %c0_49 = arith.constant 0 : index
    %c0_50 = arith.constant 0 : index
    %118 = vector.load %arg3[%c0_49, %c0_50] : memref<32x128xf32, #tpu.memory_space<vmem>>, vector<32x128xf32>
    %cst_51 = arith.constant dense<0.000000e+00> : vector<2x128xf32>
    %119 = tpu.matmul %113, %118, %cst_51 {dimension_numbers = #tpu.dot_dimension_numbers<[1], [0], [0], [1], [0, 0, 1, 1], [], []>} : vector<2x32xf32>, vector<32x128xf32>, vector<2x128xf32> -> vector<2x128xf32>
    %120 = arith.addf %117, %119 : vector<2x128xf32>
    %121 = vector.extract_strided_slice %120 {offsets = [0, 0], sizes = [2, 32], strides = [1, 1]} : vector<2x128xf32> to vector<2x32xf32>
    %122 = arith.negf %121 : vector<2x32xf32>
    %123 = math.exp %122 : vector<2x32xf32>
    %cst_52 = arith.constant 1.000000e+00 : f32
    %124 = vector.broadcast %cst_52 : f32 to vector<2x32xf32>
    %125 = arith.addf %124, %123 : vector<2x32xf32>
    %126 = arith.divf %124, %125 : vector<2x32xf32>
    %127 = vector.extract_strided_slice %120 {offsets = [0, 32], sizes = [2, 32], strides = [1, 1]} : vector<2x128xf32> to vector<2x32xf32>
    %128 = arith.negf %127 : vector<2x32xf32>
    %129 = math.exp %128 : vector<2x32xf32>
    %cst_53 = arith.constant 1.000000e+00 : f32
    %130 = vector.broadcast %cst_53 : f32 to vector<2x32xf32>
    %131 = arith.addf %130, %129 : vector<2x32xf32>
    %132 = arith.divf %130, %131 : vector<2x32xf32>
    %133 = vector.extract_strided_slice %120 {offsets = [0, 64], sizes = [2, 32], strides = [1, 1]} : vector<2x128xf32> to vector<2x32xf32>
    %134 = math.tanh %133 : vector<2x32xf32>
    %135 = vector.extract_strided_slice %120 {offsets = [0, 96], sizes = [2, 32], strides = [1, 1]} : vector<2x128xf32> to vector<2x32xf32>
    %136 = arith.negf %135 : vector<2x32xf32>
    %137 = math.exp %136 : vector<2x32xf32>
    %cst_54 = arith.constant 1.000000e+00 : f32
    %138 = vector.broadcast %cst_54 : f32 to vector<2x32xf32>
    %139 = arith.addf %138, %137 : vector<2x32xf32>
    %140 = arith.divf %138, %139 : vector<2x32xf32>
    %141 = arith.mulf %132, %114 : vector<2x32xf32>
    %142 = arith.mulf %126, %134 : vector<2x32xf32>
    %143 = arith.addf %141, %142 : vector<2x32xf32>
    %144 = math.tanh %143 : vector<2x32xf32>
    %145 = arith.mulf %140, %144 : vector<2x32xf32>
    %146 = vector.broadcast %112 : i32 to vector<2x1xi32>
    %147 = arith.cmpi slt, %146, %3 : vector<2x1xi32>
    %148 = vector.shape_cast %147 : vector<2x1xi1> to vector<2x1xi1>
    %149 = vector.broadcast %148 : vector<2x1xi1> to vector<2x32xi1>
    %150 = arith.select %149, %143, %114 : vector<2x32xi1>, vector<2x32xf32>
    %c0_55 = arith.constant 0 : index
    %c0_56 = arith.constant 0 : index
    %151 = vector.load %arg9[%c0_55, %c0_56] : memref<2x32xf32, #tpu.memory_space<vmem>>, vector<2x32xf32>
    tpu.vector_store %arg9[%c0_55, %c0_56], %150 {strides = array<i32>} : memref<2x32xf32, #tpu.memory_space<vmem>>, vector<2x32xf32>,
    %152 = vector.shape_cast %147 : vector<2x1xi1> to vector<2x1xi1>
    %153 = vector.broadcast %152 : vector<2x1xi1> to vector<2x32xi1>
    %154 = arith.select %153, %145, %113 : vector<2x32xi1>, vector<2x32xf32>
    %c0_57 = arith.constant 0 : index
    %c0_58 = arith.constant 0 : index
    %155 = vector.load %arg8[%c0_57, %c0_58] : memref<2x32xf32, #tpu.memory_space<vmem>>, vector<2x32xf32>
    tpu.vector_store %arg8[%c0_57, %c0_58], %154 {strides = array<i32>} : memref<2x32xf32, #tpu.memory_space<vmem>>, vector<2x32xf32>,
    %cst_59 = arith.constant 0.000000e+00 : f32
    %156 = vector.shape_cast %147 : vector<2x1xi1> to vector<2x1xi1>
    %157 = vector.broadcast %156 : vector<2x1xi1> to vector<2x32xi1>
    %158 = vector.broadcast %cst_59 : f32 to vector<2x32xf32>
    %159 = arith.select %157, %145, %158 : vector<2x32xi1>, vector<2x32xf32>
    %160 = arith.index_cast %c1_i32 : i32 to index
    %c0_60 = arith.constant 0 : index
    %c0_61 = arith.constant 0 : index
    %161 = vector.load %arg6[%160, %c0_60, %c0_61] : memref<8x2x32xf32, #tpu.memory_space<vmem>>, vector<1x2x32xf32>
    %162 = vector.shape_cast %161 : vector<1x2x32xf32> to vector<2x32xf32>
    %163 = vector.shape_cast %159 : vector<2x32xf32> to vector<1x2x32xf32>
    tpu.vector_store %arg6[%160, %c0_60, %c0_61], %163 {strides = array<i32>} : memref<8x2x32xf32, #tpu.memory_space<vmem>>, vector<1x2x32xf32>,
    %c7_i32_62 = arith.constant 7 : i32
    %164 = arith.subi %c7_i32_62, %112 : i32
    %c0_63 = arith.constant 0 : index
    %c0_64 = arith.constant 0 : index
    %165 = vector.load %arg10[%c0_63, %c0_64] : memref<2x32xf32, #tpu.memory_space<vmem>>, vector<2x32xf32>
    %c0_65 = arith.constant 0 : index
    %c0_66 = arith.constant 0 : index
    %166 = vector.load %arg11[%c0_65, %c0_66] : memref<2x32xf32, #tpu.memory_space<vmem>>, vector<2x32xf32>
    %c7_i32_67 = arith.constant 7 : i32
    %167 = arith.subi %c7_i32_67, %c1_i32 : i32
    %168 = arith.index_cast %167 : i32 to index
    %c0_68 = arith.constant 0 : index
    %c0_69 = arith.constant 0 : index
    %169 = vector.load %arg2[%168, %c0_68, %c0_69] : memref<8x2x128xf32, #tpu.memory_space<vmem>>, vector<1x2x128xf32>
    %170 = vector.shape_cast %169 : vector<1x2x128xf32> to vector<2x128xf32>
    %c0_70 = arith.constant 0 : index
    %c0_71 = arith.constant 0 : index
    %171 = vector.load %arg4[%c0_70, %c0_71] : memref<32x128xf32, #tpu.memory_space<vmem>>, vector<32x128xf32>
    %cst_72 = arith.constant dense<0.000000e+00> : vector<2x128xf32>
    %172 = tpu.matmul %165, %171, %cst_72 {dimension_numbers = #tpu.dot_dimension_numbers<[1], [0], [0], [1], [0, 0, 1, 1], [], []>} : vector<2x32xf32>, vector<32x128xf32>, vector<2x128xf32> -> vector<2x128xf32>
    %173 = arith.addf %170, %172 : vector<2x128xf32>
    %174 = vector.extract_strided_slice %173 {offsets = [0, 0], sizes = [2, 32], strides = [1, 1]} : vector<2x128xf32> to vector<2x32xf32>
    %175 = arith.negf %174 : vector<2x32xf32>
    %176 = math.exp %175 : vector<2x32xf32>
    %cst_73 = arith.constant 1.000000e+00 : f32
    %177 = vector.broadcast %cst_73 : f32 to vector<2x32xf32>
    %178 = arith.addf %177, %176 : vector<2x32xf32>
    %179 = arith.divf %177, %178 : vector<2x32xf32>
    %180 = vector.extract_strided_slice %173 {offsets = [0, 32], sizes = [2, 32], strides = [1, 1]} : vector<2x128xf32> to vector<2x32xf32>
    %181 = arith.negf %180 : vector<2x32xf32>
    %182 = math.exp %181 : vector<2x32xf32>
    %cst_74 = arith.constant 1.000000e+00 : f32
    %183 = vector.broadcast %cst_74 : f32 to vector<2x32xf32>
    %184 = arith.addf %183, %182 : vector<2x32xf32>
    %185 = arith.divf %183, %184 : vector<2x32xf32>
    %186 = vector.extract_strided_slice %173 {offsets = [0, 64], sizes = [2, 32], strides = [1, 1]} : vector<2x128xf32> to vector<2x32xf32>
    %187 = math.tanh %186 : vector<2x32xf32>
    %188 = vector.extract_strided_slice %173 {offsets = [0, 96], sizes = [2, 32], strides = [1, 1]} : vector<2x128xf32> to vector<2x32xf32>
    %189 = arith.negf %188 : vector<2x32xf32>
    %190 = math.exp %189 : vector<2x32xf32>
    %cst_75 = arith.constant 1.000000e+00 : f32
    %191 = vector.broadcast %cst_75 : f32 to vector<2x32xf32>
    %192 = arith.addf %191, %190 : vector<2x32xf32>
    %193 = arith.divf %191, %192 : vector<2x32xf32>
    %194 = arith.mulf %185, %166 : vector<2x32xf32>
    %195 = arith.mulf %179, %187 : vector<2x32xf32>
    %196 = arith.addf %194, %195 : vector<2x32xf32>
    %197 = math.tanh %196 : vector<2x32xf32>
    %198 = arith.mulf %193, %197 : vector<2x32xf32>
    %199 = vector.broadcast %164 : i32 to vector<2x1xi32>
    %200 = arith.cmpi slt, %199, %3 : vector<2x1xi32>
    %201 = vector.shape_cast %200 : vector<2x1xi1> to vector<2x1xi1>
    %202 = vector.broadcast %201 : vector<2x1xi1> to vector<2x32xi1>
    %203 = arith.select %202, %196, %166 : vector<2x32xi1>, vector<2x32xf32>
    %c0_76 = arith.constant 0 : index
    %c0_77 = arith.constant 0 : index
    %204 = vector.load %arg11[%c0_76, %c0_77] : memref<2x32xf32, #tpu.memory_space<vmem>>, vector<2x32xf32>
    tpu.vector_store %arg11[%c0_76, %c0_77], %203 {strides = array<i32>} : memref<2x32xf32, #tpu.memory_space<vmem>>, vector<2x32xf32>,
    %205 = vector.shape_cast %200 : vector<2x1xi1> to vector<2x1xi1>
    %206 = vector.broadcast %205 : vector<2x1xi1> to vector<2x32xi1>
    %207 = arith.select %206, %198, %165 : vector<2x32xi1>, vector<2x32xf32>
    %c0_78 = arith.constant 0 : index
    %c0_79 = arith.constant 0 : index
    %208 = vector.load %arg10[%c0_78, %c0_79] : memref<2x32xf32, #tpu.memory_space<vmem>>, vector<2x32xf32>
    tpu.vector_store %arg10[%c0_78, %c0_79], %207 {strides = array<i32>} : memref<2x32xf32, #tpu.memory_space<vmem>>, vector<2x32xf32>,
    %cst_80 = arith.constant 0.000000e+00 : f32
    %209 = vector.shape_cast %200 : vector<2x1xi1> to vector<2x1xi1>
    %210 = vector.broadcast %209 : vector<2x1xi1> to vector<2x32xi1>
    %211 = vector.broadcast %cst_80 : f32 to vector<2x32xf32>
    %212 = arith.select %210, %198, %211 : vector<2x32xi1>, vector<2x32xf32>
    %c7_i32_81 = arith.constant 7 : i32
    %213 = arith.subi %c7_i32_81, %c1_i32 : i32
    %214 = arith.index_cast %213 : i32 to index
    %c0_82 = arith.constant 0 : index
    %c0_83 = arith.constant 0 : index
    %215 = vector.load %arg7[%214, %c0_82, %c0_83] : memref<8x2x32xf32, #tpu.memory_space<vmem>>, vector<1x2x32xf32>
    %216 = vector.shape_cast %215 : vector<1x2x32xf32> to vector<2x32xf32>
    %217 = vector.shape_cast %212 : vector<2x32xf32> to vector<1x2x32xf32>
    tpu.vector_store %arg7[%214, %c0_82, %c0_83], %217 {strides = array<i32>} : memref<8x2x32xf32, #tpu.memory_space<vmem>>, vector<1x2x32xf32>,
    %c2_i32 = arith.constant 2 : i32
    %c8_i32_84 = arith.constant 8 : i32
    %218 = arith.muli %arg0, %c8_i32_84 : i32
    %219 = arith.addi %218, %c2_i32 : i32
    %c0_85 = arith.constant 0 : index
    %c0_86 = arith.constant 0 : index
    %220 = vector.load %arg8[%c0_85, %c0_86] : memref<2x32xf32, #tpu.memory_space<vmem>>, vector<2x32xf32>
    %c0_87 = arith.constant 0 : index
    %c0_88 = arith.constant 0 : index
    %221 = vector.load %arg9[%c0_87, %c0_88] : memref<2x32xf32, #tpu.memory_space<vmem>>, vector<2x32xf32>
    %222 = arith.index_cast %c2_i32 : i32 to index
    %c0_89 = arith.constant 0 : index
    %c0_90 = arith.constant 0 : index
    %223 = vector.load %arg1[%222, %c0_89, %c0_90] : memref<8x2x128xf32, #tpu.memory_space<vmem>>, vector<1x2x128xf32>
    %224 = vector.shape_cast %223 : vector<1x2x128xf32> to vector<2x128xf32>
    %c0_91 = arith.constant 0 : index
    %c0_92 = arith.constant 0 : index
    %225 = vector.load %arg3[%c0_91, %c0_92] : memref<32x128xf32, #tpu.memory_space<vmem>>, vector<32x128xf32>
    %cst_93 = arith.constant dense<0.000000e+00> : vector<2x128xf32>
    %226 = tpu.matmul %220, %225, %cst_93 {dimension_numbers = #tpu.dot_dimension_numbers<[1], [0], [0], [1], [0, 0, 1, 1], [], []>} : vector<2x32xf32>, vector<32x128xf32>, vector<2x128xf32> -> vector<2x128xf32>
    %227 = arith.addf %224, %226 : vector<2x128xf32>
    %228 = vector.extract_strided_slice %227 {offsets = [0, 0], sizes = [2, 32], strides = [1, 1]} : vector<2x128xf32> to vector<2x32xf32>
    %229 = arith.negf %228 : vector<2x32xf32>
    %230 = math.exp %229 : vector<2x32xf32>
    %cst_94 = arith.constant 1.000000e+00 : f32
    %231 = vector.broadcast %cst_94 : f32 to vector<2x32xf32>
    %232 = arith.addf %231, %230 : vector<2x32xf32>
    %233 = arith.divf %231, %232 : vector<2x32xf32>
    %234 = vector.extract_strided_slice %227 {offsets = [0, 32], sizes = [2, 32], strides = [1, 1]} : vector<2x128xf32> to vector<2x32xf32>
    %235 = arith.negf %234 : vector<2x32xf32>
    %236 = math.exp %235 : vector<2x32xf32>
    %cst_95 = arith.constant 1.000000e+00 : f32
    %237 = vector.broadcast %cst_95 : f32 to vector<2x32xf32>
    %238 = arith.addf %237, %236 : vector<2x32xf32>
    %239 = arith.divf %237, %238 : vector<2x32xf32>
    %240 = vector.extract_strided_slice %227 {offsets = [0, 64], sizes = [2, 32], strides = [1, 1]} : vector<2x128xf32> to vector<2x32xf32>
    %241 = math.tanh %240 : vector<2x32xf32>
    %242 = vector.extract_strided_slice %227 {offsets = [0, 96], sizes = [2, 32], strides = [1, 1]} : vector<2x128xf32> to vector<2x32xf32>
    %243 = arith.negf %242 : vector<2x32xf32>
    %244 = math.exp %243 : vector<2x32xf32>
    %cst_96 = arith.constant 1.000000e+00 : f32
    %245 = vector.broadcast %cst_96 : f32 to vector<2x32xf32>
    %246 = arith.addf %245, %244 : vector<2x32xf32>
    %247 = arith.divf %245, %246 : vector<2x32xf32>
    %248 = arith.mulf %239, %221 : vector<2x32xf32>
    %249 = arith.mulf %233, %241 : vector<2x32xf32>
    %250 = arith.addf %248, %249 : vector<2x32xf32>
    %251 = math.tanh %250 : vector<2x32xf32>
    %252 = arith.mulf %247, %251 : vector<2x32xf32>
    %253 = vector.broadcast %219 : i32 to vector<2x1xi32>
    %254 = arith.cmpi slt, %253, %3 : vector<2x1xi32>
    %255 = vector.shape_cast %254 : vector<2x1xi1> to vector<2x1xi1>
    %256 = vector.broadcast %255 : vector<2x1xi1> to vector<2x32xi1>
    %257 = arith.select %256, %250, %221 : vector<2x32xi1>, vector<2x32xf32>
    %c0_97 = arith.constant 0 : index
    %c0_98 = arith.constant 0 : index
    %258 = vector.load %arg9[%c0_97, %c0_98] : memref<2x32xf32, #tpu.memory_space<vmem>>, vector<2x32xf32>
    tpu.vector_store %arg9[%c0_97, %c0_98], %257 {strides = array<i32>} : memref<2x32xf32, #tpu.memory_space<vmem>>, vector<2x32xf32>,
    %259 = vector.shape_cast %254 : vector<2x1xi1> to vector<2x1xi1>
    %260 = vector.broadcast %259 : vector<2x1xi1> to vector<2x32xi1>
    %261 = arith.select %260, %252, %220 : vector<2x32xi1>, vector<2x32xf32>
    %c0_99 = arith.constant 0 : index
    %c0_100 = arith.constant 0 : index
    %262 = vector.load %arg8[%c0_99, %c0_100] : memref<2x32xf32, #tpu.memory_space<vmem>>, vector<2x32xf32>
    tpu.vector_store %arg8[%c0_99, %c0_100], %261 {strides = array<i32>} : memref<2x32xf32, #tpu.memory_space<vmem>>, vector<2x32xf32>,
    %cst_101 = arith.constant 0.000000e+00 : f32
    %263 = vector.shape_cast %254 : vector<2x1xi1> to vector<2x1xi1>
    %264 = vector.broadcast %263 : vector<2x1xi1> to vector<2x32xi1>
    %265 = vector.broadcast %cst_101 : f32 to vector<2x32xf32>
    %266 = arith.select %264, %252, %265 : vector<2x32xi1>, vector<2x32xf32>
    %267 = arith.index_cast %c2_i32 : i32 to index
    %c0_102 = arith.constant 0 : index
    %c0_103 = arith.constant 0 : index
    %268 = vector.load %arg6[%267, %c0_102, %c0_103] : memref<8x2x32xf32, #tpu.memory_space<vmem>>, vector<1x2x32xf32>
    %269 = vector.shape_cast %268 : vector<1x2x32xf32> to vector<2x32xf32>
    %270 = vector.shape_cast %266 : vector<2x32xf32> to vector<1x2x32xf32>
    tpu.vector_store %arg6[%267, %c0_102, %c0_103], %270 {strides = array<i32>} : memref<8x2x32xf32, #tpu.memory_space<vmem>>, vector<1x2x32xf32>,
    %c7_i32_104 = arith.constant 7 : i32
    %271 = arith.subi %c7_i32_104, %219 : i32
    %c0_105 = arith.constant 0 : index
    %c0_106 = arith.constant 0 : index
    %272 = vector.load %arg10[%c0_105, %c0_106] : memref<2x32xf32, #tpu.memory_space<vmem>>, vector<2x32xf32>
    %c0_107 = arith.constant 0 : index
    %c0_108 = arith.constant 0 : index
    %273 = vector.load %arg11[%c0_107, %c0_108] : memref<2x32xf32, #tpu.memory_space<vmem>>, vector<2x32xf32>
    %c7_i32_109 = arith.constant 7 : i32
    %274 = arith.subi %c7_i32_109, %c2_i32 : i32
    %275 = arith.index_cast %274 : i32 to index
    %c0_110 = arith.constant 0 : index
    %c0_111 = arith.constant 0 : index
    %276 = vector.load %arg2[%275, %c0_110, %c0_111] : memref<8x2x128xf32, #tpu.memory_space<vmem>>, vector<1x2x128xf32>
    %277 = vector.shape_cast %276 : vector<1x2x128xf32> to vector<2x128xf32>
    %c0_112 = arith.constant 0 : index
    %c0_113 = arith.constant 0 : index
    %278 = vector.load %arg4[%c0_112, %c0_113] : memref<32x128xf32, #tpu.memory_space<vmem>>, vector<32x128xf32>
    %cst_114 = arith.constant dense<0.000000e+00> : vector<2x128xf32>
    %279 = tpu.matmul %272, %278, %cst_114 {dimension_numbers = #tpu.dot_dimension_numbers<[1], [0], [0], [1], [0, 0, 1, 1], [], []>} : vector<2x32xf32>, vector<32x128xf32>, vector<2x128xf32> -> vector<2x128xf32>
    %280 = arith.addf %277, %279 : vector<2x128xf32>
    %281 = vector.extract_strided_slice %280 {offsets = [0, 0], sizes = [2, 32], strides = [1, 1]} : vector<2x128xf32> to vector<2x32xf32>
    %282 = arith.negf %281 : vector<2x32xf32>
    %283 = math.exp %282 : vector<2x32xf32>
    %cst_115 = arith.constant 1.000000e+00 : f32
    %284 = vector.broadcast %cst_115 : f32 to vector<2x32xf32>
    %285 = arith.addf %284, %283 : vector<2x32xf32>
    %286 = arith.divf %284, %285 : vector<2x32xf32>
    %287 = vector.extract_strided_slice %280 {offsets = [0, 32], sizes = [2, 32], strides = [1, 1]} : vector<2x128xf32> to vector<2x32xf32>
    %288 = arith.negf %287 : vector<2x32xf32>
    %289 = math.exp %288 : vector<2x32xf32>
    %cst_116 = arith.constant 1.000000e+00 : f32
    %290 = vector.broadcast %cst_116 : f32 to vector<2x32xf32>
    %291 = arith.addf %290, %289 : vector<2x32xf32>
    %292 = arith.divf %290, %291 : vector<2x32xf32>
    %293 = vector.extract_strided_slice %280 {offsets = [0, 64], sizes = [2, 32], strides = [1, 1]} : vector<2x128xf32> to vector<2x32xf32>
    %294 = math.tanh %293 : vector<2x32xf32>
    %295 = vector.extract_strided_slice %280 {offsets = [0, 96], sizes = [2, 32], strides = [1, 1]} : vector<2x128xf32> to vector<2x32xf32>
    %296 = arith.negf %295 : vector<2x32xf32>
    %297 = math.exp %296 : vector<2x32xf32>
    %cst_117 = arith.constant 1.000000e+00 : f32
    %298 = vector.broadcast %cst_117 : f32 to vector<2x32xf32>
    %299 = arith.addf %298, %297 : vector<2x32xf32>
    %300 = arith.divf %298, %299 : vector<2x32xf32>
    %301 = arith.mulf %292, %273 : vector<2x32xf32>
    %302 = arith.mulf %286, %294 : vector<2x32xf32>
    %303 = arith.addf %301, %302 : vector<2x32xf32>
    %304 = math.tanh %303 : vector<2x32xf32>
    %305 = arith.mulf %300, %304 : vector<2x32xf32>
    %306 = vector.broadcast %271 : i32 to vector<2x1xi32>
    %307 = arith.cmpi slt, %306, %3 : vector<2x1xi32>
    %308 = vector.shape_cast %307 : vector<2x1xi1> to vector<2x1xi1>
    %309 = vector.broadcast %308 : vector<2x1xi1> to vector<2x32xi1>
    %310 = arith.select %309, %303, %273 : vector<2x32xi1>, vector<2x32xf32>
    %c0_118 = arith.constant 0 : index
    %c0_119 = arith.constant 0 : index
    %311 = vector.load %arg11[%c0_118, %c0_119] : memref<2x32xf32, #tpu.memory_space<vmem>>, vector<2x32xf32>
    tpu.vector_store %arg11[%c0_118, %c0_119], %310 {strides = array<i32>} : memref<2x32xf32, #tpu.memory_space<vmem>>, vector<2x32xf32>,
    %312 = vector.shape_cast %307 : vector<2x1xi1> to vector<2x1xi1>
    %313 = vector.broadcast %312 : vector<2x1xi1> to vector<2x32xi1>
    %314 = arith.select %313, %305, %272 : vector<2x32xi1>, vector<2x32xf32>
    %c0_120 = arith.constant 0 : index
    %c0_121 = arith.constant 0 : index
    %315 = vector.load %arg10[%c0_120, %c0_121] : memref<2x32xf32, #tpu.memory_space<vmem>>, vector<2x32xf32>
    tpu.vector_store %arg10[%c0_120, %c0_121], %314 {strides = array<i32>} : memref<2x32xf32, #tpu.memory_space<vmem>>, vector<2x32xf32>,
    %cst_122 = arith.constant 0.000000e+00 : f32
    %316 = vector.shape_cast %307 : vector<2x1xi1> to vector<2x1xi1>
    %317 = vector.broadcast %316 : vector<2x1xi1> to vector<2x32xi1>
    %318 = vector.broadcast %cst_122 : f32 to vector<2x32xf32>
    %319 = arith.select %317, %305, %318 : vector<2x32xi1>, vector<2x32xf32>
    %c7_i32_123 = arith.constant 7 : i32
    %320 = arith.subi %c7_i32_123, %c2_i32 : i32
    %321 = arith.index_cast %320 : i32 to index
    %c0_124 = arith.constant 0 : index
    %c0_125 = arith.constant 0 : index
    %322 = vector.load %arg7[%321, %c0_124, %c0_125] : memref<8x2x32xf32, #tpu.memory_space<vmem>>, vector<1x2x32xf32>
    %323 = vector.shape_cast %322 : vector<1x2x32xf32> to vector<2x32xf32>
    %324 = vector.shape_cast %319 : vector<2x32xf32> to vector<1x2x32xf32>
    tpu.vector_store %arg7[%321, %c0_124, %c0_125], %324 {strides = array<i32>} : memref<8x2x32xf32, #tpu.memory_space<vmem>>, vector<1x2x32xf32>,
    %c3_i32 = arith.constant 3 : i32
    %c8_i32_126 = arith.constant 8 : i32
    %325 = arith.muli %arg0, %c8_i32_126 : i32
    %326 = arith.addi %325, %c3_i32 : i32
    %c0_127 = arith.constant 0 : index
    %c0_128 = arith.constant 0 : index
    %327 = vector.load %arg8[%c0_127, %c0_128] : memref<2x32xf32, #tpu.memory_space<vmem>>, vector<2x32xf32>
    %c0_129 = arith.constant 0 : index
    %c0_130 = arith.constant 0 : index
    %328 = vector.load %arg9[%c0_129, %c0_130] : memref<2x32xf32, #tpu.memory_space<vmem>>, vector<2x32xf32>
    %329 = arith.index_cast %c3_i32 : i32 to index
    %c0_131 = arith.constant 0 : index
    %c0_132 = arith.constant 0 : index
    %330 = vector.load %arg1[%329, %c0_131, %c0_132] : memref<8x2x128xf32, #tpu.memory_space<vmem>>, vector<1x2x128xf32>
    %331 = vector.shape_cast %330 : vector<1x2x128xf32> to vector<2x128xf32>
    %c0_133 = arith.constant 0 : index
    %c0_134 = arith.constant 0 : index
    %332 = vector.load %arg3[%c0_133, %c0_134] : memref<32x128xf32, #tpu.memory_space<vmem>>, vector<32x128xf32>
    %cst_135 = arith.constant dense<0.000000e+00> : vector<2x128xf32>
    %333 = tpu.matmul %327, %332, %cst_135 {dimension_numbers = #tpu.dot_dimension_numbers<[1], [0], [0], [1], [0, 0, 1, 1], [], []>} : vector<2x32xf32>, vector<32x128xf32>, vector<2x128xf32> -> vector<2x128xf32>
    %334 = arith.addf %331, %333 : vector<2x128xf32>
    %335 = vector.extract_strided_slice %334 {offsets = [0, 0], sizes = [2, 32], strides = [1, 1]} : vector<2x128xf32> to vector<2x32xf32>
    %336 = arith.negf %335 : vector<2x32xf32>
    %337 = math.exp %336 : vector<2x32xf32>
    %cst_136 = arith.constant 1.000000e+00 : f32
    %338 = vector.broadcast %cst_136 : f32 to vector<2x32xf32>
    %339 = arith.addf %338, %337 : vector<2x32xf32>
    %340 = arith.divf %338, %339 : vector<2x32xf32>
    %341 = vector.extract_strided_slice %334 {offsets = [0, 32], sizes = [2, 32], strides = [1, 1]} : vector<2x128xf32> to vector<2x32xf32>
    %342 = arith.negf %341 : vector<2x32xf32>
    %343 = math.exp %342 : vector<2x32xf32>
    %cst_137 = arith.constant 1.000000e+00 : f32
    %344 = vector.broadcast %cst_137 : f32 to vector<2x32xf32>
    %345 = arith.addf %344, %343 : vector<2x32xf32>
    %346 = arith.divf %344, %345 : vector<2x32xf32>
    %347 = vector.extract_strided_slice %334 {offsets = [0, 64], sizes = [2, 32], strides = [1, 1]} : vector<2x128xf32> to vector<2x32xf32>
    %348 = math.tanh %347 : vector<2x32xf32>
    %349 = vector.extract_strided_slice %334 {offsets = [0, 96], sizes = [2, 32], strides = [1, 1]} : vector<2x128xf32> to vector<2x32xf32>
    %350 = arith.negf %349 : vector<2x32xf32>
    %351 = math.exp %350 : vector<2x32xf32>
    %cst_138 = arith.constant 1.000000e+00 : f32
    %352 = vector.broadcast %cst_138 : f32 to vector<2x32xf32>
    %353 = arith.addf %352, %351 : vector<2x32xf32>
    %354 = arith.divf %352, %353 : vector<2x32xf32>
    %355 = arith.mulf %346, %328 : vector<2x32xf32>
    %356 = arith.mulf %340, %348 : vector<2x32xf32>
    %357 = arith.addf %355, %356 : vector<2x32xf32>
    %358 = math.tanh %357 : vector<2x32xf32>
    %359 = arith.mulf %354, %358 : vector<2x32xf32>
    %360 = vector.broadcast %326 : i32 to vector<2x1xi32>
    %361 = arith.cmpi slt, %360, %3 : vector<2x1xi32>
    %362 = vector.shape_cast %361 : vector<2x1xi1> to vector<2x1xi1>
    %363 = vector.broadcast %362 : vector<2x1xi1> to vector<2x32xi1>
    %364 = arith.select %363, %357, %328 : vector<2x32xi1>, vector<2x32xf32>
    %c0_139 = arith.constant 0 : index
    %c0_140 = arith.constant 0 : index
    %365 = vector.load %arg9[%c0_139, %c0_140] : memref<2x32xf32, #tpu.memory_space<vmem>>, vector<2x32xf32>
    tpu.vector_store %arg9[%c0_139, %c0_140], %364 {strides = array<i32>} : memref<2x32xf32, #tpu.memory_space<vmem>>, vector<2x32xf32>,
    %366 = vector.shape_cast %361 : vector<2x1xi1> to vector<2x1xi1>
    %367 = vector.broadcast %366 : vector<2x1xi1> to vector<2x32xi1>
    %368 = arith.select %367, %359, %327 : vector<2x32xi1>, vector<2x32xf32>
    %c0_141 = arith.constant 0 : index
    %c0_142 = arith.constant 0 : index
    %369 = vector.load %arg8[%c0_141, %c0_142] : memref<2x32xf32, #tpu.memory_space<vmem>>, vector<2x32xf32>
    tpu.vector_store %arg8[%c0_141, %c0_142], %368 {strides = array<i32>} : memref<2x32xf32, #tpu.memory_space<vmem>>, vector<2x32xf32>,
    %cst_143 = arith.constant 0.000000e+00 : f32
    %370 = vector.shape_cast %361 : vector<2x1xi1> to vector<2x1xi1>
    %371 = vector.broadcast %370 : vector<2x1xi1> to vector<2x32xi1>
    %372 = vector.broadcast %cst_143 : f32 to vector<2x32xf32>
    %373 = arith.select %371, %359, %372 : vector<2x32xi1>, vector<2x32xf32>
    %374 = arith.index_cast %c3_i32 : i32 to index
    %c0_144 = arith.constant 0 : index
    %c0_145 = arith.constant 0 : index
    %375 = vector.load %arg6[%374, %c0_144, %c0_145] : memref<8x2x32xf32, #tpu.memory_space<vmem>>, vector<1x2x32xf32>
    %376 = vector.shape_cast %375 : vector<1x2x32xf32> to vector<2x32xf32>
    %377 = vector.shape_cast %373 : vector<2x32xf32> to vector<1x2x32xf32>
    tpu.vector_store %arg6[%374, %c0_144, %c0_145], %377 {strides = array<i32>} : memref<8x2x32xf32, #tpu.memory_space<vmem>>, vector<1x2x32xf32>,
    %c7_i32_146 = arith.constant 7 : i32
    %378 = arith.subi %c7_i32_146, %326 : i32
    %c0_147 = arith.constant 0 : index
    %c0_148 = arith.constant 0 : index
    %379 = vector.load %arg10[%c0_147, %c0_148] : memref<2x32xf32, #tpu.memory_space<vmem>>, vector<2x32xf32>
    %c0_149 = arith.constant 0 : index
    %c0_150 = arith.constant 0 : index
    %380 = vector.load %arg11[%c0_149, %c0_150] : memref<2x32xf32, #tpu.memory_space<vmem>>, vector<2x32xf32>
    %c7_i32_151 = arith.constant 7 : i32
    %381 = arith.subi %c7_i32_151, %c3_i32 : i32
    %382 = arith.index_cast %381 : i32 to index
    %c0_152 = arith.constant 0 : index
    %c0_153 = arith.constant 0 : index
    %383 = vector.load %arg2[%382, %c0_152, %c0_153] : memref<8x2x128xf32, #tpu.memory_space<vmem>>, vector<1x2x128xf32>
    %384 = vector.shape_cast %383 : vector<1x2x128xf32> to vector<2x128xf32>
    %c0_154 = arith.constant 0 : index
    %c0_155 = arith.constant 0 : index
    %385 = vector.load %arg4[%c0_154, %c0_155] : memref<32x128xf32, #tpu.memory_space<vmem>>, vector<32x128xf32>
    %cst_156 = arith.constant dense<0.000000e+00> : vector<2x128xf32>
    %386 = tpu.matmul %379, %385, %cst_156 {dimension_numbers = #tpu.dot_dimension_numbers<[1], [0], [0], [1], [0, 0, 1, 1], [], []>} : vector<2x32xf32>, vector<32x128xf32>, vector<2x128xf32> -> vector<2x128xf32>
    %387 = arith.addf %384, %386 : vector<2x128xf32>
    %388 = vector.extract_strided_slice %387 {offsets = [0, 0], sizes = [2, 32], strides = [1, 1]} : vector<2x128xf32> to vector<2x32xf32>
    %389 = arith.negf %388 : vector<2x32xf32>
    %390 = math.exp %389 : vector<2x32xf32>
    %cst_157 = arith.constant 1.000000e+00 : f32
    %391 = vector.broadcast %cst_157 : f32 to vector<2x32xf32>
    %392 = arith.addf %391, %390 : vector<2x32xf32>
    %393 = arith.divf %391, %392 : vector<2x32xf32>
    %394 = vector.extract_strided_slice %387 {offsets = [0, 32], sizes = [2, 32], strides = [1, 1]} : vector<2x128xf32> to vector<2x32xf32>
    %395 = arith.negf %394 : vector<2x32xf32>
    %396 = math.exp %395 : vector<2x32xf32>
    %cst_158 = arith.constant 1.000000e+00 : f32
    %397 = vector.broadcast %cst_158 : f32 to vector<2x32xf32>
    %398 = arith.addf %397, %396 : vector<2x32xf32>
    %399 = arith.divf %397, %398 : vector<2x32xf32>
    %400 = vector.extract_strided_slice %387 {offsets = [0, 64], sizes = [2, 32], strides = [1, 1]} : vector<2x128xf32> to vector<2x32xf32>
    %401 = math.tanh %400 : vector<2x32xf32>
    %402 = vector.extract_strided_slice %387 {offsets = [0, 96], sizes = [2, 32], strides = [1, 1]} : vector<2x128xf32> to vector<2x32xf32>
    %403 = arith.negf %402 : vector<2x32xf32>
    %404 = math.exp %403 : vector<2x32xf32>
    %cst_159 = arith.constant 1.000000e+00 : f32
    %405 = vector.broadcast %cst_159 : f32 to vector<2x32xf32>
    %406 = arith.addf %405, %404 : vector<2x32xf32>
    %407 = arith.divf %405, %406 : vector<2x32xf32>
    %408 = arith.mulf %399, %380 : vector<2x32xf32>
    %409 = arith.mulf %393, %401 : vector<2x32xf32>
    %410 = arith.addf %408, %409 : vector<2x32xf32>
    %411 = math.tanh %410 : vector<2x32xf32>
    %412 = arith.mulf %407, %411 : vector<2x32xf32>
    %413 = vector.broadcast %378 : i32 to vector<2x1xi32>
    %414 = arith.cmpi slt, %413, %3 : vector<2x1xi32>
    %415 = vector.shape_cast %414 : vector<2x1xi1> to vector<2x1xi1>
    %416 = vector.broadcast %415 : vector<2x1xi1> to vector<2x32xi1>
    %417 = arith.select %416, %410, %380 : vector<2x32xi1>, vector<2x32xf32>
    %c0_160 = arith.constant 0 : index
    %c0_161 = arith.constant 0 : index
    %418 = vector.load %arg11[%c0_160, %c0_161] : memref<2x32xf32, #tpu.memory_space<vmem>>, vector<2x32xf32>
    tpu.vector_store %arg11[%c0_160, %c0_161], %417 {strides = array<i32>} : memref<2x32xf32, #tpu.memory_space<vmem>>, vector<2x32xf32>,
    %419 = vector.shape_cast %414 : vector<2x1xi1> to vector<2x1xi1>
    %420 = vector.broadcast %419 : vector<2x1xi1> to vector<2x32xi1>
    %421 = arith.select %420, %412, %379 : vector<2x32xi1>, vector<2x32xf32>
    %c0_162 = arith.constant 0 : index
    %c0_163 = arith.constant 0 : index
    %422 = vector.load %arg10[%c0_162, %c0_163] : memref<2x32xf32, #tpu.memory_space<vmem>>, vector<2x32xf32>
    tpu.vector_store %arg10[%c0_162, %c0_163], %421 {strides = array<i32>} : memref<2x32xf32, #tpu.memory_space<vmem>>, vector<2x32xf32>,
    %cst_164 = arith.constant 0.000000e+00 : f32
    %423 = vector.shape_cast %414 : vector<2x1xi1> to vector<2x1xi1>
    %424 = vector.broadcast %423 : vector<2x1xi1> to vector<2x32xi1>
    %425 = vector.broadcast %cst_164 : f32 to vector<2x32xf32>
    %426 = arith.select %424, %412, %425 : vector<2x32xi1>, vector<2x32xf32>
    %c7_i32_165 = arith.constant 7 : i32
    %427 = arith.subi %c7_i32_165, %c3_i32 : i32
    %428 = arith.index_cast %427 : i32 to index
    %c0_166 = arith.constant 0 : index
    %c0_167 = arith.constant 0 : index
    %429 = vector.load %arg7[%428, %c0_166, %c0_167] : memref<8x2x32xf32, #tpu.memory_space<vmem>>, vector<1x2x32xf32>
    %430 = vector.shape_cast %429 : vector<1x2x32xf32> to vector<2x32xf32>
    %431 = vector.shape_cast %426 : vector<2x32xf32> to vector<1x2x32xf32>
    tpu.vector_store %arg7[%428, %c0_166, %c0_167], %431 {strides = array<i32>} : memref<8x2x32xf32, #tpu.memory_space<vmem>>, vector<1x2x32xf32>,
    %c4_i32 = arith.constant 4 : i32
    %c8_i32_168 = arith.constant 8 : i32
    %432 = arith.muli %arg0, %c8_i32_168 : i32
    %433 = arith.addi %432, %c4_i32 : i32
    %c0_169 = arith.constant 0 : index
    %c0_170 = arith.constant 0 : index
    %434 = vector.load %arg8[%c0_169, %c0_170] : memref<2x32xf32, #tpu.memory_space<vmem>>, vector<2x32xf32>
    %c0_171 = arith.constant 0 : index
    %c0_172 = arith.constant 0 : index
    %435 = vector.load %arg9[%c0_171, %c0_172] : memref<2x32xf32, #tpu.memory_space<vmem>>, vector<2x32xf32>
    %436 = arith.index_cast %c4_i32 : i32 to index
    %c0_173 = arith.constant 0 : index
    %c0_174 = arith.constant 0 : index
    %437 = vector.load %arg1[%436, %c0_173, %c0_174] : memref<8x2x128xf32, #tpu.memory_space<vmem>>, vector<1x2x128xf32>
    %438 = vector.shape_cast %437 : vector<1x2x128xf32> to vector<2x128xf32>
    %c0_175 = arith.constant 0 : index
    %c0_176 = arith.constant 0 : index
    %439 = vector.load %arg3[%c0_175, %c0_176] : memref<32x128xf32, #tpu.memory_space<vmem>>, vector<32x128xf32>
    %cst_177 = arith.constant dense<0.000000e+00> : vector<2x128xf32>
    %440 = tpu.matmul %434, %439, %cst_177 {dimension_numbers = #tpu.dot_dimension_numbers<[1], [0], [0], [1], [0, 0, 1, 1], [], []>} : vector<2x32xf32>, vector<32x128xf32>, vector<2x128xf32> -> vector<2x128xf32>
    %441 = arith.addf %438, %440 : vector<2x128xf32>
    %442 = vector.extract_strided_slice %441 {offsets = [0, 0], sizes = [2, 32], strides = [1, 1]} : vector<2x128xf32> to vector<2x32xf32>
    %443 = arith.negf %442 : vector<2x32xf32>
    %444 = math.exp %443 : vector<2x32xf32>
    %cst_178 = arith.constant 1.000000e+00 : f32
    %445 = vector.broadcast %cst_178 : f32 to vector<2x32xf32>
    %446 = arith.addf %445, %444 : vector<2x32xf32>
    %447 = arith.divf %445, %446 : vector<2x32xf32>
    %448 = vector.extract_strided_slice %441 {offsets = [0, 32], sizes = [2, 32], strides = [1, 1]} : vector<2x128xf32> to vector<2x32xf32>
    %449 = arith.negf %448 : vector<2x32xf32>
    %450 = math.exp %449 : vector<2x32xf32>
    %cst_179 = arith.constant 1.000000e+00 : f32
    %451 = vector.broadcast %cst_179 : f32 to vector<2x32xf32>
    %452 = arith.addf %451, %450 : vector<2x32xf32>
    %453 = arith.divf %451, %452 : vector<2x32xf32>
    %454 = vector.extract_strided_slice %441 {offsets = [0, 64], sizes = [2, 32], strides = [1, 1]} : vector<2x128xf32> to vector<2x32xf32>
    %455 = math.tanh %454 : vector<2x32xf32>
    %456 = vector.extract_strided_slice %441 {offsets = [0, 96], sizes = [2, 32], strides = [1, 1]} : vector<2x128xf32> to vector<2x32xf32>
    %457 = arith.negf %456 : vector<2x32xf32>
    %458 = math.exp %457 : vector<2x32xf32>
    %cst_180 = arith.constant 1.000000e+00 : f32
    %459 = vector.broadcast %cst_180 : f32 to vector<2x32xf32>
    %460 = arith.addf %459, %458 : vector<2x32xf32>
    %461 = arith.divf %459, %460 : vector<2x32xf32>
    %462 = arith.mulf %453, %435 : vector<2x32xf32>
    %463 = arith.mulf %447, %455 : vector<2x32xf32>
    %464 = arith.addf %462, %463 : vector<2x32xf32>
    %465 = math.tanh %464 : vector<2x32xf32>
    %466 = arith.mulf %461, %465 : vector<2x32xf32>
    %467 = vector.broadcast %433 : i32 to vector<2x1xi32>
    %468 = arith.cmpi slt, %467, %3 : vector<2x1xi32>
    %469 = vector.shape_cast %468 : vector<2x1xi1> to vector<2x1xi1>
    %470 = vector.broadcast %469 : vector<2x1xi1> to vector<2x32xi1>
    %471 = arith.select %470, %464, %435 : vector<2x32xi1>, vector<2x32xf32>
    %c0_181 = arith.constant 0 : index
    %c0_182 = arith.constant 0 : index
    %472 = vector.load %arg9[%c0_181, %c0_182] : memref<2x32xf32, #tpu.memory_space<vmem>>, vector<2x32xf32>
    tpu.vector_store %arg9[%c0_181, %c0_182], %471 {strides = array<i32>} : memref<2x32xf32, #tpu.memory_space<vmem>>, vector<2x32xf32>,
    %473 = vector.shape_cast %468 : vector<2x1xi1> to vector<2x1xi1>
    %474 = vector.broadcast %473 : vector<2x1xi1> to vector<2x32xi1>
    %475 = arith.select %474, %466, %434 : vector<2x32xi1>, vector<2x32xf32>
    %c0_183 = arith.constant 0 : index
    %c0_184 = arith.constant 0 : index
    %476 = vector.load %arg8[%c0_183, %c0_184] : memref<2x32xf32, #tpu.memory_space<vmem>>, vector<2x32xf32>
    tpu.vector_store %arg8[%c0_183, %c0_184], %475 {strides = array<i32>} : memref<2x32xf32, #tpu.memory_space<vmem>>, vector<2x32xf32>,
    %cst_185 = arith.constant 0.000000e+00 : f32
    %477 = vector.shape_cast %468 : vector<2x1xi1> to vector<2x1xi1>
    %478 = vector.broadcast %477 : vector<2x1xi1> to vector<2x32xi1>
    %479 = vector.broadcast %cst_185 : f32 to vector<2x32xf32>
    %480 = arith.select %478, %466, %479 : vector<2x32xi1>, vector<2x32xf32>
    %481 = arith.index_cast %c4_i32 : i32 to index
    %c0_186 = arith.constant 0 : index
    %c0_187 = arith.constant 0 : index
    %482 = vector.load %arg6[%481, %c0_186, %c0_187] : memref<8x2x32xf32, #tpu.memory_space<vmem>>, vector<1x2x32xf32>
    %483 = vector.shape_cast %482 : vector<1x2x32xf32> to vector<2x32xf32>
    %484 = vector.shape_cast %480 : vector<2x32xf32> to vector<1x2x32xf32>
    tpu.vector_store %arg6[%481, %c0_186, %c0_187], %484 {strides = array<i32>} : memref<8x2x32xf32, #tpu.memory_space<vmem>>, vector<1x2x32xf32>,
    %c7_i32_188 = arith.constant 7 : i32
    %485 = arith.subi %c7_i32_188, %433 : i32
    %c0_189 = arith.constant 0 : index
    %c0_190 = arith.constant 0 : index
    %486 = vector.load %arg10[%c0_189, %c0_190] : memref<2x32xf32, #tpu.memory_space<vmem>>, vector<2x32xf32>
    %c0_191 = arith.constant 0 : index
    %c0_192 = arith.constant 0 : index
    %487 = vector.load %arg11[%c0_191, %c0_192] : memref<2x32xf32, #tpu.memory_space<vmem>>, vector<2x32xf32>
    %c7_i32_193 = arith.constant 7 : i32
    %488 = arith.subi %c7_i32_193, %c4_i32 : i32
    %489 = arith.index_cast %488 : i32 to index
    %c0_194 = arith.constant 0 : index
    %c0_195 = arith.constant 0 : index
    %490 = vector.load %arg2[%489, %c0_194, %c0_195] : memref<8x2x128xf32, #tpu.memory_space<vmem>>, vector<1x2x128xf32>
    %491 = vector.shape_cast %490 : vector<1x2x128xf32> to vector<2x128xf32>
    %c0_196 = arith.constant 0 : index
    %c0_197 = arith.constant 0 : index
    %492 = vector.load %arg4[%c0_196, %c0_197] : memref<32x128xf32, #tpu.memory_space<vmem>>, vector<32x128xf32>
    %cst_198 = arith.constant dense<0.000000e+00> : vector<2x128xf32>
    %493 = tpu.matmul %486, %492, %cst_198 {dimension_numbers = #tpu.dot_dimension_numbers<[1], [0], [0], [1], [0, 0, 1, 1], [], []>} : vector<2x32xf32>, vector<32x128xf32>, vector<2x128xf32> -> vector<2x128xf32>
    %494 = arith.addf %491, %493 : vector<2x128xf32>
    %495 = vector.extract_strided_slice %494 {offsets = [0, 0], sizes = [2, 32], strides = [1, 1]} : vector<2x128xf32> to vector<2x32xf32>
    %496 = arith.negf %495 : vector<2x32xf32>
    %497 = math.exp %496 : vector<2x32xf32>
    %cst_199 = arith.constant 1.000000e+00 : f32
    %498 = vector.broadcast %cst_199 : f32 to vector<2x32xf32>
    %499 = arith.addf %498, %497 : vector<2x32xf32>
    %500 = arith.divf %498, %499 : vector<2x32xf32>
    %501 = vector.extract_strided_slice %494 {offsets = [0, 32], sizes = [2, 32], strides = [1, 1]} : vector<2x128xf32> to vector<2x32xf32>
    %502 = arith.negf %501 : vector<2x32xf32>
    %503 = math.exp %502 : vector<2x32xf32>
    %cst_200 = arith.constant 1.000000e+00 : f32
    %504 = vector.broadcast %cst_200 : f32 to vector<2x32xf32>
    %505 = arith.addf %504, %503 : vector<2x32xf32>
    %506 = arith.divf %504, %505 : vector<2x32xf32>
    %507 = vector.extract_strided_slice %494 {offsets = [0, 64], sizes = [2, 32], strides = [1, 1]} : vector<2x128xf32> to vector<2x32xf32>
    %508 = math.tanh %507 : vector<2x32xf32>
    %509 = vector.extract_strided_slice %494 {offsets = [0, 96], sizes = [2, 32], strides = [1, 1]} : vector<2x128xf32> to vector<2x32xf32>
    %510 = arith.negf %509 : vector<2x32xf32>
    %511 = math.exp %510 : vector<2x32xf32>
    %cst_201 = arith.constant 1.000000e+00 : f32
    %512 = vector.broadcast %cst_201 : f32 to vector<2x32xf32>
    %513 = arith.addf %512, %511 : vector<2x32xf32>
    %514 = arith.divf %512, %513 : vector<2x32xf32>
    %515 = arith.mulf %506, %487 : vector<2x32xf32>
    %516 = arith.mulf %500, %508 : vector<2x32xf32>
    %517 = arith.addf %515, %516 : vector<2x32xf32>
    %518 = math.tanh %517 : vector<2x32xf32>
    %519 = arith.mulf %514, %518 : vector<2x32xf32>
    %520 = vector.broadcast %485 : i32 to vector<2x1xi32>
    %521 = arith.cmpi slt, %520, %3 : vector<2x1xi32>
    %522 = vector.shape_cast %521 : vector<2x1xi1> to vector<2x1xi1>
    %523 = vector.broadcast %522 : vector<2x1xi1> to vector<2x32xi1>
    %524 = arith.select %523, %517, %487 : vector<2x32xi1>, vector<2x32xf32>
    %c0_202 = arith.constant 0 : index
    %c0_203 = arith.constant 0 : index
    %525 = vector.load %arg11[%c0_202, %c0_203] : memref<2x32xf32, #tpu.memory_space<vmem>>, vector<2x32xf32>
    tpu.vector_store %arg11[%c0_202, %c0_203], %524 {strides = array<i32>} : memref<2x32xf32, #tpu.memory_space<vmem>>, vector<2x32xf32>,
    %526 = vector.shape_cast %521 : vector<2x1xi1> to vector<2x1xi1>
    %527 = vector.broadcast %526 : vector<2x1xi1> to vector<2x32xi1>
    %528 = arith.select %527, %519, %486 : vector<2x32xi1>, vector<2x32xf32>
    %c0_204 = arith.constant 0 : index
    %c0_205 = arith.constant 0 : index
    %529 = vector.load %arg10[%c0_204, %c0_205] : memref<2x32xf32, #tpu.memory_space<vmem>>, vector<2x32xf32>
    tpu.vector_store %arg10[%c0_204, %c0_205], %528 {strides = array<i32>} : memref<2x32xf32, #tpu.memory_space<vmem>>, vector<2x32xf32>,
    %cst_206 = arith.constant 0.000000e+00 : f32
    %530 = vector.shape_cast %521 : vector<2x1xi1> to vector<2x1xi1>
    %531 = vector.broadcast %530 : vector<2x1xi1> to vector<2x32xi1>
    %532 = vector.broadcast %cst_206 : f32 to vector<2x32xf32>
    %533 = arith.select %531, %519, %532 : vector<2x32xi1>, vector<2x32xf32>
    %c7_i32_207 = arith.constant 7 : i32
    %534 = arith.subi %c7_i32_207, %c4_i32 : i32
    %535 = arith.index_cast %534 : i32 to index
    %c0_208 = arith.constant 0 : index
    %c0_209 = arith.constant 0 : index
    %536 = vector.load %arg7[%535, %c0_208, %c0_209] : memref<8x2x32xf32, #tpu.memory_space<vmem>>, vector<1x2x32xf32>
    %537 = vector.shape_cast %536 : vector<1x2x32xf32> to vector<2x32xf32>
    %538 = vector.shape_cast %533 : vector<2x32xf32> to vector<1x2x32xf32>
    tpu.vector_store %arg7[%535, %c0_208, %c0_209], %538 {strides = array<i32>} : memref<8x2x32xf32, #tpu.memory_space<vmem>>, vector<1x2x32xf32>,
    %c5_i32 = arith.constant 5 : i32
    %c8_i32_210 = arith.constant 8 : i32
    %539 = arith.muli %arg0, %c8_i32_210 : i32
    %540 = arith.addi %539, %c5_i32 : i32
    %c0_211 = arith.constant 0 : index
    %c0_212 = arith.constant 0 : index
    %541 = vector.load %arg8[%c0_211, %c0_212] : memref<2x32xf32, #tpu.memory_space<vmem>>, vector<2x32xf32>
    %c0_213 = arith.constant 0 : index
    %c0_214 = arith.constant 0 : index
    %542 = vector.load %arg9[%c0_213, %c0_214] : memref<2x32xf32, #tpu.memory_space<vmem>>, vector<2x32xf32>
    %543 = arith.index_cast %c5_i32 : i32 to index
    %c0_215 = arith.constant 0 : index
    %c0_216 = arith.constant 0 : index
    %544 = vector.load %arg1[%543, %c0_215, %c0_216] : memref<8x2x128xf32, #tpu.memory_space<vmem>>, vector<1x2x128xf32>
    %545 = vector.shape_cast %544 : vector<1x2x128xf32> to vector<2x128xf32>
    %c0_217 = arith.constant 0 : index
    %c0_218 = arith.constant 0 : index
    %546 = vector.load %arg3[%c0_217, %c0_218] : memref<32x128xf32, #tpu.memory_space<vmem>>, vector<32x128xf32>
    %cst_219 = arith.constant dense<0.000000e+00> : vector<2x128xf32>
    %547 = tpu.matmul %541, %546, %cst_219 {dimension_numbers = #tpu.dot_dimension_numbers<[1], [0], [0], [1], [0, 0, 1, 1], [], []>} : vector<2x32xf32>, vector<32x128xf32>, vector<2x128xf32> -> vector<2x128xf32>
    %548 = arith.addf %545, %547 : vector<2x128xf32>
    %549 = vector.extract_strided_slice %548 {offsets = [0, 0], sizes = [2, 32], strides = [1, 1]} : vector<2x128xf32> to vector<2x32xf32>
    %550 = arith.negf %549 : vector<2x32xf32>
    %551 = math.exp %550 : vector<2x32xf32>
    %cst_220 = arith.constant 1.000000e+00 : f32
    %552 = vector.broadcast %cst_220 : f32 to vector<2x32xf32>
    %553 = arith.addf %552, %551 : vector<2x32xf32>
    %554 = arith.divf %552, %553 : vector<2x32xf32>
    %555 = vector.extract_strided_slice %548 {offsets = [0, 32], sizes = [2, 32], strides = [1, 1]} : vector<2x128xf32> to vector<2x32xf32>
    %556 = arith.negf %555 : vector<2x32xf32>
    %557 = math.exp %556 : vector<2x32xf32>
    %cst_221 = arith.constant 1.000000e+00 : f32
    %558 = vector.broadcast %cst_221 : f32 to vector<2x32xf32>
    %559 = arith.addf %558, %557 : vector<2x32xf32>
    %560 = arith.divf %558, %559 : vector<2x32xf32>
    %561 = vector.extract_strided_slice %548 {offsets = [0, 64], sizes = [2, 32], strides = [1, 1]} : vector<2x128xf32> to vector<2x32xf32>
    %562 = math.tanh %561 : vector<2x32xf32>
    %563 = vector.extract_strided_slice %548 {offsets = [0, 96], sizes = [2, 32], strides = [1, 1]} : vector<2x128xf32> to vector<2x32xf32>
    %564 = arith.negf %563 : vector<2x32xf32>
    %565 = math.exp %564 : vector<2x32xf32>
    %cst_222 = arith.constant 1.000000e+00 : f32
    %566 = vector.broadcast %cst_222 : f32 to vector<2x32xf32>
    %567 = arith.addf %566, %565 : vector<2x32xf32>
    %568 = arith.divf %566, %567 : vector<2x32xf32>
    %569 = arith.mulf %560, %542 : vector<2x32xf32>
    %570 = arith.mulf %554, %562 : vector<2x32xf32>
    %571 = arith.addf %569, %570 : vector<2x32xf32>
    %572 = math.tanh %571 : vector<2x32xf32>
    %573 = arith.mulf %568, %572 : vector<2x32xf32>
    %574 = vector.broadcast %540 : i32 to vector<2x1xi32>
    %575 = arith.cmpi slt, %574, %3 : vector<2x1xi32>
    %576 = vector.shape_cast %575 : vector<2x1xi1> to vector<2x1xi1>
    %577 = vector.broadcast %576 : vector<2x1xi1> to vector<2x32xi1>
    %578 = arith.select %577, %571, %542 : vector<2x32xi1>, vector<2x32xf32>
    %c0_223 = arith.constant 0 : index
    %c0_224 = arith.constant 0 : index
    %579 = vector.load %arg9[%c0_223, %c0_224] : memref<2x32xf32, #tpu.memory_space<vmem>>, vector<2x32xf32>
    tpu.vector_store %arg9[%c0_223, %c0_224], %578 {strides = array<i32>} : memref<2x32xf32, #tpu.memory_space<vmem>>, vector<2x32xf32>,
    %580 = vector.shape_cast %575 : vector<2x1xi1> to vector<2x1xi1>
    %581 = vector.broadcast %580 : vector<2x1xi1> to vector<2x32xi1>
    %582 = arith.select %581, %573, %541 : vector<2x32xi1>, vector<2x32xf32>
    %c0_225 = arith.constant 0 : index
    %c0_226 = arith.constant 0 : index
    %583 = vector.load %arg8[%c0_225, %c0_226] : memref<2x32xf32, #tpu.memory_space<vmem>>, vector<2x32xf32>
    tpu.vector_store %arg8[%c0_225, %c0_226], %582 {strides = array<i32>} : memref<2x32xf32, #tpu.memory_space<vmem>>, vector<2x32xf32>,
    %cst_227 = arith.constant 0.000000e+00 : f32
    %584 = vector.shape_cast %575 : vector<2x1xi1> to vector<2x1xi1>
    %585 = vector.broadcast %584 : vector<2x1xi1> to vector<2x32xi1>
    %586 = vector.broadcast %cst_227 : f32 to vector<2x32xf32>
    %587 = arith.select %585, %573, %586 : vector<2x32xi1>, vector<2x32xf32>
    %588 = arith.index_cast %c5_i32 : i32 to index
    %c0_228 = arith.constant 0 : index
    %c0_229 = arith.constant 0 : index
    %589 = vector.load %arg6[%588, %c0_228, %c0_229] : memref<8x2x32xf32, #tpu.memory_space<vmem>>, vector<1x2x32xf32>
    %590 = vector.shape_cast %589 : vector<1x2x32xf32> to vector<2x32xf32>
    %591 = vector.shape_cast %587 : vector<2x32xf32> to vector<1x2x32xf32>
    tpu.vector_store %arg6[%588, %c0_228, %c0_229], %591 {strides = array<i32>} : memref<8x2x32xf32, #tpu.memory_space<vmem>>, vector<1x2x32xf32>,
    %c7_i32_230 = arith.constant 7 : i32
    %592 = arith.subi %c7_i32_230, %540 : i32
    %c0_231 = arith.constant 0 : index
    %c0_232 = arith.constant 0 : index
    %593 = vector.load %arg10[%c0_231, %c0_232] : memref<2x32xf32, #tpu.memory_space<vmem>>, vector<2x32xf32>
    %c0_233 = arith.constant 0 : index
    %c0_234 = arith.constant 0 : index
    %594 = vector.load %arg11[%c0_233, %c0_234] : memref<2x32xf32, #tpu.memory_space<vmem>>, vector<2x32xf32>
    %c7_i32_235 = arith.constant 7 : i32
    %595 = arith.subi %c7_i32_235, %c5_i32 : i32
    %596 = arith.index_cast %595 : i32 to index
    %c0_236 = arith.constant 0 : index
    %c0_237 = arith.constant 0 : index
    %597 = vector.load %arg2[%596, %c0_236, %c0_237] : memref<8x2x128xf32, #tpu.memory_space<vmem>>, vector<1x2x128xf32>
    %598 = vector.shape_cast %597 : vector<1x2x128xf32> to vector<2x128xf32>
    %c0_238 = arith.constant 0 : index
    %c0_239 = arith.constant 0 : index
    %599 = vector.load %arg4[%c0_238, %c0_239] : memref<32x128xf32, #tpu.memory_space<vmem>>, vector<32x128xf32>
    %cst_240 = arith.constant dense<0.000000e+00> : vector<2x128xf32>
    %600 = tpu.matmul %593, %599, %cst_240 {dimension_numbers = #tpu.dot_dimension_numbers<[1], [0], [0], [1], [0, 0, 1, 1], [], []>} : vector<2x32xf32>, vector<32x128xf32>, vector<2x128xf32> -> vector<2x128xf32>
    %601 = arith.addf %598, %600 : vector<2x128xf32>
    %602 = vector.extract_strided_slice %601 {offsets = [0, 0], sizes = [2, 32], strides = [1, 1]} : vector<2x128xf32> to vector<2x32xf32>
    %603 = arith.negf %602 : vector<2x32xf32>
    %604 = math.exp %603 : vector<2x32xf32>
    %cst_241 = arith.constant 1.000000e+00 : f32
    %605 = vector.broadcast %cst_241 : f32 to vector<2x32xf32>
    %606 = arith.addf %605, %604 : vector<2x32xf32>
    %607 = arith.divf %605, %606 : vector<2x32xf32>
    %608 = vector.extract_strided_slice %601 {offsets = [0, 32], sizes = [2, 32], strides = [1, 1]} : vector<2x128xf32> to vector<2x32xf32>
    %609 = arith.negf %608 : vector<2x32xf32>
    %610 = math.exp %609 : vector<2x32xf32>
    %cst_242 = arith.constant 1.000000e+00 : f32
    %611 = vector.broadcast %cst_242 : f32 to vector<2x32xf32>
    %612 = arith.addf %611, %610 : vector<2x32xf32>
    %613 = arith.divf %611, %612 : vector<2x32xf32>
    %614 = vector.extract_strided_slice %601 {offsets = [0, 64], sizes = [2, 32], strides = [1, 1]} : vector<2x128xf32> to vector<2x32xf32>
    %615 = math.tanh %614 : vector<2x32xf32>
    %616 = vector.extract_strided_slice %601 {offsets = [0, 96], sizes = [2, 32], strides = [1, 1]} : vector<2x128xf32> to vector<2x32xf32>
    %617 = arith.negf %616 : vector<2x32xf32>
    %618 = math.exp %617 : vector<2x32xf32>
    %cst_243 = arith.constant 1.000000e+00 : f32
    %619 = vector.broadcast %cst_243 : f32 to vector<2x32xf32>
    %620 = arith.addf %619, %618 : vector<2x32xf32>
    %621 = arith.divf %619, %620 : vector<2x32xf32>
    %622 = arith.mulf %613, %594 : vector<2x32xf32>
    %623 = arith.mulf %607, %615 : vector<2x32xf32>
    %624 = arith.addf %622, %623 : vector<2x32xf32>
    %625 = math.tanh %624 : vector<2x32xf32>
    %626 = arith.mulf %621, %625 : vector<2x32xf32>
    %627 = vector.broadcast %592 : i32 to vector<2x1xi32>
    %628 = arith.cmpi slt, %627, %3 : vector<2x1xi32>
    %629 = vector.shape_cast %628 : vector<2x1xi1> to vector<2x1xi1>
    %630 = vector.broadcast %629 : vector<2x1xi1> to vector<2x32xi1>
    %631 = arith.select %630, %624, %594 : vector<2x32xi1>, vector<2x32xf32>
    %c0_244 = arith.constant 0 : index
    %c0_245 = arith.constant 0 : index
    %632 = vector.load %arg11[%c0_244, %c0_245] : memref<2x32xf32, #tpu.memory_space<vmem>>, vector<2x32xf32>
    tpu.vector_store %arg11[%c0_244, %c0_245], %631 {strides = array<i32>} : memref<2x32xf32, #tpu.memory_space<vmem>>, vector<2x32xf32>,
    %633 = vector.shape_cast %628 : vector<2x1xi1> to vector<2x1xi1>
    %634 = vector.broadcast %633 : vector<2x1xi1> to vector<2x32xi1>
    %635 = arith.select %634, %626, %593 : vector<2x32xi1>, vector<2x32xf32>
    %c0_246 = arith.constant 0 : index
    %c0_247 = arith.constant 0 : index
    %636 = vector.load %arg10[%c0_246, %c0_247] : memref<2x32xf32, #tpu.memory_space<vmem>>, vector<2x32xf32>
    tpu.vector_store %arg10[%c0_246, %c0_247], %635 {strides = array<i32>} : memref<2x32xf32, #tpu.memory_space<vmem>>, vector<2x32xf32>,
    %cst_248 = arith.constant 0.000000e+00 : f32
    %637 = vector.shape_cast %628 : vector<2x1xi1> to vector<2x1xi1>
    %638 = vector.broadcast %637 : vector<2x1xi1> to vector<2x32xi1>
    %639 = vector.broadcast %cst_248 : f32 to vector<2x32xf32>
    %640 = arith.select %638, %626, %639 : vector<2x32xi1>, vector<2x32xf32>
    %c7_i32_249 = arith.constant 7 : i32
    %641 = arith.subi %c7_i32_249, %c5_i32 : i32
    %642 = arith.index_cast %641 : i32 to index
    %c0_250 = arith.constant 0 : index
    %c0_251 = arith.constant 0 : index
    %643 = vector.load %arg7[%642, %c0_250, %c0_251] : memref<8x2x32xf32, #tpu.memory_space<vmem>>, vector<1x2x32xf32>
    %644 = vector.shape_cast %643 : vector<1x2x32xf32> to vector<2x32xf32>
    %645 = vector.shape_cast %640 : vector<2x32xf32> to vector<1x2x32xf32>
    tpu.vector_store %arg7[%642, %c0_250, %c0_251], %645 {strides = array<i32>} : memref<8x2x32xf32, #tpu.memory_space<vmem>>, vector<1x2x32xf32>,
    %c6_i32 = arith.constant 6 : i32
    %c8_i32_252 = arith.constant 8 : i32
    %646 = arith.muli %arg0, %c8_i32_252 : i32
    %647 = arith.addi %646, %c6_i32 : i32
    %c0_253 = arith.constant 0 : index
    %c0_254 = arith.constant 0 : index
    %648 = vector.load %arg8[%c0_253, %c0_254] : memref<2x32xf32, #tpu.memory_space<vmem>>, vector<2x32xf32>
    %c0_255 = arith.constant 0 : index
    %c0_256 = arith.constant 0 : index
    %649 = vector.load %arg9[%c0_255, %c0_256] : memref<2x32xf32, #tpu.memory_space<vmem>>, vector<2x32xf32>
    %650 = arith.index_cast %c6_i32 : i32 to index
    %c0_257 = arith.constant 0 : index
    %c0_258 = arith.constant 0 : index
    %651 = vector.load %arg1[%650, %c0_257, %c0_258] : memref<8x2x128xf32, #tpu.memory_space<vmem>>, vector<1x2x128xf32>
    %652 = vector.shape_cast %651 : vector<1x2x128xf32> to vector<2x128xf32>
    %c0_259 = arith.constant 0 : index
    %c0_260 = arith.constant 0 : index
    %653 = vector.load %arg3[%c0_259, %c0_260] : memref<32x128xf32, #tpu.memory_space<vmem>>, vector<32x128xf32>
    %cst_261 = arith.constant dense<0.000000e+00> : vector<2x128xf32>
    %654 = tpu.matmul %648, %653, %cst_261 {dimension_numbers = #tpu.dot_dimension_numbers<[1], [0], [0], [1], [0, 0, 1, 1], [], []>} : vector<2x32xf32>, vector<32x128xf32>, vector<2x128xf32> -> vector<2x128xf32>
    %655 = arith.addf %652, %654 : vector<2x128xf32>
    %656 = vector.extract_strided_slice %655 {offsets = [0, 0], sizes = [2, 32], strides = [1, 1]} : vector<2x128xf32> to vector<2x32xf32>
    %657 = arith.negf %656 : vector<2x32xf32>
    %658 = math.exp %657 : vector<2x32xf32>
    %cst_262 = arith.constant 1.000000e+00 : f32
    %659 = vector.broadcast %cst_262 : f32 to vector<2x32xf32>
    %660 = arith.addf %659, %658 : vector<2x32xf32>
    %661 = arith.divf %659, %660 : vector<2x32xf32>
    %662 = vector.extract_strided_slice %655 {offsets = [0, 32], sizes = [2, 32], strides = [1, 1]} : vector<2x128xf32> to vector<2x32xf32>
    %663 = arith.negf %662 : vector<2x32xf32>
    %664 = math.exp %663 : vector<2x32xf32>
    %cst_263 = arith.constant 1.000000e+00 : f32
    %665 = vector.broadcast %cst_263 : f32 to vector<2x32xf32>
    %666 = arith.addf %665, %664 : vector<2x32xf32>
    %667 = arith.divf %665, %666 : vector<2x32xf32>
    %668 = vector.extract_strided_slice %655 {offsets = [0, 64], sizes = [2, 32], strides = [1, 1]} : vector<2x128xf32> to vector<2x32xf32>
    %669 = math.tanh %668 : vector<2x32xf32>
    %670 = vector.extract_strided_slice %655 {offsets = [0, 96], sizes = [2, 32], strides = [1, 1]} : vector<2x128xf32> to vector<2x32xf32>
    %671 = arith.negf %670 : vector<2x32xf32>
    %672 = math.exp %671 : vector<2x32xf32>
    %cst_264 = arith.constant 1.000000e+00 : f32
    %673 = vector.broadcast %cst_264 : f32 to vector<2x32xf32>
    %674 = arith.addf %673, %672 : vector<2x32xf32>
    %675 = arith.divf %673, %674 : vector<2x32xf32>
    %676 = arith.mulf %667, %649 : vector<2x32xf32>
    %677 = arith.mulf %661, %669 : vector<2x32xf32>
    %678 = arith.addf %676, %677 : vector<2x32xf32>
    %679 = math.tanh %678 : vector<2x32xf32>
    %680 = arith.mulf %675, %679 : vector<2x32xf32>
    %681 = vector.broadcast %647 : i32 to vector<2x1xi32>
    %682 = arith.cmpi slt, %681, %3 : vector<2x1xi32>
    %683 = vector.shape_cast %682 : vector<2x1xi1> to vector<2x1xi1>
    %684 = vector.broadcast %683 : vector<2x1xi1> to vector<2x32xi1>
    %685 = arith.select %684, %678, %649 : vector<2x32xi1>, vector<2x32xf32>
    %c0_265 = arith.constant 0 : index
    %c0_266 = arith.constant 0 : index
    %686 = vector.load %arg9[%c0_265, %c0_266] : memref<2x32xf32, #tpu.memory_space<vmem>>, vector<2x32xf32>
    tpu.vector_store %arg9[%c0_265, %c0_266], %685 {strides = array<i32>} : memref<2x32xf32, #tpu.memory_space<vmem>>, vector<2x32xf32>,
    %687 = vector.shape_cast %682 : vector<2x1xi1> to vector<2x1xi1>
    %688 = vector.broadcast %687 : vector<2x1xi1> to vector<2x32xi1>
    %689 = arith.select %688, %680, %648 : vector<2x32xi1>, vector<2x32xf32>
    %c0_267 = arith.constant 0 : index
    %c0_268 = arith.constant 0 : index
    %690 = vector.load %arg8[%c0_267, %c0_268] : memref<2x32xf32, #tpu.memory_space<vmem>>, vector<2x32xf32>
    tpu.vector_store %arg8[%c0_267, %c0_268], %689 {strides = array<i32>} : memref<2x32xf32, #tpu.memory_space<vmem>>, vector<2x32xf32>,
    %cst_269 = arith.constant 0.000000e+00 : f32
    %691 = vector.shape_cast %682 : vector<2x1xi1> to vector<2x1xi1>
    %692 = vector.broadcast %691 : vector<2x1xi1> to vector<2x32xi1>
    %693 = vector.broadcast %cst_269 : f32 to vector<2x32xf32>
    %694 = arith.select %692, %680, %693 : vector<2x32xi1>, vector<2x32xf32>
    %695 = arith.index_cast %c6_i32 : i32 to index
    %c0_270 = arith.constant 0 : index
    %c0_271 = arith.constant 0 : index
    %696 = vector.load %arg6[%695, %c0_270, %c0_271] : memref<8x2x32xf32, #tpu.memory_space<vmem>>, vector<1x2x32xf32>
    %697 = vector.shape_cast %696 : vector<1x2x32xf32> to vector<2x32xf32>
    %698 = vector.shape_cast %694 : vector<2x32xf32> to vector<1x2x32xf32>
    tpu.vector_store %arg6[%695, %c0_270, %c0_271], %698 {strides = array<i32>} : memref<8x2x32xf32, #tpu.memory_space<vmem>>, vector<1x2x32xf32>,
    %c7_i32_272 = arith.constant 7 : i32
    %699 = arith.subi %c7_i32_272, %647 : i32
    %c0_273 = arith.constant 0 : index
    %c0_274 = arith.constant 0 : index
    %700 = vector.load %arg10[%c0_273, %c0_274] : memref<2x32xf32, #tpu.memory_space<vmem>>, vector<2x32xf32>
    %c0_275 = arith.constant 0 : index
    %c0_276 = arith.constant 0 : index
    %701 = vector.load %arg11[%c0_275, %c0_276] : memref<2x32xf32, #tpu.memory_space<vmem>>, vector<2x32xf32>
    %c7_i32_277 = arith.constant 7 : i32
    %702 = arith.subi %c7_i32_277, %c6_i32 : i32
    %703 = arith.index_cast %702 : i32 to index
    %c0_278 = arith.constant 0 : index
    %c0_279 = arith.constant 0 : index
    %704 = vector.load %arg2[%703, %c0_278, %c0_279] : memref<8x2x128xf32, #tpu.memory_space<vmem>>, vector<1x2x128xf32>
    %705 = vector.shape_cast %704 : vector<1x2x128xf32> to vector<2x128xf32>
    %c0_280 = arith.constant 0 : index
    %c0_281 = arith.constant 0 : index
    %706 = vector.load %arg4[%c0_280, %c0_281] : memref<32x128xf32, #tpu.memory_space<vmem>>, vector<32x128xf32>
    %cst_282 = arith.constant dense<0.000000e+00> : vector<2x128xf32>
    %707 = tpu.matmul %700, %706, %cst_282 {dimension_numbers = #tpu.dot_dimension_numbers<[1], [0], [0], [1], [0, 0, 1, 1], [], []>} : vector<2x32xf32>, vector<32x128xf32>, vector<2x128xf32> -> vector<2x128xf32>
    %708 = arith.addf %705, %707 : vector<2x128xf32>
    %709 = vector.extract_strided_slice %708 {offsets = [0, 0], sizes = [2, 32], strides = [1, 1]} : vector<2x128xf32> to vector<2x32xf32>
    %710 = arith.negf %709 : vector<2x32xf32>
    %711 = math.exp %710 : vector<2x32xf32>
    %cst_283 = arith.constant 1.000000e+00 : f32
    %712 = vector.broadcast %cst_283 : f32 to vector<2x32xf32>
    %713 = arith.addf %712, %711 : vector<2x32xf32>
    %714 = arith.divf %712, %713 : vector<2x32xf32>
    %715 = vector.extract_strided_slice %708 {offsets = [0, 32], sizes = [2, 32], strides = [1, 1]} : vector<2x128xf32> to vector<2x32xf32>
    %716 = arith.negf %715 : vector<2x32xf32>
    %717 = math.exp %716 : vector<2x32xf32>
    %cst_284 = arith.constant 1.000000e+00 : f32
    %718 = vector.broadcast %cst_284 : f32 to vector<2x32xf32>
    %719 = arith.addf %718, %717 : vector<2x32xf32>
    %720 = arith.divf %718, %719 : vector<2x32xf32>
    %721 = vector.extract_strided_slice %708 {offsets = [0, 64], sizes = [2, 32], strides = [1, 1]} : vector<2x128xf32> to vector<2x32xf32>
    %722 = math.tanh %721 : vector<2x32xf32>
    %723 = vector.extract_strided_slice %708 {offsets = [0, 96], sizes = [2, 32], strides = [1, 1]} : vector<2x128xf32> to vector<2x32xf32>
    %724 = arith.negf %723 : vector<2x32xf32>
    %725 = math.exp %724 : vector<2x32xf32>
    %cst_285 = arith.constant 1.000000e+00 : f32
    %726 = vector.broadcast %cst_285 : f32 to vector<2x32xf32>
    %727 = arith.addf %726, %725 : vector<2x32xf32>
    %728 = arith.divf %726, %727 : vector<2x32xf32>
    %729 = arith.mulf %720, %701 : vector<2x32xf32>
    %730 = arith.mulf %714, %722 : vector<2x32xf32>
    %731 = arith.addf %729, %730 : vector<2x32xf32>
    %732 = math.tanh %731 : vector<2x32xf32>
    %733 = arith.mulf %728, %732 : vector<2x32xf32>
    %734 = vector.broadcast %699 : i32 to vector<2x1xi32>
    %735 = arith.cmpi slt, %734, %3 : vector<2x1xi32>
    %736 = vector.shape_cast %735 : vector<2x1xi1> to vector<2x1xi1>
    %737 = vector.broadcast %736 : vector<2x1xi1> to vector<2x32xi1>
    %738 = arith.select %737, %731, %701 : vector<2x32xi1>, vector<2x32xf32>
    %c0_286 = arith.constant 0 : index
    %c0_287 = arith.constant 0 : index
    %739 = vector.load %arg11[%c0_286, %c0_287] : memref<2x32xf32, #tpu.memory_space<vmem>>, vector<2x32xf32>
    tpu.vector_store %arg11[%c0_286, %c0_287], %738 {strides = array<i32>} : memref<2x32xf32, #tpu.memory_space<vmem>>, vector<2x32xf32>,
    %740 = vector.shape_cast %735 : vector<2x1xi1> to vector<2x1xi1>
    %741 = vector.broadcast %740 : vector<2x1xi1> to vector<2x32xi1>
    %742 = arith.select %741, %733, %700 : vector<2x32xi1>, vector<2x32xf32>
    %c0_288 = arith.constant 0 : index
    %c0_289 = arith.constant 0 : index
    %743 = vector.load %arg10[%c0_288, %c0_289] : memref<2x32xf32, #tpu.memory_space<vmem>>, vector<2x32xf32>
    tpu.vector_store %arg10[%c0_288, %c0_289], %742 {strides = array<i32>} : memref<2x32xf32, #tpu.memory_space<vmem>>, vector<2x32xf32>,
    %cst_290 = arith.constant 0.000000e+00 : f32
    %744 = vector.shape_cast %735 : vector<2x1xi1> to vector<2x1xi1>
    %745 = vector.broadcast %744 : vector<2x1xi1> to vector<2x32xi1>
    %746 = vector.broadcast %cst_290 : f32 to vector<2x32xf32>
    %747 = arith.select %745, %733, %746 : vector<2x32xi1>, vector<2x32xf32>
    %c7_i32_291 = arith.constant 7 : i32
    %748 = arith.subi %c7_i32_291, %c6_i32 : i32
    %749 = arith.index_cast %748 : i32 to index
    %c0_292 = arith.constant 0 : index
    %c0_293 = arith.constant 0 : index
    %750 = vector.load %arg7[%749, %c0_292, %c0_293] : memref<8x2x32xf32, #tpu.memory_space<vmem>>, vector<1x2x32xf32>
    %751 = vector.shape_cast %750 : vector<1x2x32xf32> to vector<2x32xf32>
    %752 = vector.shape_cast %747 : vector<2x32xf32> to vector<1x2x32xf32>
    tpu.vector_store %arg7[%749, %c0_292, %c0_293], %752 {strides = array<i32>} : memref<8x2x32xf32, #tpu.memory_space<vmem>>, vector<1x2x32xf32>,
    %c7_i32_294 = arith.constant 7 : i32
    %c8_i32_295 = arith.constant 8 : i32
    %753 = arith.muli %arg0, %c8_i32_295 : i32
    %754 = arith.addi %753, %c7_i32_294 : i32
    %c0_296 = arith.constant 0 : index
    %c0_297 = arith.constant 0 : index
    %755 = vector.load %arg8[%c0_296, %c0_297] : memref<2x32xf32, #tpu.memory_space<vmem>>, vector<2x32xf32>
    %c0_298 = arith.constant 0 : index
    %c0_299 = arith.constant 0 : index
    %756 = vector.load %arg9[%c0_298, %c0_299] : memref<2x32xf32, #tpu.memory_space<vmem>>, vector<2x32xf32>
    %757 = arith.index_cast %c7_i32_294 : i32 to index
    %c0_300 = arith.constant 0 : index
    %c0_301 = arith.constant 0 : index
    %758 = vector.load %arg1[%757, %c0_300, %c0_301] : memref<8x2x128xf32, #tpu.memory_space<vmem>>, vector<1x2x128xf32>
    %759 = vector.shape_cast %758 : vector<1x2x128xf32> to vector<2x128xf32>
    %c0_302 = arith.constant 0 : index
    %c0_303 = arith.constant 0 : index
    %760 = vector.load %arg3[%c0_302, %c0_303] : memref<32x128xf32, #tpu.memory_space<vmem>>, vector<32x128xf32>
    %cst_304 = arith.constant dense<0.000000e+00> : vector<2x128xf32>
    %761 = tpu.matmul %755, %760, %cst_304 {dimension_numbers = #tpu.dot_dimension_numbers<[1], [0], [0], [1], [0, 0, 1, 1], [], []>} : vector<2x32xf32>, vector<32x128xf32>, vector<2x128xf32> -> vector<2x128xf32>
    %762 = arith.addf %759, %761 : vector<2x128xf32>
    %763 = vector.extract_strided_slice %762 {offsets = [0, 0], sizes = [2, 32], strides = [1, 1]} : vector<2x128xf32> to vector<2x32xf32>
    %764 = arith.negf %763 : vector<2x32xf32>
    %765 = math.exp %764 : vector<2x32xf32>
    %cst_305 = arith.constant 1.000000e+00 : f32
    %766 = vector.broadcast %cst_305 : f32 to vector<2x32xf32>
    %767 = arith.addf %766, %765 : vector<2x32xf32>
    %768 = arith.divf %766, %767 : vector<2x32xf32>
    %769 = vector.extract_strided_slice %762 {offsets = [0, 32], sizes = [2, 32], strides = [1, 1]} : vector<2x128xf32> to vector<2x32xf32>
    %770 = arith.negf %769 : vector<2x32xf32>
    %771 = math.exp %770 : vector<2x32xf32>
    %cst_306 = arith.constant 1.000000e+00 : f32
    %772 = vector.broadcast %cst_306 : f32 to vector<2x32xf32>
    %773 = arith.addf %772, %771 : vector<2x32xf32>
    %774 = arith.divf %772, %773 : vector<2x32xf32>
    %775 = vector.extract_strided_slice %762 {offsets = [0, 64], sizes = [2, 32], strides = [1, 1]} : vector<2x128xf32> to vector<2x32xf32>
    %776 = math.tanh %775 : vector<2x32xf32>
    %777 = vector.extract_strided_slice %762 {offsets = [0, 96], sizes = [2, 32], strides = [1, 1]} : vector<2x128xf32> to vector<2x32xf32>
    %778 = arith.negf %777 : vector<2x32xf32>
    %779 = math.exp %778 : vector<2x32xf32>
    %cst_307 = arith.constant 1.000000e+00 : f32
    %780 = vector.broadcast %cst_307 : f32 to vector<2x32xf32>
    %781 = arith.addf %780, %779 : vector<2x32xf32>
    %782 = arith.divf %780, %781 : vector<2x32xf32>
    %783 = arith.mulf %774, %756 : vector<2x32xf32>
    %784 = arith.mulf %768, %776 : vector<2x32xf32>
    %785 = arith.addf %783, %784 : vector<2x32xf32>
    %786 = math.tanh %785 : vector<2x32xf32>
    %787 = arith.mulf %782, %786 : vector<2x32xf32>
    %788 = vector.broadcast %754 : i32 to vector<2x1xi32>
    %789 = arith.cmpi slt, %788, %3 : vector<2x1xi32>
    %790 = vector.shape_cast %789 : vector<2x1xi1> to vector<2x1xi1>
    %791 = vector.broadcast %790 : vector<2x1xi1> to vector<2x32xi1>
    %792 = arith.select %791, %785, %756 : vector<2x32xi1>, vector<2x32xf32>
    %c0_308 = arith.constant 0 : index
    %c0_309 = arith.constant 0 : index
    %793 = vector.load %arg9[%c0_308, %c0_309] : memref<2x32xf32, #tpu.memory_space<vmem>>, vector<2x32xf32>
    tpu.vector_store %arg9[%c0_308, %c0_309], %792 {strides = array<i32>} : memref<2x32xf32, #tpu.memory_space<vmem>>, vector<2x32xf32>,
    %794 = vector.shape_cast %789 : vector<2x1xi1> to vector<2x1xi1>
    %795 = vector.broadcast %794 : vector<2x1xi1> to vector<2x32xi1>
    %796 = arith.select %795, %787, %755 : vector<2x32xi1>, vector<2x32xf32>
    %c0_310 = arith.constant 0 : index
    %c0_311 = arith.constant 0 : index
    %797 = vector.load %arg8[%c0_310, %c0_311] : memref<2x32xf32, #tpu.memory_space<vmem>>, vector<2x32xf32>
    tpu.vector_store %arg8[%c0_310, %c0_311], %796 {strides = array<i32>} : memref<2x32xf32, #tpu.memory_space<vmem>>, vector<2x32xf32>,
    %cst_312 = arith.constant 0.000000e+00 : f32
    %798 = vector.shape_cast %789 : vector<2x1xi1> to vector<2x1xi1>
    %799 = vector.broadcast %798 : vector<2x1xi1> to vector<2x32xi1>
    %800 = vector.broadcast %cst_312 : f32 to vector<2x32xf32>
    %801 = arith.select %799, %787, %800 : vector<2x32xi1>, vector<2x32xf32>
    %802 = arith.index_cast %c7_i32_294 : i32 to index
    %c0_313 = arith.constant 0 : index
    %c0_314 = arith.constant 0 : index
    %803 = vector.load %arg6[%802, %c0_313, %c0_314] : memref<8x2x32xf32, #tpu.memory_space<vmem>>, vector<1x2x32xf32>
    %804 = vector.shape_cast %803 : vector<1x2x32xf32> to vector<2x32xf32>
    %805 = vector.shape_cast %801 : vector<2x32xf32> to vector<1x2x32xf32>
    tpu.vector_store %arg6[%802, %c0_313, %c0_314], %805 {strides = array<i32>} : memref<8x2x32xf32, #tpu.memory_space<vmem>>, vector<1x2x32xf32>,
    %c7_i32_315 = arith.constant 7 : i32
    %806 = arith.subi %c7_i32_315, %754 : i32
    %c0_316 = arith.constant 0 : index
    %c0_317 = arith.constant 0 : index
    %807 = vector.load %arg10[%c0_316, %c0_317] : memref<2x32xf32, #tpu.memory_space<vmem>>, vector<2x32xf32>
    %c0_318 = arith.constant 0 : index
    %c0_319 = arith.constant 0 : index
    %808 = vector.load %arg11[%c0_318, %c0_319] : memref<2x32xf32, #tpu.memory_space<vmem>>, vector<2x32xf32>
    %c7_i32_320 = arith.constant 7 : i32
    %809 = arith.subi %c7_i32_320, %c7_i32_294 : i32
    %810 = arith.index_cast %809 : i32 to index
    %c0_321 = arith.constant 0 : index
    %c0_322 = arith.constant 0 : index
    %811 = vector.load %arg2[%810, %c0_321, %c0_322] : memref<8x2x128xf32, #tpu.memory_space<vmem>>, vector<1x2x128xf32>
    %812 = vector.shape_cast %811 : vector<1x2x128xf32> to vector<2x128xf32>
    %c0_323 = arith.constant 0 : index
    %c0_324 = arith.constant 0 : index
    %813 = vector.load %arg4[%c0_323, %c0_324] : memref<32x128xf32, #tpu.memory_space<vmem>>, vector<32x128xf32>
    %cst_325 = arith.constant dense<0.000000e+00> : vector<2x128xf32>
    %814 = tpu.matmul %807, %813, %cst_325 {dimension_numbers = #tpu.dot_dimension_numbers<[1], [0], [0], [1], [0, 0, 1, 1], [], []>} : vector<2x32xf32>, vector<32x128xf32>, vector<2x128xf32> -> vector<2x128xf32>
    %815 = arith.addf %812, %814 : vector<2x128xf32>
    %816 = vector.extract_strided_slice %815 {offsets = [0, 0], sizes = [2, 32], strides = [1, 1]} : vector<2x128xf32> to vector<2x32xf32>
    %817 = arith.negf %816 : vector<2x32xf32>
    %818 = math.exp %817 : vector<2x32xf32>
    %cst_326 = arith.constant 1.000000e+00 : f32
    %819 = vector.broadcast %cst_326 : f32 to vector<2x32xf32>
    %820 = arith.addf %819, %818 : vector<2x32xf32>
    %821 = arith.divf %819, %820 : vector<2x32xf32>
    %822 = vector.extract_strided_slice %815 {offsets = [0, 32], sizes = [2, 32], strides = [1, 1]} : vector<2x128xf32> to vector<2x32xf32>
    %823 = arith.negf %822 : vector<2x32xf32>
    %824 = math.exp %823 : vector<2x32xf32>
    %cst_327 = arith.constant 1.000000e+00 : f32
    %825 = vector.broadcast %cst_327 : f32 to vector<2x32xf32>
    %826 = arith.addf %825, %824 : vector<2x32xf32>
    %827 = arith.divf %825, %826 : vector<2x32xf32>
    %828 = vector.extract_strided_slice %815 {offsets = [0, 64], sizes = [2, 32], strides = [1, 1]} : vector<2x128xf32> to vector<2x32xf32>
    %829 = math.tanh %828 : vector<2x32xf32>
    %830 = vector.extract_strided_slice %815 {offsets = [0, 96], sizes = [2, 32], strides = [1, 1]} : vector<2x128xf32> to vector<2x32xf32>
    %831 = arith.negf %830 : vector<2x32xf32>
    %832 = math.exp %831 : vector<2x32xf32>
    %cst_328 = arith.constant 1.000000e+00 : f32
    %833 = vector.broadcast %cst_328 : f32 to vector<2x32xf32>
    %834 = arith.addf %833, %832 : vector<2x32xf32>
    %835 = arith.divf %833, %834 : vector<2x32xf32>
    %836 = arith.mulf %827, %808 : vector<2x32xf32>
    %837 = arith.mulf %821, %829 : vector<2x32xf32>
    %838 = arith.addf %836, %837 : vector<2x32xf32>
    %839 = math.tanh %838 : vector<2x32xf32>
    %840 = arith.mulf %835, %839 : vector<2x32xf32>
    %841 = vector.broadcast %806 : i32 to vector<2x1xi32>
    %842 = arith.cmpi slt, %841, %3 : vector<2x1xi32>
    %843 = vector.shape_cast %842 : vector<2x1xi1> to vector<2x1xi1>
    %844 = vector.broadcast %843 : vector<2x1xi1> to vector<2x32xi1>
    %845 = arith.select %844, %838, %808 : vector<2x32xi1>, vector<2x32xf32>
    %c0_329 = arith.constant 0 : index
    %c0_330 = arith.constant 0 : index
    %846 = vector.load %arg11[%c0_329, %c0_330] : memref<2x32xf32, #tpu.memory_space<vmem>>, vector<2x32xf32>
    tpu.vector_store %arg11[%c0_329, %c0_330], %845 {strides = array<i32>} : memref<2x32xf32, #tpu.memory_space<vmem>>, vector<2x32xf32>,
    %847 = vector.shape_cast %842 : vector<2x1xi1> to vector<2x1xi1>
    %848 = vector.broadcast %847 : vector<2x1xi1> to vector<2x32xi1>
    %849 = arith.select %848, %840, %807 : vector<2x32xi1>, vector<2x32xf32>
    %c0_331 = arith.constant 0 : index
    %c0_332 = arith.constant 0 : index
    %850 = vector.load %arg10[%c0_331, %c0_332] : memref<2x32xf32, #tpu.memory_space<vmem>>, vector<2x32xf32>
    tpu.vector_store %arg10[%c0_331, %c0_332], %849 {strides = array<i32>} : memref<2x32xf32, #tpu.memory_space<vmem>>, vector<2x32xf32>,
    %cst_333 = arith.constant 0.000000e+00 : f32
    %851 = vector.shape_cast %842 : vector<2x1xi1> to vector<2x1xi1>
    %852 = vector.broadcast %851 : vector<2x1xi1> to vector<2x32xi1>
    %853 = vector.broadcast %cst_333 : f32 to vector<2x32xf32>
    %854 = arith.select %852, %840, %853 : vector<2x32xi1>, vector<2x32xf32>
    %c7_i32_334 = arith.constant 7 : i32
    %855 = arith.subi %c7_i32_334, %c7_i32_294 : i32
    %856 = arith.index_cast %855 : i32 to index
    %c0_335 = arith.constant 0 : index
    %c0_336 = arith.constant 0 : index
    %857 = vector.load %arg7[%856, %c0_335, %c0_336] : memref<8x2x32xf32, #tpu.memory_space<vmem>>, vector<1x2x32xf32>
    %858 = vector.shape_cast %857 : vector<1x2x32xf32> to vector<2x32xf32>
    %859 = vector.shape_cast %854 : vector<2x32xf32> to vector<1x2x32xf32>
    tpu.vector_store %arg7[%856, %c0_335, %c0_336], %859 {strides = array<i32>} : memref<8x2x32xf32, #tpu.memory_space<vmem>>, vector<1x2x32xf32>,
    %c8_i32_337 = arith.constant 8 : i32
    return
  }
  func.func @transform_0(%arg0: i32) -> (i32, i32, i32) {
    %c0_i32 = arith.constant 0 : i32
    %c0_i32_0 = arith.constant 0 : i32
    %c0_i32_1 = arith.constant 0 : i32
    return %arg0, %c0_i32, %c0_i32_0 : i32, i32, i32
  }
  func.func @transform_1(%arg0: i32) -> (i32, i32, i32) {
    %c0_i32 = arith.constant 0 : i32
    %0 = arith.subi %c0_i32, %arg0 : i32
    %c0_i32_0 = arith.constant 0 : i32
    %c0_i32_1 = arith.constant 0 : i32
    %c0_i32_2 = arith.constant 0 : i32
    return %0, %c0_i32_0, %c0_i32_1 : i32, i32, i32
  }
  func.func @transform_2(%arg0: i32) -> (i32, i32) {
    %c0_i32 = arith.constant 0 : i32
    %c0_i32_0 = arith.constant 0 : i32
    %c0_i32_1 = arith.constant 0 : i32
    return %c0_i32, %c0_i32_0 : i32, i32
  }
  func.func @transform_3(%arg0: i32) -> (i32, i32) {
    %c0_i32 = arith.constant 0 : i32
    %c0_i32_0 = arith.constant 0 : i32
    %c0_i32_1 = arith.constant 0 : i32
    return %c0_i32, %c0_i32_0 : i32, i32
  }
  func.func @transform_4(%arg0: i32) -> (i32, i32) {
    %c0_i32 = arith.constant 0 : i32
    %c0_i32_0 = arith.constant 0 : i32
    %c0_i32_1 = arith.constant 0 : i32
    return %c0_i32, %c0_i32_0 : i32, i32
  }
  func.func @transform_5(%arg0: i32) -> (i32, i32, i32) {
    %c0_i32 = arith.constant 0 : i32
    %c0_i32_0 = arith.constant 0 : i32
    %c0_i32_1 = arith.constant 0 : i32
    return %arg0, %c0_i32, %c0_i32_0 : i32, i32, i32
  }
  func.func @transform_6(%arg0: i32) -> (i32, i32, i32) {
    %c0_i32 = arith.constant 0 : i32
    %0 = arith.subi %c0_i32, %arg0 : i32
    %c0_i32_0 = arith.constant 0 : i32
    %c0_i32_1 = arith.constant 0 : i32
    %c0_i32_2 = arith.constant 0 : i32
    return %0, %c0_i32_0, %c0_i32_1 : i32, i32, i32
  }
}

module attributes {stable_mosaic.version = 11 : i64} {
  func.func @_mm2_kernel(%arg0: i32, %arg1: memref<16x32xf32, #tpu.memory_space<vmem>>, %arg2: memref<16x32xf32, #tpu.memory_space<vmem>>, %arg3: memref<32x128xf32, #tpu.memory_space<vmem>>, %arg4: memref<32x128xf32, #tpu.memory_space<vmem>>, %arg5: memref<1x128xf32, #tpu.memory_space<vmem>>, %arg6: memref<16x128xf32, #tpu.memory_space<vmem>>) attributes {dimension_semantics = [#tpu.dimension_semantics<parallel>], iteration_bounds = array<i64: 1>, scalar_prefetch = 0 : i64, scratch_operands = 0 : i64, tpu.core_type = #tpu.core_type<tc>, window_params = [{transform_indices = @transform_0, window_bounds = array<i64: 16, 32>}, {transform_indices = @transform_1, window_bounds = array<i64: 16, 32>}, {pipeline_mode = #tpu.pipeline_mode<synchronous>, transform_indices = @transform_2, window_bounds = array<i64: 32, 128>}, {pipeline_mode = #tpu.pipeline_mode<synchronous>, transform_indices = @transform_3, window_bounds = array<i64: 32, 128>}, {pipeline_mode = #tpu.pipeline_mode<synchronous>, transform_indices = @transform_4, window_bounds = array<i64: 1, 128>}, {transform_indices = @transform_5, window_bounds = array<i64: 16, 128>}]} {
    %c0 = arith.constant 0 : index
    %c0_0 = arith.constant 0 : index
    %0 = vector.load %arg1[%c0, %c0_0] : memref<16x32xf32, #tpu.memory_space<vmem>>, vector<16x32xf32>
    %c0_1 = arith.constant 0 : index
    %c0_2 = arith.constant 0 : index
    %1 = vector.load %arg3[%c0_1, %c0_2] : memref<32x128xf32, #tpu.memory_space<vmem>>, vector<32x128xf32>
    %cst = arith.constant dense<0.000000e+00> : vector<16x128xf32>
    %2 = tpu.matmul %0, %1, %cst {dimension_numbers = #tpu.dot_dimension_numbers<[1], [0], [0], [1], [0, 0, 1, 1], [], []>} : vector<16x32xf32>, vector<32x128xf32>, vector<16x128xf32> -> vector<16x128xf32>
    %c0_3 = arith.constant 0 : index
    %c0_4 = arith.constant 0 : index
    %3 = vector.load %arg2[%c0_3, %c0_4] : memref<16x32xf32, #tpu.memory_space<vmem>>, vector<16x32xf32>
    %c0_5 = arith.constant 0 : index
    %c0_6 = arith.constant 0 : index
    %4 = vector.load %arg4[%c0_5, %c0_6] : memref<32x128xf32, #tpu.memory_space<vmem>>, vector<32x128xf32>
    %cst_7 = arith.constant dense<0.000000e+00> : vector<16x128xf32>
    %5 = tpu.matmul %3, %4, %cst_7 {dimension_numbers = #tpu.dot_dimension_numbers<[1], [0], [0], [1], [0, 0, 1, 1], [], []>} : vector<16x32xf32>, vector<32x128xf32>, vector<16x128xf32> -> vector<16x128xf32>
    %6 = arith.addf %2, %5 : vector<16x128xf32>
    %c0_8 = arith.constant 0 : index
    %c0_9 = arith.constant 0 : index
    %7 = vector.load %arg5[%c0_8, %c0_9] : memref<1x128xf32, #tpu.memory_space<vmem>>, vector<1x128xf32>
    %8 = vector.broadcast %7 : vector<1x128xf32> to vector<16x128xf32>
    %9 = arith.addf %6, %8 : vector<16x128xf32>
    %c0_10 = arith.constant 0 : index
    %c0_11 = arith.constant 0 : index
    %10 = vector.load %arg6[%c0_10, %c0_11] : memref<16x128xf32, #tpu.memory_space<vmem>>, vector<16x128xf32>
    tpu.vector_store %arg6[%c0_10, %c0_11], %9 {strides = array<i32>} : memref<16x128xf32, #tpu.memory_space<vmem>>, vector<16x128xf32>,
    return
  }
  func.func @transform_0(%arg0: i32) -> (i32, i32) {
    %c0_i32 = arith.constant 0 : i32
    %c0_i32_0 = arith.constant 0 : i32
    return %arg0, %c0_i32 : i32, i32
  }
  func.func @transform_1(%arg0: i32) -> (i32, i32) {
    %c0_i32 = arith.constant 0 : i32
    %c0_i32_0 = arith.constant 0 : i32
    return %arg0, %c0_i32 : i32, i32
  }
  func.func @transform_2(%arg0: i32) -> (i32, i32) {
    %c0_i32 = arith.constant 0 : i32
    %c0_i32_0 = arith.constant 0 : i32
    %c0_i32_1 = arith.constant 0 : i32
    return %c0_i32, %c0_i32_0 : i32, i32
  }
  func.func @transform_3(%arg0: i32) -> (i32, i32) {
    %c0_i32 = arith.constant 0 : i32
    %c0_i32_0 = arith.constant 0 : i32
    %c0_i32_1 = arith.constant 0 : i32
    return %c0_i32, %c0_i32_0 : i32, i32
  }
  func.func @transform_4(%arg0: i32) -> (i32, i32) {
    %c0_i32 = arith.constant 0 : i32
    %c0_i32_0 = arith.constant 0 : i32
    %c0_i32_1 = arith.constant 0 : i32
    return %c0_i32, %c0_i32_0 : i32, i32
  }
  func.func @transform_5(%arg0: i32) -> (i32, i32) {
    %c0_i32 = arith.constant 0 : i32
    %c0_i32_0 = arith.constant 0 : i32
    return %arg0, %c0_i32 : i32, i32
  }
}

module attributes {stable_mosaic.version = 11 : i64} {
  func.func @_mm2_kernel(%arg0: i32, %arg1: memref<16x32xf32, #tpu.memory_space<vmem>>, %arg2: memref<16x32xf32, #tpu.memory_space<vmem>>, %arg3: memref<32x32xf32, #tpu.memory_space<vmem>>, %arg4: memref<32x32xf32, #tpu.memory_space<vmem>>, %arg5: memref<1x32xf32, #tpu.memory_space<vmem>>, %arg6: memref<16x32xf32, #tpu.memory_space<vmem>>) attributes {dimension_semantics = [#tpu.dimension_semantics<parallel>], iteration_bounds = array<i64: 1>, scalar_prefetch = 0 : i64, scratch_operands = 0 : i64, tpu.core_type = #tpu.core_type<tc>, window_params = [{transform_indices = @transform_0, window_bounds = array<i64: 16, 32>}, {transform_indices = @transform_1, window_bounds = array<i64: 16, 32>}, {pipeline_mode = #tpu.pipeline_mode<synchronous>, transform_indices = @transform_2, window_bounds = array<i64: 32, 32>}, {pipeline_mode = #tpu.pipeline_mode<synchronous>, transform_indices = @transform_3, window_bounds = array<i64: 32, 32>}, {pipeline_mode = #tpu.pipeline_mode<synchronous>, transform_indices = @transform_4, window_bounds = array<i64: 1, 32>}, {transform_indices = @transform_5, window_bounds = array<i64: 16, 32>}]} {
    %c0 = arith.constant 0 : index
    %c0_0 = arith.constant 0 : index
    %0 = vector.load %arg1[%c0, %c0_0] : memref<16x32xf32, #tpu.memory_space<vmem>>, vector<16x32xf32>
    %c0_1 = arith.constant 0 : index
    %c0_2 = arith.constant 0 : index
    %1 = vector.load %arg3[%c0_1, %c0_2] : memref<32x32xf32, #tpu.memory_space<vmem>>, vector<32x32xf32>
    %cst = arith.constant dense<0.000000e+00> : vector<16x32xf32>
    %2 = tpu.matmul %0, %1, %cst {dimension_numbers = #tpu.dot_dimension_numbers<[1], [0], [0], [1], [0, 0, 1, 1], [], []>} : vector<16x32xf32>, vector<32x32xf32>, vector<16x32xf32> -> vector<16x32xf32>
    %c0_3 = arith.constant 0 : index
    %c0_4 = arith.constant 0 : index
    %3 = vector.load %arg2[%c0_3, %c0_4] : memref<16x32xf32, #tpu.memory_space<vmem>>, vector<16x32xf32>
    %c0_5 = arith.constant 0 : index
    %c0_6 = arith.constant 0 : index
    %4 = vector.load %arg4[%c0_5, %c0_6] : memref<32x32xf32, #tpu.memory_space<vmem>>, vector<32x32xf32>
    %cst_7 = arith.constant dense<0.000000e+00> : vector<16x32xf32>
    %5 = tpu.matmul %3, %4, %cst_7 {dimension_numbers = #tpu.dot_dimension_numbers<[1], [0], [0], [1], [0, 0, 1, 1], [], []>} : vector<16x32xf32>, vector<32x32xf32>, vector<16x32xf32> -> vector<16x32xf32>
    %6 = arith.addf %2, %5 : vector<16x32xf32>
    %c0_8 = arith.constant 0 : index
    %c0_9 = arith.constant 0 : index
    %7 = vector.load %arg5[%c0_8, %c0_9] : memref<1x32xf32, #tpu.memory_space<vmem>>, vector<1x32xf32>
    %8 = vector.broadcast %7 : vector<1x32xf32> to vector<16x32xf32>
    %9 = arith.addf %6, %8 : vector<16x32xf32>
    %10 = math.tanh %9 : vector<16x32xf32>
    %c0_10 = arith.constant 0 : index
    %c0_11 = arith.constant 0 : index
    %11 = vector.load %arg6[%c0_10, %c0_11] : memref<16x32xf32, #tpu.memory_space<vmem>>, vector<16x32xf32>
    tpu.vector_store %arg6[%c0_10, %c0_11], %10 {strides = array<i32>} : memref<16x32xf32, #tpu.memory_space<vmem>>, vector<16x32xf32>,
    return
  }
  func.func @transform_0(%arg0: i32) -> (i32, i32) {
    %c0_i32 = arith.constant 0 : i32
    %c0_i32_0 = arith.constant 0 : i32
    return %arg0, %c0_i32 : i32, i32
  }
  func.func @transform_1(%arg0: i32) -> (i32, i32) {
    %c0_i32 = arith.constant 0 : i32
    %c0_i32_0 = arith.constant 0 : i32
    return %arg0, %c0_i32 : i32, i32
  }
  func.func @transform_2(%arg0: i32) -> (i32, i32) {
    %c0_i32 = arith.constant 0 : i32
    %c0_i32_0 = arith.constant 0 : i32
    %c0_i32_1 = arith.constant 0 : i32
    return %c0_i32, %c0_i32_0 : i32, i32
  }
  func.func @transform_3(%arg0: i32) -> (i32, i32) {
    %c0_i32 = arith.constant 0 : i32
    %c0_i32_0 = arith.constant 0 : i32
    %c0_i32_1 = arith.constant 0 : i32
    return %c0_i32, %c0_i32_0 : i32, i32
  }
  func.func @transform_4(%arg0: i32) -> (i32, i32) {
    %c0_i32 = arith.constant 0 : i32
    %c0_i32_0 = arith.constant 0 : i32
    %c0_i32_1 = arith.constant 0 : i32
    return %c0_i32, %c0_i32_0 : i32, i32
  }
  func.func @transform_5(%arg0: i32) -> (i32, i32) {
    %c0_i32 = arith.constant 0 : i32
    %c0_i32_0 = arith.constant 0 : i32
    return %arg0, %c0_i32 : i32, i32
  }
}

</mosaic_0001>

<llo_original>
// kernel: blstm_forward.7
$region0: #{blstm_forward.7}
  #allocation0 [shape = 'u32[]', space=smem, size = 0x4, offset = 0x4, fixed_abs, tag = 'smem constant byte address 0x4 - core index']
  #allocation1 [shape = 'u32[144,128]{1,0:T(1,128)}', space=vmem, size = 0x12000, scoped, tag = 'internal scratch']
  %s0 = inlined_call_operand.vmem [shape: f32[16,16], index: 0, kind: input, shape index: {}]
  %s1 = inlined_call_operand.vmem [shape: f32[16,128], index: 1, kind: input, shape index: {}]
  %s2 = inlined_call_operand.vmem [shape: f32[1,128], index: 2, kind: input, shape index: {}]
  %s3 = inlined_call_operand.vmem [shape: f32[16,128], index: 3, kind: output, shape index: {}]
  %s4 = sld [smem:[#allocation0]]
  $region22: #{blstm_forward.7} parent=0
    _
  %s6 = ssub.s32 1, %s4
  %s7 = scalar_select 0, %s6, %s4
  // Predicated region
  $region2: #{blstm_forward.7} parent=0 // pred_check
    _
  $region3: #{blstm_forward.7} parent=0 // pred_check_branch
    %9 = sbr.rel (0) target = $region5
  $region4: #{blstm_forward.7} parent=0 // pred_region
    _
  $region5: #{blstm_forward.7} parent=0 // pred_fallthru
    _
  // Predicated region
  $region6: #{blstm_forward.7} parent=0 // pred_check
    _
  $region7: #{blstm_forward.7} parent=0 // pred_check_branch
    %11 = sbr.rel (0) target = $region9
  $region8: #{blstm_forward.7} parent=0 // pred_region
    _
  $region9: #{blstm_forward.7} parent=0 // pred_fallthru
    _
  // Predicated region
  $region10: #{blstm_forward.7} parent=0 // pred_check
    _
  $region11: #{blstm_forward.7} parent=0 // pred_check_branch
    %13 = sbr.rel (0) target = $region13
  $region12: #{blstm_forward.7} parent=0 // pred_region
    _
  $region13: #{blstm_forward.7} parent=0 // pred_fallthru
    _
  %v14 = vld [vmem:[%s0] sm:$0xff]
  %v15 = vld [vmem:[%s0 + $0x8] sm:$0xff]
  %v16 = vld [vmem:[%s1] sm:$0xff]
  %v17 = vld [vmem:[%s1 + $0x8] sm:$0xff]
  %v18 = vld [vmem:[%s2] sm:$0x1]
  %v20 = vlaneseq
  %v21 = vshrl.u32 %v20, 7
  %v22 = vsub.s32 0, %v21
  %v23 = vrot.slane %v18, %v22
  %vm25 = vcmask 130048
  %v27 = vsel %vm25, %v14, 0
  %v30 = vsel %vm25, %v15, 0
  %32 = vmatprep.subr.mxu0 0.0
  %33 = vmatpush1.msra.mxu0 %v16
  %34 = vmatprep.subr.mxu0 0.0
  %35 = vmatpush1.msra.mxu0 %v17
  %36 = vmatprep.subr.mxu0 0.0
  %37 = vmatpush1.msra.mxu0 0.0
  %38 = vmatprep.subr.mxu0 0.0
  %39 = vmatpush1.msra.mxu0 0.0
  %40 = vmatprep.subr.mxu0 0.0
  %41 = vmatpush1.msra.mxu0 0.0
  %42 = vmatprep.subr.mxu0 0.0
  %43 = vmatpush1.msra.mxu0 0.0
  %44 = vmatprep.subr.mxu0 0.0
  %45 = vmatpush1.msra.mxu0 0.0
  %46 = vmatprep.subr.mxu0 0.0
  %47 = vmatpush1.msra.mxu0 0.0
  %48 = vmatprep.subr.mxu0 0.0
  %49 = vmatpush1.msra.mxu0 0.0
  %50 = vmatprep.subr.mxu0 0.0
  %51 = vmatpush1.msra.mxu0 0.0
  %52 = vmatprep.subr.mxu0 0.0
  %53 = vmatpush1.msra.mxu0 0.0
  %54 = vmatprep.subr.mxu0 0.0
  %55 = vmatpush1.msra.mxu0 0.0
  %56 = vmatprep.subr.mxu0 0.0
  %57 = vmatpush1.msra.mxu0 0.0
  %58 = vmatprep.subr.mxu0 0.0
  %59 = vmatpush1.msra.mxu0 0.0
  %60 = vmatprep.subr.mxu0 0.0
  %61 = vmatpush1.msra.mxu0 0.0
  %62 = vmatprep.subr.mxu0 0.0
  %63 = vmatpush1.msra.mxu0 0.0
  %64 = vmatprep.subr.mxu0 0.0
  %65 = vmatpush1.msra.mxu0 0.0
  %66 = vmatprep.subr.mxu0 0.0
  %67 = vmatpush1.msra.mxu0 0.0
  %68 = vmatprep.subr.mxu0 0.0
  %69 = vmatpush1.msra.mxu0 0.0
  %70 = vmatprep.subr.mxu0 0.0
  %71 = vmatpush1.msra.mxu0 0.0
  %72 = vmatprep.subr.mxu0 0.0
  %73 = vmatpush1.msra.mxu0 0.0
  %74 = vmatprep.subr.mxu0 0.0
  %75 = vmatpush1.msra.mxu0 0.0
  %76 = vmatprep.subr.mxu0 0.0
  %77 = vmatpush1.msra.mxu0 0.0
  %78 = vmatprep.subr.mxu0 0.0
  %79 = vmatpush1.msra.mxu0 0.0
  %80 = vmatprep.subr.mxu0 0.0
  %81 = vmatpush1.msra.mxu0 0.0
  %82 = vmatprep.subr.mxu0 0.0
  %83 = vmatpush1.msra.mxu0 0.0
  %84 = vmatprep.subr.mxu0 0.0
  %85 = vmatpush1.msra.mxu0 0.0
  %86 = vmatprep.subr.mxu0 0.0
  %87 = vmatpush1.msra.mxu0 0.0
  %88 = vmatprep.subr.mxu0 0.0
  %89 = vmatpush1.msra.mxu0 0.0
  %90 = vmatprep.subr.mxu0 0.0
  %91 = vmatpush1.msra.mxu0 0.0
  %92 = vmatprep.subr.mxu0 0.0
  %93 = vmatpush1.msra.mxu0 0.0
  %94 = vmatprep.subr.mxu0 0.0
  %95 = vmatpush1.msra.mxu0 0.0
  %96 = vmatprep.mubr.f32.mxu0 0.0
  %97 = vmatmul.mubr.f32.gmra.mrb[0].mxu0 %v27
  %v98 = vpop.f32.mrb[0].mxu0
  %v99 = vadd.f32 %v23, %v98
  %v100 = vpop.f32.mrb[0].mxu0
  %101 = vmatprep.mubr.f32.mxu0 0.0
  %102 = vmatmul.mubr.f32.gmra.mrb[0].mxu0 %v30
  %v103 = vpop.f32.mrb[0].mxu0
  %v104 = vadd.f32 %v23, %v103
  %v105 = vpop.f32.mrb[0].mxu0
  %106 = vdwg.mxu0
  %107 = vst [vmem:[%s3] sm:$0xff] %v99
  %108 = vst [vmem:[%s3 + $0x8] sm:$0xff] %v104
  // Predicated region
  $region14: #{blstm_forward.7} parent=0 // pred_check
    _
  $region15: #{blstm_forward.7} parent=0 // pred_check_branch
    %110 = sbr.rel (0) target = $region17
  $region16: #{blstm_forward.7} parent=0 // pred_region
    _
  $region17: #{blstm_forward.7} parent=0 // pred_fallthru
    _
  // Predicated region
  $region18: #{blstm_forward.7} parent=0 // pred_check
    _
  $region19: #{blstm_forward.7} parent=0 // pred_check_branch
    %112 = sbr.rel (0) target = $region21
  $region20: #{blstm_forward.7} parent=0 // pred_region
    _
  $region21: #{blstm_forward.7} parent=0 // pred_fallthru
    _

// kernel: blstm_forward.11
$region0: #{blstm_forward.11}
  #allocation0 [shape = 'u32[]', space=smem, size = 0x4, offset = 0x4, fixed_abs, tag = 'smem constant byte address 0x4 - core index']
  #allocation1 [shape = 'u32[144,128]{1,0:T(1,128)}', space=vmem, size = 0x12000, scoped, tag = 'internal scratch']
  %s0 = inlined_call_operand.vmem [shape: f32[16,32], index: 0, kind: input, shape index: {}]
  %s1 = inlined_call_operand.vmem [shape: f32[16,32], index: 1, kind: input, shape index: {}]
  %s2 = inlined_call_operand.vmem [shape: f32[32,128], index: 2, kind: input, shape index: {}]
  %s3 = inlined_call_operand.vmem [shape: f32[32,128], index: 3, kind: input, shape index: {}]
  %s4 = inlined_call_operand.vmem [shape: f32[1,128], index: 4, kind: input, shape index: {}]
  %s5 = inlined_call_operand.vmem [shape: f32[16,128], index: 5, kind: output, shape index: {}]
  %s6 = sld [smem:[#allocation0]]
  $region30: #{blstm_forward.11} parent=0
    _
  %s8 = ssub.s32 1, %s6
  %s9 = scalar_select 0, %s8, %s6
  // Predicated region
  $region2: #{blstm_forward.11} parent=0 // pred_check
    _
  $region3: #{blstm_forward.11} parent=0 // pred_check_branch
    %11 = sbr.rel (0) target = $region5
  $region4: #{blstm_forward.11} parent=0 // pred_region
    _
  $region5: #{blstm_forward.11} parent=0 // pred_fallthru
    _
  // Predicated region
  $region6: #{blstm_forward.11} parent=0 // pred_check
    _
  $region7: #{blstm_forward.11} parent=0 // pred_check_branch
    %13 = sbr.rel (0) target = $region9
  $region8: #{blstm_forward.11} parent=0 // pred_region
    _
  $region9: #{blstm_forward.11} parent=0 // pred_fallthru
    _
  // Predicated region
  $region10: #{blstm_forward.11} parent=0 // pred_check
    _
  $region11: #{blstm_forward.11} parent=0 // pred_check_branch
    %15 = sbr.rel (0) target = $region13
  $region12: #{blstm_forward.11} parent=0 // pred_region
    _
  $region13: #{blstm_forward.11} parent=0 // pred_fallthru
    _
  // Predicated region
  $region14: #{blstm_forward.11} parent=0 // pred_check
    _
  $region15: #{blstm_forward.11} parent=0 // pred_check_branch
    %17 = sbr.rel (0) target = $region17
  $region16: #{blstm_forward.11} parent=0 // pred_region
    _
  $region17: #{blstm_forward.11} parent=0 // pred_fallthru
    _
  // Predicated region
  $region18: #{blstm_forward.11} parent=0 // pred_check
    _
  $region19: #{blstm_forward.11} parent=0 // pred_check_branch
    %19 = sbr.rel (0) target = $region21
  $region20: #{blstm_forward.11} parent=0 // pred_region
    _
  $region21: #{blstm_forward.11} parent=0 // pred_fallthru
    _
  %v20 = vld [vmem:[%s0] sm:$0xff]
  %v21 = vld [vmem:[%s0 + $0x8] sm:$0xff]
  %v22 = vld [vmem:[%s2] sm:$0xff]
  %v23 = vld [vmem:[%s2 + $0x8] sm:$0xff]
  %v24 = vld [vmem:[%s2 + $0x10] sm:$0xff]
  %v25 = vld [vmem:[%s2 + $0x18] sm:$0xff]
  %v26 = vld [vmem:[%s1] sm:$0xff]
  %v27 = vld [vmem:[%s1 + $0x8] sm:$0xff]
  %v28 = vld [vmem:[%s3] sm:$0xff]
  %v29 = vld [vmem:[%s3 + $0x8] sm:$0xff]
  %v30 = vld [vmem:[%s3 + $0x10] sm:$0xff]
  %v31 = vld [vmem:[%s3 + $0x18] sm:$0xff]
  %vm32 = vcmask 261120
  %v34 = vsel %vm32, %v26, 0
  %v37 = vsel %vm32, %v27, 0
  %39 = vmatprep.subr.mxu0 0.0
  %40 = vmatpush1.msra.mxu0 %v28
  %41 = vmatprep.subr.mxu0 0.0
  %42 = vmatpush1.msra.mxu0 %v29
  %43 = vmatprep.subr.mxu0 0.0
  %44 = vmatpush1.msra.mxu0 %v30
  %45 = vmatprep.subr.mxu0 0.0
  %46 = vmatpush1.msra.mxu0 %v31
  %47 = vmatprep.subr.mxu0 0.0
  %48 = vmatpush1.msra.mxu0 0.0
  %49 = vmatprep.subr.mxu0 0.0
  %50 = vmatpush1.msra.mxu0 0.0
  %51 = vmatprep.subr.mxu0 0.0
  %52 = vmatpush1.msra.mxu0 0.0
  %53 = vmatprep.subr.mxu0 0.0
  %54 = vmatpush1.msra.mxu0 0.0
  %55 = vmatprep.subr.mxu0 0.0
  %56 = vmatpush1.msra.mxu0 0.0
  %57 = vmatprep.subr.mxu0 0.0
  %58 = vmatpush1.msra.mxu0 0.0
  %59 = vmatprep.subr.mxu0 0.0
  %60 = vmatpush1.msra.mxu0 0.0
  %61 = vmatprep.subr.mxu0 0.0
  %62 = vmatpush1.msra.mxu0 0.0
  %63 = vmatprep.subr.mxu0 0.0
  %64 = vmatpush1.msra.mxu0 0.0
  %65 = vmatprep.subr.mxu0 0.0
  %66 = vmatpush1.msra.mxu0 0.0
  %67 = vmatprep.subr.mxu0 0.0
  %68 = vmatpush1.msra.mxu0 0.0
  %69 = vmatprep.subr.mxu0 0.0
  %70 = vmatpush1.msra.mxu0 0.0
  %71 = vmatprep.subr.mxu0 0.0
  %72 = vmatpush1.msra.mxu0 0.0
  %73 = vmatprep.subr.mxu0 0.0
  %74 = vmatpush1.msra.mxu0 0.0
  %75 = vmatprep.subr.mxu0 0.0
  %76 = vmatpush1.msra.mxu0 0.0
  %77 = vmatprep.subr.mxu0 0.0
  %78 = vmatpush1.msra.mxu0 0.0
  %79 = vmatprep.subr.mxu0 0.0
  %80 = vmatpush1.msra.mxu0 0.0
  %81 = vmatprep.subr.mxu0 0.0
  %82 = vmatpush1.msra.mxu0 0.0
  %83 = vmatprep.subr.mxu0 0.0
  %84 = vmatpush1.msra.mxu0 0.0
  %85 = vmatprep.subr.mxu0 0.0
  %86 = vmatpush1.msra.mxu0 0.0
  %87 = vmatprep.subr.mxu0 0.0
  %88 = vmatpush1.msra.mxu0 0.0
  %89 = vmatprep.subr.mxu0 0.0
  %90 = vmatpush1.msra.mxu0 0.0
  %91 = vmatprep.subr.mxu0 0.0
  %92 = vmatpush1.msra.mxu0 0.0
  %93 = vmatprep.subr.mxu0 0.0
  %94 = vmatpush1.msra.mxu0 0.0
  %95 = vmatprep.subr.mxu0 0.0
  %96 = vmatpush1.msra.mxu0 0.0
  %97 = vmatprep.subr.mxu0 0.0
  %98 = vmatpush1.msra.mxu0 0.0
  %99 = vmatprep.subr.mxu0 0.0
  %100 = vmatpush1.msra.mxu0 0.0
  %101 = vmatprep.subr.mxu0 0.0
  %102 = vmatpush1.msra.mxu0 0.0
  %103 = vmatprep.mubr.f32.mxu0 0.0
  %104 = vmatmul.mubr.f32.gmra.mrb[0].mxu0 %v34
  %v105 = vpop.f32.mrb[0].mxu0
  %v106 = vadd.f32 0.0, %v105
  %v107 = vpop.f32.mrb[0].mxu0
  %108 = vmatprep.mubr.f32.mxu0 0.0
  %109 = vmatmul.mubr.f32.gmra.mrb[0].mxu0 %v37
  %v110 = vpop.f32.mrb[0].mxu0
  %v111 = vadd.f32 0.0, %v110
  %v112 = vpop.f32.mrb[0].mxu0
  %113 = vdwg.mxu0
  %v115 = vsel %vm32, %v20, 0
  %v118 = vsel %vm32, %v21, 0
  %120 = vmatprep.subr.mxu0 0.0
  %121 = vmatpush1.msra.mxu0 %v22
  %122 = vmatprep.subr.mxu0 0.0
  %123 = vmatpush1.msra.mxu0 %v23
  %124 = vmatprep.subr.mxu0 0.0
  %125 = vmatpush1.msra.mxu0 %v24
  %126 = vmatprep.subr.mxu0 0.0
  %127 = vmatpush1.msra.mxu0 %v25
  %128 = vmatprep.subr.mxu0 0.0
  %129 = vmatpush1.msra.mxu0 0.0
  %130 = vmatprep.subr.mxu0 0.0
  %131 = vmatpush1.msra.mxu0 0.0
  %132 = vmatprep.subr.mxu0 0.0
  %133 = vmatpush1.msra.mxu0 0.0
  %134 = vmatprep.subr.mxu0 0.0
  %135 = vmatpush1.msra.mxu0 0.0
  %136 = vmatprep.subr.mxu0 0.0
  %137 = vmatpush1.msra.mxu0 0.0
  %138 = vmatprep.subr.mxu0 0.0
  %139 = vmatpush1.msra.mxu0 0.0
  %140 = vmatprep.subr.mxu0 0.0
  %141 = vmatpush1.msra.mxu0 0.0
  %142 = vmatprep.subr.mxu0 0.0
  %143 = vmatpush1.msra.mxu0 0.0
  %144 = vmatprep.subr.mxu0 0.0
  %145 = vmatpush1.msra.mxu0 0.0
  %146 = vmatprep.subr.mxu0 0.0
  %147 = vmatpush1.msra.mxu0 0.0
  %148 = vmatprep.subr.mxu0 0.0
  %149 = vmatpush1.msra.mxu0 0.0
  %150 = vmatprep.subr.mxu0 0.0
  %151 = vmatpush1.msra.mxu0 0.0
  %152 = vmatprep.subr.mxu0 0.0
  %153 = vmatpush1.msra.mxu0 0.0
  %154 = vmatprep.subr.mxu0 0.0
  %155 = vmatpush1.msra.mxu0 0.0
  %156 = vmatprep.subr.mxu0 0.0
  %157 = vmatpush1.msra.mxu0 0.0
  %158 = vmatprep.subr.mxu0 0.0
  %159 = vmatpush1.msra.mxu0 0.0
  %160 = vmatprep.subr.mxu0 0.0
  %161 = vmatpush1.msra.mxu0 0.0
  %162 = vmatprep.subr.mxu0 0.0
  %163 = vmatpush1.msra.mxu0 0.0
  %164 = vmatprep.subr.mxu0 0.0
  %165 = vmatpush1.msra.mxu0 0.0
  %166 = vmatprep.subr.mxu0 0.0
  %167 = vmatpush1.msra.mxu0 0.0
  %168 = vmatprep.subr.mxu0 0.0
  %169 = vmatpush1.msra.mxu0 0.0
  %170 = vmatprep.subr.mxu0 0.0
  %171 = vmatpush1.msra.mxu0 0.0
  %172 = vmatprep.subr.mxu0 0.0
  %173 = vmatpush1.msra.mxu0 0.0
  %174 = vmatprep.subr.mxu0 0.0
  %175 = vmatpush1.msra.mxu0 0.0
  %176 = vmatprep.subr.mxu0 0.0
  %177 = vmatpush1.msra.mxu0 0.0
  %178 = vmatprep.subr.mxu0 0.0
  %179 = vmatpush1.msra.mxu0 0.0
  %180 = vmatprep.subr.mxu0 0.0
  %181 = vmatpush1.msra.mxu0 0.0
  %182 = vmatprep.subr.mxu0 0.0
  %183 = vmatpush1.msra.mxu0 0.0
  %184 = vmatprep.mubr.f32.mxu0 0.0
  %185 = vmatmul.mubr.f32.gmra.mrb[0].mxu0 %v115
  %v186 = vpop.f32.mrb[0].mxu0
  %v187 = vadd.f32 %v106, %v186
  %v188 = vpop.f32.mrb[0].mxu0
  %189 = vmatprep.mubr.f32.mxu0 0.0
  %190 = vmatmul.mubr.f32.gmra.mrb[0].mxu0 %v118
  %v191 = vpop.f32.mrb[0].mxu0
  %v192 = vadd.f32 %v111, %v191
  %v193 = vpop.f32.mrb[0].mxu0
  %194 = vdwg.mxu0
  %v195 = vld [vmem:[%s4] sm:$0x1]
  %v197 = vlaneseq
  %v198 = vshrl.u32 %v197, 7
  %v199 = vsub.s32 0, %v198
  %v200 = vrot.slane %v195, %v199
  %v202 = vadd.f32 %v187, %v200
  %v203 = vadd.f32 %v192, %v200
  %204 = vst [vmem:[%s5] sm:$0xff] %v202
  %205 = vst [vmem:[%s5 + $0x8] sm:$0xff] %v203
  // Predicated region
  $region22: #{blstm_forward.11} parent=0 // pred_check
    _
  $region23: #{blstm_forward.11} parent=0 // pred_check_branch
    %207 = sbr.rel (0) target = $region25
  $region24: #{blstm_forward.11} parent=0 // pred_region
    _
  $region25: #{blstm_forward.11} parent=0 // pred_fallthru
    _
  // Predicated region
  $region26: #{blstm_forward.11} parent=0 // pred_check
    _
  $region27: #{blstm_forward.11} parent=0 // pred_check_branch
    %209 = sbr.rel (0) target = $region29
  $region28: #{blstm_forward.11} parent=0 // pred_region
    _
  $region29: #{blstm_forward.11} parent=0 // pred_fallthru
    _

// kernel: blstm_forward.13
$region0: #{blstm_forward.13}
  #allocation0 [shape = 'u32[]', space=smem, size = 0x4, offset = 0x4, fixed_abs, tag = 'smem constant byte address 0x4 - core index']
  #allocation1 [shape = 'u32[144,128]{1,0:T(1,128)}', space=vmem, size = 0x12000, scoped, tag = 'internal scratch']
  %s0 = inlined_call_operand.vmem [shape: f32[16,32], index: 0, kind: input, shape index: {}]
  %s1 = inlined_call_operand.vmem [shape: f32[16,32], index: 1, kind: input, shape index: {}]
  %s2 = inlined_call_operand.vmem [shape: f32[32,32], index: 2, kind: input, shape index: {}]
  %s3 = inlined_call_operand.vmem [shape: f32[32,32], index: 3, kind: input, shape index: {}]
  %s4 = inlined_call_operand.vmem [shape: f32[1,32], index: 4, kind: input, shape index: {}]
  %s5 = inlined_call_operand.vmem [shape: f32[16,32], index: 5, kind: output, shape index: {}]
  %s6 = sld [smem:[#allocation0]]
  $region30: #{blstm_forward.13} parent=0
    _
  %s8 = ssub.s32 1, %s6
  %s9 = scalar_select 0, %s8, %s6
  // Predicated region
  $region2: #{blstm_forward.13} parent=0 // pred_check
    _
  $region3: #{blstm_forward.13} parent=0 // pred_check_branch
    %11 = sbr.rel (0) target = $region5
  $region4: #{blstm_forward.13} parent=0 // pred_region
    _
  $region5: #{blstm_forward.13} parent=0 // pred_fallthru
    _
  // Predicated region
  $region6: #{blstm_forward.13} parent=0 // pred_check
    _
  $region7: #{blstm_forward.13} parent=0 // pred_check_branch
    %13 = sbr.rel (0) target = $region9
  $region8: #{blstm_forward.13} parent=0 // pred_region
    _
  $region9: #{blstm_forward.13} parent=0 // pred_fallthru
    _
  // Predicated region
  $region10: #{blstm_forward.13} parent=0 // pred_check
    _
  $region11: #{blstm_forward.13} parent=0 // pred_check_branch
    %15 = sbr.rel (0) target = $region13
  $region12: #{blstm_forward.13} parent=0 // pred_region
    _
  $region13: #{blstm_forward.13} parent=0 // pred_fallthru
    _
  // Predicated region
  $region14: #{blstm_forward.13} parent=0 // pred_check
    _
  $region15: #{blstm_forward.13} parent=0 // pred_check_branch
    %17 = sbr.rel (0) target = $region17
  $region16: #{blstm_forward.13} parent=0 // pred_region
    _
  $region17: #{blstm_forward.13} parent=0 // pred_fallthru
    _
  // Predicated region
  $region18: #{blstm_forward.13} parent=0 // pred_check
    _
  $region19: #{blstm_forward.13} parent=0 // pred_check_branch
    %19 = sbr.rel (0) target = $region21
  $region20: #{blstm_forward.13} parent=0 // pred_region
    _
  $region21: #{blstm_forward.13} parent=0 // pred_fallthru
    _
  %v20 = vld [vmem:[%s0] sm:$0xff]
  %v21 = vld [vmem:[%s0 + $0x8] sm:$0xff]
  %v22 = vld [vmem:[%s2] sm:$0xff]
  %v23 = vld [vmem:[%s2 + $0x8] sm:$0xff]
  %v24 = vld [vmem:[%s2 + $0x10] sm:$0xff]
  %v25 = vld [vmem:[%s2 + $0x18] sm:$0xff]
  %v26 = vld [vmem:[%s1] sm:$0xff]
  %v27 = vld [vmem:[%s1 + $0x8] sm:$0xff]
  %v28 = vld [vmem:[%s3] sm:$0xff]
  %v29 = vld [vmem:[%s3 + $0x8] sm:$0xff]
  %v30 = vld [vmem:[%s3 + $0x10] sm:$0xff]
  %v31 = vld [vmem:[%s3 + $0x18] sm:$0xff]
  %vm32 = vcmask 261120
  %v34 = vsel %vm32, %v26, 0
  %v37 = vsel %vm32, %v27, 0
  %39 = vmatprep.subr.mxu0 0.0
  %40 = vmatpush1.msra.mxu0 %v28
  %41 = vmatprep.subr.mxu0 0.0
  %42 = vmatpush1.msra.mxu0 %v29
  %43 = vmatprep.subr.mxu0 0.0
  %44 = vmatpush1.msra.mxu0 %v30
  %45 = vmatprep.subr.mxu0 0.0
  %46 = vmatpush1.msra.mxu0 %v31
  %47 = vmatprep.subr.mxu0 0.0
  %48 = vmatpush1.msra.mxu0 0.0
  %49 = vmatprep.subr.mxu0 0.0
  %50 = vmatpush1.msra.mxu0 0.0
  %51 = vmatprep.subr.mxu0 0.0
  %52 = vmatpush1.msra.mxu0 0.0
  %53 = vmatprep.subr.mxu0 0.0
  %54 = vmatpush1.msra.mxu0 0.0
  %55 = vmatprep.subr.mxu0 0.0
  %56 = vmatpush1.msra.mxu0 0.0
  %57 = vmatprep.subr.mxu0 0.0
  %58 = vmatpush1.msra.mxu0 0.0
  %59 = vmatprep.subr.mxu0 0.0
  %60 = vmatpush1.msra.mxu0 0.0
  %61 = vmatprep.subr.mxu0 0.0
  %62 = vmatpush1.msra.mxu0 0.0
  %63 = vmatprep.subr.mxu0 0.0
  %64 = vmatpush1.msra.mxu0 0.0
  %65 = vmatprep.subr.mxu0 0.0
  %66 = vmatpush1.msra.mxu0 0.0
  %67 = vmatprep.subr.mxu0 0.0
  %68 = vmatpush1.msra.mxu0 0.0
  %69 = vmatprep.subr.mxu0 0.0
  %70 = vmatpush1.msra.mxu0 0.0
  %71 = vmatprep.subr.mxu0 0.0
  %72 = vmatpush1.msra.mxu0 0.0
  %73 = vmatprep.subr.mxu0 0.0
  %74 = vmatpush1.msra.mxu0 0.0
  %75 = vmatprep.subr.mxu0 0.0
  %76 = vmatpush1.msra.mxu0 0.0
  %77 = vmatprep.subr.mxu0 0.0
  %78 = vmatpush1.msra.mxu0 0.0
  %79 = vmatprep.subr.mxu0 0.0
  %80 = vmatpush1.msra.mxu0 0.0
  %81 = vmatprep.subr.mxu0 0.0
  %82 = vmatpush1.msra.mxu0 0.0
  %83 = vmatprep.subr.mxu0 0.0
  %84 = vmatpush1.msra.mxu0 0.0
  %85 = vmatprep.subr.mxu0 0.0
  %86 = vmatpush1.msra.mxu0 0.0
  %87 = vmatprep.subr.mxu0 0.0
  %88 = vmatpush1.msra.mxu0 0.0
  %89 = vmatprep.subr.mxu0 0.0
  %90 = vmatpush1.msra.mxu0 0.0
  %91 = vmatprep.subr.mxu0 0.0
  %92 = vmatpush1.msra.mxu0 0.0
  %93 = vmatprep.subr.mxu0 0.0
  %94 = vmatpush1.msra.mxu0 0.0
  %95 = vmatprep.subr.mxu0 0.0
  %96 = vmatpush1.msra.mxu0 0.0
  %97 = vmatprep.subr.mxu0 0.0
  %98 = vmatpush1.msra.mxu0 0.0
  %99 = vmatprep.subr.mxu0 0.0
  %100 = vmatpush1.msra.mxu0 0.0
  %101 = vmatprep.subr.mxu0 0.0
  %102 = vmatpush1.msra.mxu0 0.0
  %103 = vmatprep.mubr.f32.mxu0 0.0
  %104 = vmatmul.mubr.f32.gmra.mrb[0].mxu0 %v34
  %v105 = vpop.f32.mrb[0].mxu0
  %v106 = vadd.f32 0.0, %v105
  %v107 = vpop.f32.mrb[0].mxu0
  %108 = vmatprep.mubr.f32.mxu0 0.0
  %109 = vmatmul.mubr.f32.gmra.mrb[0].mxu0 %v37
  %v110 = vpop.f32.mrb[0].mxu0
  %v111 = vadd.f32 0.0, %v110
  %v112 = vpop.f32.mrb[0].mxu0
  %113 = vdwg.mxu0
  %v115 = vsel %vm32, %v20, 0
  %v118 = vsel %vm32, %v21, 0
  %120 = vmatprep.subr.mxu0 0.0
  %121 = vmatpush1.msra.mxu0 %v22
  %122 = vmatprep.subr.mxu0 0.0
  %123 = vmatpush1.msra.mxu0 %v23
  %124 = vmatprep.subr.mxu0 0.0
  %125 = vmatpush1.msra.mxu0 %v24
  %126 = vmatprep.subr.mxu0 0.0
  %127 = vmatpush1.msra.mxu0 %v25
  %128 = vmatprep.subr.mxu0 0.0
  %129 = vmatpush1.msra.mxu0 0.0
  %130 = vmatprep.subr.mxu0 0.0
  %131 = vmatpush1.msra.mxu0 0.0
  %132 = vmatprep.subr.mxu0 0.0
  %133 = vmatpush1.msra.mxu0 0.0
  %134 = vmatprep.subr.mxu0 0.0
  %135 = vmatpush1.msra.mxu0 0.0
  %136 = vmatprep.subr.mxu0 0.0
  %137 = vmatpush1.msra.mxu0 0.0
  %138 = vmatprep.subr.mxu0 0.0
  %139 = vmatpush1.msra.mxu0 0.0
  %140 = vmatprep.subr.mxu0 0.0
  %141 = vmatpush1.msra.mxu0 0.0
  %142 = vmatprep.subr.mxu0 0.0
  %143 = vmatpush1.msra.mxu0 0.0
  %144 = vmatprep.subr.mxu0 0.0
  %145 = vmatpush1.msra.mxu0 0.0
  %146 = vmatprep.subr.mxu0 0.0
  %147 = vmatpush1.msra.mxu0 0.0
  %148 = vmatprep.subr.mxu0 0.0
  %149 = vmatpush1.msra.mxu0 0.0
  %150 = vmatprep.subr.mxu0 0.0
  %151 = vmatpush1.msra.mxu0 0.0
  %152 = vmatprep.subr.mxu0 0.0
  %153 = vmatpush1.msra.mxu0 0.0
  %154 = vmatprep.subr.mxu0 0.0
  %155 = vmatpush1.msra.mxu0 0.0
  %156 = vmatprep.subr.mxu0 0.0
  %157 = vmatpush1.msra.mxu0 0.0
  %158 = vmatprep.subr.mxu0 0.0
  %159 = vmatpush1.msra.mxu0 0.0
  %160 = vmatprep.subr.mxu0 0.0
  %161 = vmatpush1.msra.mxu0 0.0
  %162 = vmatprep.subr.mxu0 0.0
  %163 = vmatpush1.msra.mxu0 0.0
  %164 = vmatprep.subr.mxu0 0.0
  %165 = vmatpush1.msra.mxu0 0.0
  %166 = vmatprep.subr.mxu0 0.0
  %167 = vmatpush1.msra.mxu0 0.0
  %168 = vmatprep.subr.mxu0 0.0
  %169 = vmatpush1.msra.mxu0 0.0
  %170 = vmatprep.subr.mxu0 0.0
  %171 = vmatpush1.msra.mxu0 0.0
  %172 = vmatprep.subr.mxu0 0.0
  %173 = vmatpush1.msra.mxu0 0.0
  %174 = vmatprep.subr.mxu0 0.0
  %175 = vmatpush1.msra.mxu0 0.0
  %176 = vmatprep.subr.mxu0 0.0
  %177 = vmatpush1.msra.mxu0 0.0
  %178 = vmatprep.subr.mxu0 0.0
  %179 = vmatpush1.msra.mxu0 0.0
  %180 = vmatprep.subr.mxu0 0.0
  %181 = vmatpush1.msra.mxu0 0.0
  %182 = vmatprep.subr.mxu0 0.0
  %183 = vmatpush1.msra.mxu0 0.0
  %184 = vmatprep.mubr.f32.mxu0 0.0
  %185 = vmatmul.mubr.f32.gmra.mrb[0].mxu0 %v115
  %v186 = vpop.f32.mrb[0].mxu0
  %v187 = vadd.f32 %v106, %v186
  %v188 = vpop.f32.mrb[0].mxu0
  %189 = vmatprep.mubr.f32.mxu0 0.0
  %190 = vmatmul.mubr.f32.gmra.mrb[0].mxu0 %v118
  %v191 = vpop.f32.mrb[0].mxu0
  %v192 = vadd.f32 %v111, %v191
  %v193 = vpop.f32.mrb[0].mxu0
  %194 = vdwg.mxu0
  %v195 = vld [vmem:[%s4] sm:$0x1]
  %v197 = vlaneseq
  %v198 = vshrl.u32 %v197, 7
  %v199 = vsub.s32 0, %v198
  %v200 = vrot.slane %v195, %v199
  %v202 = vadd.f32 %v187, %v200
  %v203 = vadd.f32 %v192, %v200
  %v204 = vtanh.pop %v202
  %v205 = vtanh.pop %v203
  %206 = vst.msk [vmem:[%s5] sm:$0xff] %vm32, %v204
  %207 = vst.msk [vmem:[%s5 + $0x8] sm:$0xff] %vm32, %v205
  // Predicated region
  $region22: #{blstm_forward.13} parent=0 // pred_check
    _
  $region23: #{blstm_forward.13} parent=0 // pred_check_branch
    %209 = sbr.rel (0) target = $region25
  $region24: #{blstm_forward.13} parent=0 // pred_region
    _
  $region25: #{blstm_forward.13} parent=0 // pred_fallthru
    _
  // Predicated region
  $region26: #{blstm_forward.13} parent=0 // pred_check
    _
  $region27: #{blstm_forward.13} parent=0 // pred_check_branch
    %211 = sbr.rel (0) target = $region29
  $region28: #{blstm_forward.13} parent=0 // pred_region
    _
  $region29: #{blstm_forward.13} parent=0 // pred_fallthru
    _

// kernel: blstm_forward.9
$region0: #{blstm_forward.9}
  #allocation0 [shape = 'u32[]', space=smem, size = 0x4, offset = 0x4, fixed_abs, tag = 'smem constant byte address 0x4 - core index']
  #allocation1 [shape = 'u32[144,128]{1,0:T(1,128)}', space=vmem, size = 0x12000, scoped, tag = 'internal scratch']
  #allocation2 [shape = 'f32[2,32]{1,0:T(2,128)}', space=vmem, size = 0x400, scoped, tag = 'scratch operand']
  #allocation3 [shape = 'f32[2,32]{1,0:T(2,128)}', space=vmem, size = 0x400, scoped, tag = 'scratch operand']
  #allocation4 [shape = 'f32[2,32]{1,0:T(2,128)}', space=vmem, size = 0x400, scoped, tag = 'scratch operand']
  #allocation5 [shape = 'f32[2,32]{1,0:T(2,128)}', space=vmem, size = 0x400, scoped, tag = 'scratch operand']
  %s0 = inlined_call_operand.vmem [shape: f32[8,2,128], index: 0, kind: input, shape index: {}]
  %s1 = inlined_call_operand.vmem [shape: f32[8,2,128], index: 1, kind: input, shape index: {}]
  %s2 = inlined_call_operand.vmem [shape: f32[32,128], index: 2, kind: input, shape index: {}]
  %s3 = inlined_call_operand.vmem [shape: f32[32,128], index: 3, kind: input, shape index: {}]
  %s4 = inlined_call_operand.vmem [shape: s32[2,1], index: 4, kind: input, shape index: {}]
  %s5 = inlined_call_operand.vmem [shape: f32[8,2,32], index: 5, kind: output, shape index: {0}]
  %s6 = inlined_call_operand.vmem [shape: f32[8,2,32], index: 6, kind: output, shape index: {1}]
  %7 = xla_tuple %s5, %s6
  %s8 = sld [smem:[#allocation0]]
  $region42: #{blstm_forward.9} parent=0
    _
  %s10 = ssub.s32 1, %s8
  %s11 = scalar_select 0, %s10, %s8
  // Predicated region
  $region2: #{blstm_forward.9} parent=0 // pred_check
    _
  $region3: #{blstm_forward.9} parent=0 // pred_check_branch
    %13 = sbr.rel (0) target = $region5
  $region4: #{blstm_forward.9} parent=0 // pred_region
    _
  $region5: #{blstm_forward.9} parent=0 // pred_fallthru
    _
  // Predicated region
  $region6: #{blstm_forward.9} parent=0 // pred_check
    _
  $region7: #{blstm_forward.9} parent=0 // pred_check_branch
    %15 = sbr.rel (0) target = $region9
  $region8: #{blstm_forward.9} parent=0 // pred_region
    %s16 = ssub.s32 0, 0
    %s17 = smul.u32 8, %s16
    %p18 = scmp.lt.s32.totalorder %s17, 7
    %s19 = scalar_select %p18, %s17, 7
    %s20 = smul.addr %s19, 2
    %s21 = scalar_lea.vmem %s1, %s20
    %s22 = ssub.s32 0, 0
    %s23 = smul.u32 8, %s22
  $region9: #{blstm_forward.9} parent=0 // pred_fallthru
    _
  // Predicated region
  $region10: #{blstm_forward.9} parent=0 // pred_check
    _
  $region11: #{blstm_forward.9} parent=0 // pred_check_branch
    %25 = sbr.rel (0) target = $region13
  $region12: #{blstm_forward.9} parent=0 // pred_region
    _
  $region13: #{blstm_forward.9} parent=0 // pred_fallthru
    _
  // Predicated region
  $region14: #{blstm_forward.9} parent=0 // pred_check
    _
  $region15: #{blstm_forward.9} parent=0 // pred_check_branch
    %27 = sbr.rel (0) target = $region17
  $region16: #{blstm_forward.9} parent=0 // pred_region
    _
  $region17: #{blstm_forward.9} parent=0 // pred_fallthru
    _
  // Predicated region
  $region18: #{blstm_forward.9} parent=0 // pred_check
    _
  $region19: #{blstm_forward.9} parent=0 // pred_check_branch
    %29 = sbr.rel (0) target = $region21
  $region20: #{blstm_forward.9} parent=0 // pred_region
    _
  $region21: #{blstm_forward.9} parent=0 // pred_fallthru
    _
  %s30 = ssub.s32 0, 0
  %s31 = smul.u32 8, %s30
  %p32 = scmp.lt.s32.totalorder %s31, 7
  %s33 = scalar_select %p32, %s31, 7
  %s34 = smul.addr %s33, 2
  %s35 = scalar_lea.vmem %s1, %s34
  %s36 = ssub.s32 0, 0
  %s37 = smul.u32 8, %s36
  %p38 = scmp.lt.s32.totalorder %s37, 7
  %s39 = scalar_select %p38, %s37, 7
  %s40 = smul.addr %s39, 2
  %s41 = scalar_lea.vmem %s6, %s40
  %s42 = ssub.s32 0, 0
  %s43 = smul.u32 8, %s42
  %p44 = scmp.lt.s32.totalorder %s43, 7
  %s45 = scalar_select %p44, %s43, 7
  %s46 = smul.addr %s45, 2
  %s47 = scalar_lea.vmem %s1, %s46
  %s48 = ssub.s32 0, 0
  %s49 = smul.u32 8, %s48
  %s50 = ssub.s32 0, 0
  %s51 = smul.u32 8, %s50
  %p52 = scmp.lt.s32.totalorder %s51, 7
  %s53 = scalar_select %p52, %s51, 7
  %s54 = smul.addr %s53, 2
  %s55 = scalar_lea.vmem %s6, %s54
  %s56 = ssub.s32 0, 0
  %s57 = smul.u32 8, %s56
  %p58 = scmp.eq.s32.totalorder 0, 0
  // Predicated region
  $region22: #{blstm_forward.9} parent=0 // pred_check
    %p59 = pneg %p58
  $region23: #{blstm_forward.9} parent=0 // pred_check_branch
    %61 = sbr.rel (%p59) target = $region25
  $region24: #{blstm_forward.9} parent=0 // pred_region
    %vm62 = vcmask 254976
    %63 = vst.msk [vmem:[#allocation2] sm:$0x3] %vm62, 0.0
    %64 = vst.msk [vmem:[#allocation3] sm:$0x3] %vm62, 0.0
    %65 = vst.msk [vmem:[#allocation4] sm:$0x3] %vm62, 0.0
    %66 = vst.msk [vmem:[#allocation5] sm:$0x3] %vm62, 0.0
  $region25: #{blstm_forward.9} parent=0 // pred_fallthru
    _
  %v67 = vld [vmem:[%s4] sm:$0x3]
  %s68 = smul.u32 0, 8
  %v69 = vld [vmem:[#allocation2] sm:$0x3]
  %v70 = vld [vmem:[#allocation3] sm:$0x3]
  %v71 = vld [vmem:[%s0] sm:$0x3]
  %v72 = vld [vmem:[%s2] sm:$0xff]
  %v73 = vld [vmem:[%s2 + $0x8] sm:$0xff]
  %v74 = vld [vmem:[%s2 + $0x10] sm:$0xff]
  %v75 = vld [vmem:[%s2 + $0x18] sm:$0xff]
  %vm76 = vcmask 261120
  %v78 = vsel %vm76, %v69, 0
  %80 = vmatprep.subr.mxu0 0.0
  %81 = vmatpush1.msra.mxu0 %v72
  %82 = vmatprep.subr.mxu0 0.0
  %83 = vmatpush1.msra.mxu0 %v73
  %84 = vmatprep.subr.mxu0 0.0
  %85 = vmatpush1.msra.mxu0 %v74
  %86 = vmatprep.subr.mxu0 0.0
  %87 = vmatpush1.msra.mxu0 %v75
  %88 = vmatprep.subr.mxu0 0.0
  %89 = vmatpush1.msra.mxu0 0.0
  %90 = vmatprep.subr.mxu0 0.0
  %91 = vmatpush1.msra.mxu0 0.0
  %92 = vmatprep.subr.mxu0 0.0
  %93 = vmatpush1.msra.mxu0 0.0
  %94 = vmatprep.subr.mxu0 0.0
  %95 = vmatpush1.msra.mxu0 0.0
  %96 = vmatprep.subr.mxu0 0.0
  %97 = vmatpush1.msra.mxu0 0.0
  %98 = vmatprep.subr.mxu0 0.0
  %99 = vmatpush1.msra.mxu0 0.0
  %100 = vmatprep.subr.mxu0 0.0
  %101 = vmatpush1.msra.mxu0 0.0
  %102 = vmatprep.subr.mxu0 0.0
  %103 = vmatpush1.msra.mxu0 0.0
  %104 = vmatprep.subr.mxu0 0.0
  %105 = vmatpush1.msra.mxu0 0.0
  %106 = vmatprep.subr.mxu0 0.0
  %107 = vmatpush1.msra.mxu0 0.0
  %108 = vmatprep.subr.mxu0 0.0
  %109 = vmatpush1.msra.mxu0 0.0
  %110 = vmatprep.subr.mxu0 0.0
  %111 = vmatpush1.msra.mxu0 0.0
  %112 = vmatprep.subr.mxu0 0.0
  %113 = vmatpush1.msra.mxu0 0.0
  %114 = vmatprep.subr.mxu0 0.0
  %115 = vmatpush1.msra.mxu0 0.0
  %116 = vmatprep.subr.mxu0 0.0
  %117 = vmatpush1.msra.mxu0 0.0
  %118 = vmatprep.subr.mxu0 0.0
  %119 = vmatpush1.msra.mxu0 0.0
  %120 = vmatprep.subr.mxu0 0.0
  %121 = vmatpush1.msra.mxu0 0.0
  %122 = vmatprep.subr.mxu0 0.0
  %123 = vmatpush1.msra.mxu0 0.0
  %124 = vmatprep.subr.mxu0 0.0
  %125 = vmatpush1.msra.mxu0 0.0
  %126 = vmatprep.subr.mxu0 0.0
  %127 = vmatpush1.msra.mxu0 0.0
  %128 = vmatprep.subr.mxu0 0.0
  %129 = vmatpush1.msra.mxu0 0.0
  %130 = vmatprep.subr.mxu0 0.0
  %131 = vmatpush1.msra.mxu0 0.0
  %132 = vmatprep.subr.mxu0 0.0
  %133 = vmatpush1.msra.mxu0 0.0
  %134 = vmatprep.subr.mxu0 0.0
  %135 = vmatpush1.msra.mxu0 0.0
  %136 = vmatprep.subr.mxu0 0.0
  %137 = vmatpush1.msra.mxu0 0.0
  %138 = vmatprep.subr.mxu0 0.0
  %139 = vmatpush1.msra.mxu0 0.0
  %140 = vmatprep.subr.mxu0 0.0
  %141 = vmatpush1.msra.mxu0 0.0
  %142 = vmatprep.subr.mxu0 0.0
  %143 = vmatpush1.msra.mxu0 0.0
  %144 = vmatprep.mubr.f32.mxu0 0.0
  %145 = vmatmul.mubr.f32.gmra.mrb[0].mxu0 %v78
  %v146 = vpop.f32.mrb[0].mxu0
  %v147 = vadd.f32 0.0, %v146
  %v148 = vpop.f32.mrb[0].mxu0
  %149 = vdwg.mxu0
  %v150 = vadd.f32 %v71, %v147
  %v151 = vxor.u32 %v150, 2147483648
  %v152 = vmul.f32 %v151, 1.442695
  %v153 = vpow.pop %v152
  %v154 = vadd.f32 %v153, 1.0
  %v155 = vrcp.pop %v154
  %v156 = vmul.f32 1.0, %v155
  %v157 = vtanh.pop %v150
  %159 = vrot.lane.b32.xlu0 %v70, 32
  %v160 = vpop.permute.xlu0 %159
  %v162 = vmul.f32 %v156, %v160
  %164 = vrot.lane.b32.xlu0 %v157, 64
  %v165 = vpop.permute.xlu0 %164
  %v167 = vmul.f32 %v156, %v165
  %169 = vrot.lane.b32.xlu0 %v167, 32
  %v170 = vpop.permute.xlu0 %169
  %v172 = vadd.f32 %v162, %v170
  %v173 = vtanh.pop %v172
  %175 = vrot.lane.b32.xlu0 %v173, 64
  %v176 = vpop.permute.xlu0 %175
  %v178 = vmul.f32 %v156, %v176
  %v179 = vstv %s68
  %vm180 = vcmp.lt.s32.totalorder %v179, %v67
  %v181 = vsel %vm180, 1, 0
  %182 = vset.pattern.permute.xlu0 0
  %183 = vperm.xlu0 %182, %v181
  %v184 = vpop.permute.xlu0 %183
  %vm185 = vcmp.eq.s32.totalorder %v184, 1
  %v186 = vsel %vm185, %v172, %v160
  %188 = vrot.lane.b32.xlu0 %v186, 96
  %v189 = vpop.permute.xlu0 %188
  %vm191 = vcmask 254976
  %192 = vst.msk [vmem:[#allocation3] sm:$0x3] %vm191, %v189
  %193 = vrot.lane.b32.xlu0 %v69, 96
  %v194 = vpop.permute.xlu0 %193
  %v196 = vsel %vm185, %v178, %v194
  %198 = vrot.lane.b32.xlu0 %v196, 32
  %v199 = vpop.permute.xlu0 %198
  %201 = vst.msk [vmem:[#allocation2] sm:$0x3] %vm191, %v199
  %v202 = vsel %vm185, %v178, 0.0
  %204 = vrot.lane.b32.xlu0 %v202, 32
  %v205 = vpop.permute.xlu0 %204
  %207 = vst.msk [vmem:[%s5] sm:$0x3] %vm191, %v205
  %s208 = ssub.s32 7, %s68
  %v209 = vld [vmem:[#allocation4] sm:$0x3]
  %v210 = vld [vmem:[#allocation5] sm:$0x3]
  %s211 = scalar_lea.vmem %s47, 14
  %v212 = vld [vmem:[%s211] sm:$0x3]
  %v213 = vld [vmem:[%s3] sm:$0xff]
  %v214 = vld [vmem:[%s3 + $0x8] sm:$0xff]
  %v215 = vld [vmem:[%s3 + $0x10] sm:$0xff]
  %v216 = vld [vmem:[%s3 + $0x18] sm:$0xff]
  %v218 = vsel %vm76, %v209, 0
  %220 = vmatprep.subr.mxu0 0.0
  %221 = vmatpush1.msra.mxu0 %v213
  %222 = vmatprep.subr.mxu0 0.0
  %223 = vmatpush1.msra.mxu0 %v214
  %224 = vmatprep.subr.mxu0 0.0
  %225 = vmatpush1.msra.mxu0 %v215
  %226 = vmatprep.subr.mxu0 0.0
  %227 = vmatpush1.msra.mxu0 %v216
  %228 = vmatprep.subr.mxu0 0.0
  %229 = vmatpush1.msra.mxu0 0.0
  %230 = vmatprep.subr.mxu0 0.0
  %231 = vmatpush1.msra.mxu0 0.0
  %232 = vmatprep.subr.mxu0 0.0
  %233 = vmatpush1.msra.mxu0 0.0
  %234 = vmatprep.subr.mxu0 0.0
  %235 = vmatpush1.msra.mxu0 0.0
  %236 = vmatprep.subr.mxu0 0.0
  %237 = vmatpush1.msra.mxu0 0.0
  %238 = vmatprep.subr.mxu0 0.0
  %239 = vmatpush1.msra.mxu0 0.0
  %240 = vmatprep.subr.mxu0 0.0
  %241 = vmatpush1.msra.mxu0 0.0
  %242 = vmatprep.subr.mxu0 0.0
  %243 = vmatpush1.msra.mxu0 0.0
  %244 = vmatprep.subr.mxu0 0.0
  %245 = vmatpush1.msra.mxu0 0.0
  %246 = vmatprep.subr.mxu0 0.0
  %247 = vmatpush1.msra.mxu0 0.0
  %248 = vmatprep.subr.mxu0 0.0
  %249 = vmatpush1.msra.mxu0 0.0
  %250 = vmatprep.subr.mxu0 0.0
  %251 = vmatpush1.msra.mxu0 0.0
  %252 = vmatprep.subr.mxu0 0.0
  %253 = vmatpush1.msra.mxu0 0.0
  %254 = vmatprep.subr.mxu0 0.0
  %255 = vmatpush1.msra.mxu0 0.0
  %256 = vmatprep.subr.mxu0 0.0
  %257 = vmatpush1.msra.mxu0 0.0
  %258 = vmatprep.subr.mxu0 0.0
  %259 = vmatpush1.msra.mxu0 0.0
  %260 = vmatprep.subr.mxu0 0.0
  %261 = vmatpush1.msra.mxu0 0.0
  %262 = vmatprep.subr.mxu0 0.0
  %263 = vmatpush1.msra.mxu0 0.0
  %264 = vmatprep.subr.mxu0 0.0
  %265 = vmatpush1.msra.mxu0 0.0
  %266 = vmatprep.subr.mxu0 0.0
  %267 = vmatpush1.msra.mxu0 0.0
  %268 = vmatprep.subr.mxu0 0.0
  %269 = vmatpush1.msra.mxu0 0.0
  %270 = vmatprep.subr.mxu0 0.0
  %271 = vmatpush1.msra.mxu0 0.0
  %272 = vmatprep.subr.mxu0 0.0
  %273 = vmatpush1.msra.mxu0 0.0
  %274 = vmatprep.subr.mxu0 0.0
  %275 = vmatpush1.msra.mxu0 0.0
  %276 = vmatprep.subr.mxu0 0.0
  %277 = vmatpush1.msra.mxu0 0.0
  %278 = vmatprep.subr.mxu0 0.0
  %279 = vmatpush1.msra.mxu0 0.0
  %280 = vmatprep.subr.mxu0 0.0
  %281 = vmatpush1.msra.mxu0 0.0
  %282 = vmatprep.subr.mxu0 0.0
  %283 = vmatpush1.msra.mxu0 0.0
  %284 = vmatprep.mubr.f32.mxu0 0.0
  %285 = vmatmul.mubr.f32.gmra.mrb[0].mxu0 %v218
  %v286 = vpop.f32.mrb[0].mxu0
  %v287 = vadd.f32 0.0, %v286
  %v288 = vpop.f32.mrb[0].mxu0
  %289 = vdwg.mxu0
  %v290 = vadd.f32 %v212, %v287
  %v291 = vxor.u32 %v290, 2147483648
  %v292 = vmul.f32 %v291, 1.442695
  %v293 = vpow.pop %v292
  %v294 = vadd.f32 %v293, 1.0
  %v295 = vrcp.pop %v294
  %v296 = vmul.f32 1.0, %v295
  %v297 = vtanh.pop %v290
  %299 = vrot.lane.b32.xlu0 %v210, 32
  %v300 = vpop.permute.xlu0 %299
  %v302 = vmul.f32 %v296, %v300
  %304 = vrot.lane.b32.xlu0 %v297, 64
  %v305 = vpop.permute.xlu0 %304
  %v307 = vmul.f32 %v296, %v305
  %309 = vrot.lane.b32.xlu0 %v307, 32
  %v310 = vpop.permute.xlu0 %309
  %v312 = vadd.f32 %v302, %v310
  %v313 = vtanh.pop %v312
  %315 = vrot.lane.b32.xlu0 %v313, 64
  %v316 = vpop.permute.xlu0 %315
  %v318 = vmul.f32 %v296, %v316
  %v319 = vstv %s208
  %vm320 = vcmp.lt.s32.totalorder %v319, %v67
  %v321 = vsel %vm320, 1, 0
  %322 = vset.pattern.permute.xlu0 0
  %323 = vperm.xlu0 %322, %v321
  %v324 = vpop.permute.xlu0 %323
  %vm325 = vcmp.eq.s32.totalorder %v324, 1
  %v326 = vsel %vm325, %v312, %v300
  %328 = vrot.lane.b32.xlu0 %v326, 96
  %v329 = vpop.permute.xlu0 %328
  %331 = vst.msk [vmem:[#allocation5] sm:$0x3] %vm191, %v329
  %332 = vrot.lane.b32.xlu0 %v209, 96
  %v333 = vpop.permute.xlu0 %332
  %v335 = vsel %vm325, %v318, %v333
  %337 = vrot.lane.b32.xlu0 %v335, 32
  %v338 = vpop.permute.xlu0 %337
  %340 = vst.msk [vmem:[#allocation4] sm:$0x3] %vm191, %v338
  %v341 = vsel %vm325, %v318, 0.0
  %343 = vrot.lane.b32.xlu0 %v341, 32
  %v344 = vpop.permute.xlu0 %343
  %s346 = scalar_lea.vmem %s55, 14
  %347 = vst.msk [vmem:[%s346] sm:$0x3] %vm191, %v344
  %s348 = sadd.s32 %s68, 1
  %v349 = vld [vmem:[#allocation2] sm:$0x3]
  %v350 = vld [vmem:[#allocation3] sm:$0x3]
  %s351 = scalar_lea.vmem %s0, 2
  %v352 = vld [vmem:[%s351] sm:$0x3]
  %v353 = vld [vmem:[%s2] sm:$0xff]
  %v354 = vld [vmem:[%s2 + $0x8] sm:$0xff]
  %v355 = vld [vmem:[%s2 + $0x10] sm:$0xff]
  %v356 = vld [vmem:[%s2 + $0x18] sm:$0xff]
  %v358 = vsel %vm76, %v349, 0
  %360 = vmatprep.subr.mxu0 0.0
  %361 = vmatpush1.msra.mxu0 %v353
  %362 = vmatprep.subr.mxu0 0.0
  %363 = vmatpush1.msra.mxu0 %v354
  %364 = vmatprep.subr.mxu0 0.0
  %365 = vmatpush1.msra.mxu0 %v355
  %366 = vmatprep.subr.mxu0 0.0
  %367 = vmatpush1.msra.mxu0 %v356
  %368 = vmatprep.subr.mxu0 0.0
  %369 = vmatpush1.msra.mxu0 0.0
  %370 = vmatprep.subr.mxu0 0.0
  %371 = vmatpush1.msra.mxu0 0.0
  %372 = vmatprep.subr.mxu0 0.0
  %373 = vmatpush1.msra.mxu0 0.0
  %374 = vmatprep.subr.mxu0 0.0
  %375 = vmatpush1.msra.mxu0 0.0
  %376 = vmatprep.subr.mxu0 0.0
  %377 = vmatpush1.msra.mxu0 0.0
  %378 = vmatprep.subr.mxu0 0.0
  %379 = vmatpush1.msra.mxu0 0.0
  %380 = vmatprep.subr.mxu0 0.0
  %381 = vmatpush1.msra.mxu0 0.0
  %382 = vmatprep.subr.mxu0 0.0
  %383 = vmatpush1.msra.mxu0 0.0
  %384 = vmatprep.subr.mxu0 0.0
  %385 = vmatpush1.msra.mxu0 0.0
  %386 = vmatprep.subr.mxu0 0.0
  %387 = vmatpush1.msra.mxu0 0.0
  %388 = vmatprep.subr.mxu0 0.0
  %389 = vmatpush1.msra.mxu0 0.0
  %390 = vmatprep.subr.mxu0 0.0
  %391 = vmatpush1.msra.mxu0 0.0
  %392 = vmatprep.subr.mxu0 0.0
  %393 = vmatpush1.msra.mxu0 0.0
  %394 = vmatprep.subr.mxu0 0.0
  %395 = vmatpush1.msra.mxu0 0.0
  %396 = vmatprep.subr.mxu0 0.0
  %397 = vmatpush1.msra.mxu0 0.0
  %398 = vmatprep.subr.mxu0 0.0
  %399 = vmatpush1.msra.mxu0 0.0
  %400 = vmatprep.subr.mxu0 0.0
  %401 = vmatpush1.msra.mxu0 0.0
  %402 = vmatprep.subr.mxu0 0.0
  %403 = vmatpush1.msra.mxu0 0.0
  %404 = vmatprep.subr.mxu0 0.0
  %405 = vmatpush1.msra.mxu0 0.0
  %406 = vmatprep.subr.mxu0 0.0
  %407 = vmatpush1.msra.mxu0 0.0
  %408 = vmatprep.subr.mxu0 0.0
  %409 = vmatpush1.msra.mxu0 0.0
  %410 = vmatprep.subr.mxu0 0.0
  %411 = vmatpush1.msra.mxu0 0.0
  %412 = vmatprep.subr.mxu0 0.0
  %413 = vmatpush1.msra.mxu0 0.0
  %414 = vmatprep.subr.mxu0 0.0
  %415 = vmatpush1.msra.mxu0 0.0
  %416 = vmatprep.subr.mxu0 0.0
  %417 = vmatpush1.msra.mxu0 0.0
  %418 = vmatprep.subr.mxu0 0.0
  %419 = vmatpush1.msra.mxu0 0.0
  %420 = vmatprep.subr.mxu0 0.0
  %421 = vmatpush1.msra.mxu0 0.0
  %422 = vmatprep.subr.mxu0 0.0
  %423 = vmatpush1.msra.mxu0 0.0
  %424 = vmatprep.mubr.f32.mxu0 0.0
  %425 = vmatmul.mubr.f32.gmra.mrb[0].mxu0 %v358
  %v426 = vpop.f32.mrb[0].mxu0
  %v427 = vadd.f32 0.0, %v426
  %v428 = vpop.f32.mrb[0].mxu0
  %429 = vdwg.mxu0
  %v430 = vadd.f32 %v352, %v427
  %v431 = vxor.u32 %v430, 2147483648
  %v432 = vmul.f32 %v431, 1.442695
  %v433 = vpow.pop %v432
  %v434 = vadd.f32 %v433, 1.0
  %v435 = vrcp.pop %v434
  %v436 = vmul.f32 1.0, %v435
  %v437 = vtanh.pop %v430
  %439 = vrot.lane.b32.xlu0 %v350, 32
  %v440 = vpop.permute.xlu0 %439
  %v442 = vmul.f32 %v436, %v440
  %444 = vrot.lane.b32.xlu0 %v437, 64
  %v445 = vpop.permute.xlu0 %444
  %v447 = vmul.f32 %v436, %v445
  %449 = vrot.lane.b32.xlu0 %v447, 32
  %v450 = vpop.permute.xlu0 %449
  %v452 = vadd.f32 %v442, %v450
  %v453 = vtanh.pop %v452
  %455 = vrot.lane.b32.xlu0 %v453, 64
  %v456 = vpop.permute.xlu0 %455
  %v458 = vmul.f32 %v436, %v456
  %v459 = vstv %s348
  %vm460 = vcmp.lt.s32.totalorder %v459, %v67
  %v461 = vsel %vm460, 1, 0
  %462 = vset.pattern.permute.xlu0 0
  %463 = vperm.xlu0 %462, %v461
  %v464 = vpop.permute.xlu0 %463
  %vm465 = vcmp.eq.s32.totalorder %v464, 1
  %v466 = vsel %vm465, %v452, %v440
  %468 = vrot.lane.b32.xlu0 %v466, 96
  %v469 = vpop.permute.xlu0 %468
  %471 = vst.msk [vmem:[#allocation3] sm:$0x3] %vm191, %v469
  %472 = vrot.lane.b32.xlu0 %v349, 96
  %v473 = vpop.permute.xlu0 %472
  %v475 = vsel %vm465, %v458, %v473
  %477 = vrot.lane.b32.xlu0 %v475, 32
  %v478 = vpop.permute.xlu0 %477
  %480 = vst.msk [vmem:[#allocation2] sm:$0x3] %vm191, %v478
  %v481 = vsel %vm465, %v458, 0.0
  %483 = vrot.lane.b32.xlu0 %v481, 32
  %v484 = vpop.permute.xlu0 %483
  %s486 = scalar_lea.vmem %s5, 2
  %487 = vst.msk [vmem:[%s486] sm:$0x3] %vm191, %v484
  %s488 = ssub.s32 6, %s68
  %v489 = vld [vmem:[#allocation4] sm:$0x3]
  %v490 = vld [vmem:[#allocation5] sm:$0x3]
  %s491 = scalar_lea.vmem %s47, 12
  %v492 = vld [vmem:[%s491] sm:$0x3]
  %v493 = vld [vmem:[%s3] sm:$0xff]
  %v494 = vld [vmem:[%s3 + $0x8] sm:$0xff]
  %v495 = vld [vmem:[%s3 + $0x10] sm:$0xff]
  %v496 = vld [vmem:[%s3 + $0x18] sm:$0xff]
  %v498 = vsel %vm76, %v489, 0
  %500 = vmatprep.subr.mxu0 0.0
  %501 = vmatpush1.msra.mxu0 %v493
  %502 = vmatprep.subr.mxu0 0.0
  %503 = vmatpush1.msra.mxu0 %v494
  %504 = vmatprep.subr.mxu0 0.0
  %505 = vmatpush1.msra.mxu0 %v495
  %506 = vmatprep.subr.mxu0 0.0
  %507 = vmatpush1.msra.mxu0 %v496
  %508 = vmatprep.subr.mxu0 0.0
  %509 = vmatpush1.msra.mxu0 0.0
  %510 = vmatprep.subr.mxu0 0.0
  %511 = vmatpush1.msra.mxu0 0.0
  %512 = vmatprep.subr.mxu0 0.0
  %513 = vmatpush1.msra.mxu0 0.0
  %514 = vmatprep.subr.mxu0 0.0
  %515 = vmatpush1.msra.mxu0 0.0
  %516 = vmatprep.subr.mxu0 0.0
  %517 = vmatpush1.msra.mxu0 0.0
  %518 = vmatprep.subr.mxu0 0.0
  %519 = vmatpush1.msra.mxu0 0.0
  %520 = vmatprep.subr.mxu0 0.0
  %521 = vmatpush1.msra.mxu0 0.0
  %522 = vmatprep.subr.mxu0 0.0
  %523 = vmatpush1.msra.mxu0 0.0
  %524 = vmatprep.subr.mxu0 0.0
  %525 = vmatpush1.msra.mxu0 0.0
  %526 = vmatprep.subr.mxu0 0.0
  %527 = vmatpush1.msra.mxu0 0.0
  %528 = vmatprep.subr.mxu0 0.0
  %529 = vmatpush1.msra.mxu0 0.0
  %530 = vmatprep.subr.mxu0 0.0
  %531 = vmatpush1.msra.mxu0 0.0
  %532 = vmatprep.subr.mxu0 0.0
  %533 = vmatpush1.msra.mxu0 0.0
  %534 = vmatprep.subr.mxu0 0.0
  %535 = vmatpush1.msra.mxu0 0.0
  %536 = vmatprep.subr.mxu0 0.0
  %537 = vmatpush1.msra.mxu0 0.0
  %538 = vmatprep.subr.mxu0 0.0
  %539 = vmatpush1.msra.mxu0 0.0
  %540 = vmatprep.subr.mxu0 0.0
  %541 = vmatpush1.msra.mxu0 0.0
  %542 = vmatprep.subr.mxu0 0.0
  %543 = vmatpush1.msra.mxu0 0.0
  %544 = vmatprep.subr.mxu0 0.0
  %545 = vmatpush1.msra.mxu0 0.0
  %546 = vmatprep.subr.mxu0 0.0
  %547 = vmatpush1.msra.mxu0 0.0
  %548 = vmatprep.subr.mxu0 0.0
  %549 = vmatpush1.msra.mxu0 0.0
  %550 = vmatprep.subr.mxu0 0.0
  %551 = vmatpush1.msra.mxu0 0.0
  %552 = vmatprep.subr.mxu0 0.0
  %553 = vmatpush1.msra.mxu0 0.0
  %554 = vmatprep.subr.mxu0 0.0
  %555 = vmatpush1.msra.mxu0 0.0
  %556 = vmatprep.subr.mxu0 0.0
  %557 = vmatpush1.msra.mxu0 0.0
  %558 = vmatprep.subr.mxu0 0.0
  %559 = vmatpush1.msra.mxu0 0.0
  %560 = vmatprep.subr.mxu0 0.0
  %561 = vmatpush1.msra.mxu0 0.0
  %562 = vmatprep.subr.mxu0 0.0
  %563 = vmatpush1.msra.mxu0 0.0
  %564 = vmatprep.mubr.f32.mxu0 0.0
  %565 = vmatmul.mubr.f32.gmra.mrb[0].mxu0 %v498
  %v566 = vpop.f32.mrb[0].mxu0
  %v567 = vadd.f32 0.0, %v566
  %v568 = vpop.f32.mrb[0].mxu0
  %569 = vdwg.mxu0
  %v570 = vadd.f32 %v492, %v567
  %v571 = vxor.u32 %v570, 2147483648
  %v572 = vmul.f32 %v571, 1.442695
  %v573 = vpow.pop %v572
  %v574 = vadd.f32 %v573, 1.0
  %v575 = vrcp.pop %v574
  %v576 = vmul.f32 1.0, %v575
  %v577 = vtanh.pop %v570
  %579 = vrot.lane.b32.xlu0 %v490, 32
  %v580 = vpop.permute.xlu0 %579
  %v582 = vmul.f32 %v576, %v580
  %584 = vrot.lane.b32.xlu0 %v577, 64
  %v585 = vpop.permute.xlu0 %584
  %v587 = vmul.f32 %v576, %v585
  %589 = vrot.lane.b32.xlu0 %v587, 32
  %v590 = vpop.permute.xlu0 %589
  %v592 = vadd.f32 %v582, %v590
  %v593 = vtanh.pop %v592
  %595 = vrot.lane.b32.xlu0 %v593, 64
  %v596 = vpop.permute.xlu0 %595
  %v598 = vmul.f32 %v576, %v596
  %v599 = vstv %s488
  %vm600 = vcmp.lt.s32.totalorder %v599, %v67
  %v601 = vsel %vm600, 1, 0
  %602 = vset.pattern.permute.xlu0 0
  %603 = vperm.xlu0 %602, %v601
  %v604 = vpop.permute.xlu0 %603
  %vm605 = vcmp.eq.s32.totalorder %v604, 1
  %v606 = vsel %vm605, %v592, %v580
  %608 = vrot.lane.b32.xlu0 %v606, 96
  %v609 = vpop.permute.xlu0 %608
  %611 = vst.msk [vmem:[#allocation5] sm:$0x3] %vm191, %v609
  %612 = vrot.lane.b32.xlu0 %v489, 96
  %v613 = vpop.permute.xlu0 %612
  %v615 = vsel %vm605, %v598, %v613
  %617 = vrot.lane.b32.xlu0 %v615, 32
  %v618 = vpop.permute.xlu0 %617
  %620 = vst.msk [vmem:[#allocation4] sm:$0x3] %vm191, %v618
  %v621 = vsel %vm605, %v598, 0.0
  %623 = vrot.lane.b32.xlu0 %v621, 32
  %v624 = vpop.permute.xlu0 %623
  %s626 = scalar_lea.vmem %s55, 12
  %627 = vst.msk [vmem:[%s626] sm:$0x3] %vm191, %v624
  %s628 = sadd.s32 %s68, 2
  %v629 = vld [vmem:[#allocation2] sm:$0x3]
  %v630 = vld [vmem:[#allocation3] sm:$0x3]
  %s631 = scalar_lea.vmem %s0, 4
  %v632 = vld [vmem:[%s631] sm:$0x3]
  %v633 = vld [vmem:[%s2] sm:$0xff]
  %v634 = vld [vmem:[%s2 + $0x8] sm:$0xff]
  %v635 = vld [vmem:[%s2 + $0x10] sm:$0xff]
  %v636 = vld [vmem:[%s2 + $0x18] sm:$0xff]
  %v638 = vsel %vm76, %v629, 0
  %640 = vmatprep.subr.mxu0 0.0
  %641 = vmatpush1.msra.mxu0 %v633
  %642 = vmatprep.subr.mxu0 0.0
  %643 = vmatpush1.msra.mxu0 %v634
  %644 = vmatprep.subr.mxu0 0.0
  %645 = vmatpush1.msra.mxu0 %v635
  %646 = vmatprep.subr.mxu0 0.0
  %647 = vmatpush1.msra.mxu0 %v636
  %648 = vmatprep.subr.mxu0 0.0
  %649 = vmatpush1.msra.mxu0 0.0
  %650 = vmatprep.subr.mxu0 0.0
  %651 = vmatpush1.msra.mxu0 0.0
  %652 = vmatprep.subr.mxu0 0.0
  %653 = vmatpush1.msra.mxu0 0.0
  %654 = vmatprep.subr.mxu0 0.0
  %655 = vmatpush1.msra.mxu0 0.0
  %656 = vmatprep.subr.mxu0 0.0
  %657 = vmatpush1.msra.mxu0 0.0
  %658 = vmatprep.subr.mxu0 0.0
  %659 = vmatpush1.msra.mxu0 0.0
  %660 = vmatprep.subr.mxu0 0.0
  %661 = vmatpush1.msra.mxu0 0.0
  %662 = vmatprep.subr.mxu0 0.0
  %663 = vmatpush1.msra.mxu0 0.0
  %664 = vmatprep.subr.mxu0 0.0
  %665 = vmatpush1.msra.mxu0 0.0
  %666 = vmatprep.subr.mxu0 0.0
  %667 = vmatpush1.msra.mxu0 0.0
  %668 = vmatprep.subr.mxu0 0.0
  %669 = vmatpush1.msra.mxu0 0.0
  %670 = vmatprep.subr.mxu0 0.0
  %671 = vmatpush1.msra.mxu0 0.0
  %672 = vmatprep.subr.mxu0 0.0
  %673 = vmatpush1.msra.mxu0 0.0
  %674 = vmatprep.subr.mxu0 0.0
  %675 = vmatpush1.msra.mxu0 0.0
  %676 = vmatprep.subr.mxu0 0.0
  %677 = vmatpush1.msra.mxu0 0.0
  %678 = vmatprep.subr.mxu0 0.0
  %679 = vmatpush1.msra.mxu0 0.0
  %680 = vmatprep.subr.mxu0 0.0
  %681 = vmatpush1.msra.mxu0 0.0
  %682 = vmatprep.subr.mxu0 0.0
  %683 = vmatpush1.msra.mxu0 0.0
  %684 = vmatprep.subr.mxu0 0.0
  %685 = vmatpush1.msra.mxu0 0.0
  %686 = vmatprep.subr.mxu0 0.0
  %687 = vmatpush1.msra.mxu0 0.0
  %688 = vmatprep.subr.mxu0 0.0
  %689 = vmatpush1.msra.mxu0 0.0
  %690 = vmatprep.subr.mxu0 0.0
  %691 = vmatpush1.msra.mxu0 0.0
  %692 = vmatprep.subr.mxu0 0.0
  %693 = vmatpush1.msra.mxu0 0.0
  %694 = vmatprep.subr.mxu0 0.0
  %695 = vmatpush1.msra.mxu0 0.0
  %696 = vmatprep.subr.mxu0 0.0
  %697 = vmatpush1.msra.mxu0 0.0
  %698 = vmatprep.subr.mxu0 0.0
  %699 = vmatpush1.msra.mxu0 0.0
  %700 = vmatprep.subr.mxu0 0.0
  %701 = vmatpush1.msra.mxu0 0.0
  %702 = vmatprep.subr.mxu0 0.0
  %703 = vmatpush1.msra.mxu0 0.0
  %704 = vmatprep.mubr.f32.mxu0 0.0
  %705 = vmatmul.mubr.f32.gmra.mrb[0].mxu0 %v638
  %v706 = vpop.f32.mrb[0].mxu0
  %v707 = vadd.f32 0.0, %v706
  %v708 = vpop.f32.mrb[0].mxu0
  %709 = vdwg.mxu0
  %v710 = vadd.f32 %v632, %v707
  %v711 = vxor.u32 %v710, 2147483648
  %v712 = vmul.f32 %v711, 1.442695
  %v713 = vpow.pop %v712
  %v714 = vadd.f32 %v713, 1.0
  %v715 = vrcp.pop %v714
  %v716 = vmul.f32 1.0, %v715
  %v717 = vtanh.pop %v710
  %719 = vrot.lane.b32.xlu0 %v630, 32
  %v720 = vpop.permute.xlu0 %719
  %v722 = vmul.f32 %v716, %v720
  %724 = vrot.lane.b32.xlu0 %v717, 64
  %v725 = vpop.permute.xlu0 %724
  %v727 = vmul.f32 %v716, %v725
  %729 = vrot.lane.b32.xlu0 %v727, 32
  %v730 = vpop.permute.xlu0 %729
  %v732 = vadd.f32 %v722, %v730
  %v733 = vtanh.pop %v732
  %735 = vrot.lane.b32.xlu0 %v733, 64
  %v736 = vpop.permute.xlu0 %735
  %v738 = vmul.f32 %v716, %v736
  %v739 = vstv %s628
  %vm740 = vcmp.lt.s32.totalorder %v739, %v67
  %v741 = vsel %vm740, 1, 0
  %742 = vset.pattern.permute.xlu0 0
  %743 = vperm.xlu0 %742, %v741
  %v744 = vpop.permute.xlu0 %743
  %vm745 = vcmp.eq.s32.totalorder %v744, 1
  %v746 = vsel %vm745, %v732, %v720
  %748 = vrot.lane.b32.xlu0 %v746, 96
  %v749 = vpop.permute.xlu0 %748
  %751 = vst.msk [vmem:[#allocation3] sm:$0x3] %vm191, %v749
  %752 = vrot.lane.b32.xlu0 %v629, 96
  %v753 = vpop.permute.xlu0 %752
  %v755 = vsel %vm745, %v738, %v753
  %757 = vrot.lane.b32.xlu0 %v755, 32
  %v758 = vpop.permute.xlu0 %757
  %760 = vst.msk [vmem:[#allocation2] sm:$0x3] %vm191, %v758
  %v761 = vsel %vm745, %v738, 0.0
  %763 = vrot.lane.b32.xlu0 %v761, 32
  %v764 = vpop.permute.xlu0 %763
  %s766 = scalar_lea.vmem %s5, 4
  %767 = vst.msk [vmem:[%s766] sm:$0x3] %vm191, %v764
  %s768 = ssub.s32 5, %s68
  %v769 = vld [vmem:[#allocation4] sm:$0x3]
  %v770 = vld [vmem:[#allocation5] sm:$0x3]
  %s771 = scalar_lea.vmem %s47, 10
  %v772 = vld [vmem:[%s771] sm:$0x3]
  %v773 = vld [vmem:[%s3] sm:$0xff]
  %v774 = vld [vmem:[%s3 + $0x8] sm:$0xff]
  %v775 = vld [vmem:[%s3 + $0x10] sm:$0xff]
  %v776 = vld [vmem:[%s3 + $0x18] sm:$0xff]
  %v778 = vsel %vm76, %v769, 0
  %780 = vmatprep.subr.mxu0 0.0
  %781 = vmatpush1.msra.mxu0 %v773
  %782 = vmatprep.subr.mxu0 0.0
  %783 = vmatpush1.msra.mxu0 %v774
  %784 = vmatprep.subr.mxu0 0.0
  %785 = vmatpush1.msra.mxu0 %v775
  %786 = vmatprep.subr.mxu0 0.0
  %787 = vmatpush1.msra.mxu0 %v776
  %788 = vmatprep.subr.mxu0 0.0
  %789 = vmatpush1.msra.mxu0 0.0
  %790 = vmatprep.subr.mxu0 0.0
  %791 = vmatpush1.msra.mxu0 0.0
  %792 = vmatprep.subr.mxu0 0.0
  %793 = vmatpush1.msra.mxu0 0.0
  %794 = vmatprep.subr.mxu0 0.0
  %795 = vmatpush1.msra.mxu0 0.0
  %796 = vmatprep.subr.mxu0 0.0
  %797 = vmatpush1.msra.mxu0 0.0
  %798 = vmatprep.subr.mxu0 0.0
  %799 = vmatpush1.msra.mxu0 0.0
  %800 = vmatprep.subr.mxu0 0.0
  %801 = vmatpush1.msra.mxu0 0.0
  %802 = vmatprep.subr.mxu0 0.0
  %803 = vmatpush1.msra.mxu0 0.0
  %804 = vmatprep.subr.mxu0 0.0
  %805 = vmatpush1.msra.mxu0 0.0
  %806 = vmatprep.subr.mxu0 0.0
  %807 = vmatpush1.msra.mxu0 0.0
  %808 = vmatprep.subr.mxu0 0.0
  %809 = vmatpush1.msra.mxu0 0.0
  %810 = vmatprep.subr.mxu0 0.0
  %811 = vmatpush1.msra.mxu0 0.0
  %812 = vmatprep.subr.mxu0 0.0
  %813 = vmatpush1.msra.mxu0 0.0
  %814 = vmatprep.subr.mxu0 0.0
  %815 = vmatpush1.msra.mxu0 0.0
  %816 = vmatprep.subr.mxu0 0.0
  %817 = vmatpush1.msra.mxu0 0.0
  %818 = vmatprep.subr.mxu0 0.0
  %819 = vmatpush1.msra.mxu0 0.0
  %820 = vmatprep.subr.mxu0 0.0
  %821 = vmatpush1.msra.mxu0 0.0
  %822 = vmatprep.subr.mxu0 0.0
  %823 = vmatpush1.msra.mxu0 0.0
  %824 = vmatprep.subr.mxu0 0.0
  %825 = vmatpush1.msra.mxu0 0.0
  %826 = vmatprep.subr.mxu0 0.0
  %827 = vmatpush1.msra.mxu0 0.0
  %828 = vmatprep.subr.mxu0 0.0
  %829 = vmatpush1.msra.mxu0 0.0
  %830 = vmatprep.subr.mxu0 0.0
  %831 = vmatpush1.msra.mxu0 0.0
  %832 = vmatprep.subr.mxu0 0.0
  %833 = vmatpush1.msra.mxu0 0.0
  %834 = vmatprep.subr.mxu0 0.0
  %835 = vmatpush1.msra.mxu0 0.0
  %836 = vmatprep.subr.mxu0 0.0
  %837 = vmatpush1.msra.mxu0 0.0
  %838 = vmatprep.subr.mxu0 0.0
  %839 = vmatpush1.msra.mxu0 0.0
  %840 = vmatprep.subr.mxu0 0.0
  %841 = vmatpush1.msra.mxu0 0.0
  %842 = vmatprep.subr.mxu0 0.0
  %843 = vmatpush1.msra.mxu0 0.0
  %844 = vmatprep.mubr.f32.mxu0 0.0
  %845 = vmatmul.mubr.f32.gmra.mrb[0].mxu0 %v778
  %v846 = vpop.f32.mrb[0].mxu0
  %v847 = vadd.f32 0.0, %v846
  %v848 = vpop.f32.mrb[0].mxu0
  %849 = vdwg.mxu0
  %v850 = vadd.f32 %v772, %v847
  %v851 = vxor.u32 %v850, 2147483648
  %v852 = vmul.f32 %v851, 1.442695
  %v853 = vpow.pop %v852
  %v854 = vadd.f32 %v853, 1.0
  %v855 = vrcp.pop %v854
  %v856 = vmul.f32 1.0, %v855
  %v857 = vtanh.pop %v850
  %859 = vrot.lane.b32.xlu0 %v770, 32
  %v860 = vpop.permute.xlu0 %859
  %v862 = vmul.f32 %v856, %v860
  %864 = vrot.lane.b32.xlu0 %v857, 64
  %v865 = vpop.permute.xlu0 %864
  %v867 = vmul.f32 %v856, %v865
  %869 = vrot.lane.b32.xlu0 %v867, 32
  %v870 = vpop.permute.xlu0 %869
  %v872 = vadd.f32 %v862, %v870
  %v873 = vtanh.pop %v872
  %875 = vrot.lane.b32.xlu0 %v873, 64
  %v876 = vpop.permute.xlu0 %875
  %v878 = vmul.f32 %v856, %v876
  %v879 = vstv %s768
  %vm880 = vcmp.lt.s32.totalorder %v879, %v67
  %v881 = vsel %vm880, 1, 0
  %882 = vset.pattern.permute.xlu0 0
  %883 = vperm.xlu0 %882, %v881
  %v884 = vpop.permute.xlu0 %883
  %vm885 = vcmp.eq.s32.totalorder %v884, 1
  %v886 = vsel %vm885, %v872, %v860
  %888 = vrot.lane.b32.xlu0 %v886, 96
  %v889 = vpop.permute.xlu0 %888
  %891 = vst.msk [vmem:[#allocation5] sm:$0x3] %vm191, %v889
  %892 = vrot.lane.b32.xlu0 %v769, 96
  %v893 = vpop.permute.xlu0 %892
  %v895 = vsel %vm885, %v878, %v893
  %897 = vrot.lane.b32.xlu0 %v895, 32
  %v898 = vpop.permute.xlu0 %897
  %900 = vst.msk [vmem:[#allocation4] sm:$0x3] %vm191, %v898
  %v901 = vsel %vm885, %v878, 0.0
  %903 = vrot.lane.b32.xlu0 %v901, 32
  %v904 = vpop.permute.xlu0 %903
  %s906 = scalar_lea.vmem %s55, 10
  %907 = vst.msk [vmem:[%s906] sm:$0x3] %vm191, %v904
  %s908 = sadd.s32 %s68, 3
  %v909 = vld [vmem:[#allocation2] sm:$0x3]
  %v910 = vld [vmem:[#allocation3] sm:$0x3]
  %s911 = scalar_lea.vmem %s0, 6
  %v912 = vld [vmem:[%s911] sm:$0x3]
  %v913 = vld [vmem:[%s2] sm:$0xff]
  %v914 = vld [vmem:[%s2 + $0x8] sm:$0xff]
  %v915 = vld [vmem:[%s2 + $0x10] sm:$0xff]
  %v916 = vld [vmem:[%s2 + $0x18] sm:$0xff]
  %v918 = vsel %vm76, %v909, 0
  %920 = vmatprep.subr.mxu0 0.0
  %921 = vmatpush1.msra.mxu0 %v913
  %922 = vmatprep.subr.mxu0 0.0
  %923 = vmatpush1.msra.mxu0 %v914
  %924 = vmatprep.subr.mxu0 0.0
  %925 = vmatpush1.msra.mxu0 %v915
  %926 = vmatprep.subr.mxu0 0.0
  %927 = vmatpush1.msra.mxu0 %v916
  %928 = vmatprep.subr.mxu0 0.0
  %929 = vmatpush1.msra.mxu0 0.0
  %930 = vmatprep.subr.mxu0 0.0
  %931 = vmatpush1.msra.mxu0 0.0
  %932 = vmatprep.subr.mxu0 0.0
  %933 = vmatpush1.msra.mxu0 0.0
  %934 = vmatprep.subr.mxu0 0.0
  %935 = vmatpush1.msra.mxu0 0.0
  %936 = vmatprep.subr.mxu0 0.0
  %937 = vmatpush1.msra.mxu0 0.0
  %938 = vmatprep.subr.mxu0 0.0
  %939 = vmatpush1.msra.mxu0 0.0
  %940 = vmatprep.subr.mxu0 0.0
  %941 = vmatpush1.msra.mxu0 0.0
  %942 = vmatprep.subr.mxu0 0.0
  %943 = vmatpush1.msra.mxu0 0.0
  %944 = vmatprep.subr.mxu0 0.0
  %945 = vmatpush1.msra.mxu0 0.0
  %946 = vmatprep.subr.mxu0 0.0
  %947 = vmatpush1.msra.mxu0 0.0
  %948 = vmatprep.subr.mxu0 0.0
  %949 = vmatpush1.msra.mxu0 0.0
  %950 = vmatprep.subr.mxu0 0.0
  %951 = vmatpush1.msra.mxu0 0.0
  %952 = vmatprep.subr.mxu0 0.0
  %953 = vmatpush1.msra.mxu0 0.0
  %954 = vmatprep.subr.mxu0 0.0
  %955 = vmatpush1.msra.mxu0 0.0
  %956 = vmatprep.subr.mxu0 0.0
  %957 = vmatpush1.msra.mxu0 0.0
  %958 = vmatprep.subr.mxu0 0.0
  %959 = vmatpush1.msra.mxu0 0.0
  %960 = vmatprep.subr.mxu0 0.0
  %961 = vmatpush1.msra.mxu0 0.0
  %962 = vmatprep.subr.mxu0 0.0
  %963 = vmatpush1.msra.mxu0 0.0
  %964 = vmatprep.subr.mxu0 0.0
  %965 = vmatpush1.msra.mxu0 0.0
  %966 = vmatprep.subr.mxu0 0.0
  %967 = vmatpush1.msra.mxu0 0.0
  %968 = vmatprep.subr.mxu0 0.0
  %969 = vmatpush1.msra.mxu0 0.0
  %970 = vmatprep.subr.mxu0 0.0
  %971 = vmatpush1.msra.mxu0 0.0
  %972 = vmatprep.subr.mxu0 0.0
  %973 = vmatpush1.msra.mxu0 0.0
  %974 = vmatprep.subr.mxu0 0.0
  %975 = vmatpush1.msra.mxu0 0.0
  %976 = vmatprep.subr.mxu0 0.0
  %977 = vmatpush1.msra.mxu0 0.0
  %978 = vmatprep.subr.mxu0 0.0
  %979 = vmatpush1.msra.mxu0 0.0
  %980 = vmatprep.subr.mxu0 0.0
  %981 = vmatpush1.msra.mxu0 0.0
  %982 = vmatprep.subr.mxu0 0.0
  %983 = vmatpush1.msra.mxu0 0.0
  %984 = vmatprep.mubr.f32.mxu0 0.0
  %985 = vmatmul.mubr.f32.gmra.mrb[0].mxu0 %v918
  %v986 = vpop.f32.mrb[0].mxu0
  %v987 = vadd.f32 0.0, %v986
  %v988 = vpop.f32.mrb[0].mxu0
  %989 = vdwg.mxu0
  %v990 = vadd.f32 %v912, %v987
  %v991 = vxor.u32 %v990, 2147483648
  %v992 = vmul.f32 %v991, 1.442695
  %v993 = vpow.pop %v992
  %v994 = vadd.f32 %v993, 1.0
  %v995 = vrcp.pop %v994
  %v996 = vmul.f32 1.0, %v995
  %v997 = vtanh.pop %v990
  %999 = vrot.lane.b32.xlu0 %v910, 32
  %v1000 = vpop.permute.xlu0 %999
  %v1002 = vmul.f32 %v996, %v1000
  %1004 = vrot.lane.b32.xlu0 %v997, 64
  %v1005 = vpop.permute.xlu0 %1004
  %v1007 = vmul.f32 %v996, %v1005
  %1009 = vrot.lane.b32.xlu0 %v1007, 32
  %v1010 = vpop.permute.xlu0 %1009
  %v1012 = vadd.f32 %v1002, %v1010
  %v1013 = vtanh.pop %v1012
  %1015 = vrot.lane.b32.xlu0 %v1013, 64
  %v1016 = vpop.permute.xlu0 %1015
  %v1018 = vmul.f32 %v996, %v1016
  %v1019 = vstv %s908
  %vm1020 = vcmp.lt.s32.totalorder %v1019, %v67
  %v1021 = vsel %vm1020, 1, 0
  %1022 = vset.pattern.permute.xlu0 0
  %1023 = vperm.xlu0 %1022, %v1021
  %v1024 = vpop.permute.xlu0 %1023
  %vm1025 = vcmp.eq.s32.totalorder %v1024, 1
  %v1026 = vsel %vm1025, %v1012, %v1000
  %1028 = vrot.lane.b32.xlu0 %v1026, 96
  %v1029 = vpop.permute.xlu0 %1028
  %1031 = vst.msk [vmem:[#allocation3] sm:$0x3] %vm191, %v1029
  %1032 = vrot.lane.b32.xlu0 %v909, 96
  %v1033 = vpop.permute.xlu0 %1032
  %v1035 = vsel %vm1025, %v1018, %v1033
  %1037 = vrot.lane.b32.xlu0 %v1035, 32
  %v1038 = vpop.permute.xlu0 %1037
  %1040 = vst.msk [vmem:[#allocation2] sm:$0x3] %vm191, %v1038
  %v1041 = vsel %vm1025, %v1018, 0.0
  %1043 = vrot.lane.b32.xlu0 %v1041, 32
  %v1044 = vpop.permute.xlu0 %1043
  %s1046 = scalar_lea.vmem %s5, 6
  %1047 = vst.msk [vmem:[%s1046] sm:$0x3] %vm191, %v1044
  %s1048 = ssub.s32 4, %s68
  %v1049 = vld [vmem:[#allocation4] sm:$0x3]
  %v1050 = vld [vmem:[#allocation5] sm:$0x3]
  %s1051 = scalar_lea.vmem %s47, 8
  %v1052 = vld [vmem:[%s1051] sm:$0x3]
  %v1053 = vld [vmem:[%s3] sm:$0xff]
  %v1054 = vld [vmem:[%s3 + $0x8] sm:$0xff]
  %v1055 = vld [vmem:[%s3 + $0x10] sm:$0xff]
  %v1056 = vld [vmem:[%s3 + $0x18] sm:$0xff]
  %v1058 = vsel %vm76, %v1049, 0
  %1060 = vmatprep.subr.mxu0 0.0
  %1061 = vmatpush1.msra.mxu0 %v1053
  %1062 = vmatprep.subr.mxu0 0.0
  %1063 = vmatpush1.msra.mxu0 %v1054
  %1064 = vmatprep.subr.mxu0 0.0
  %1065 = vmatpush1.msra.mxu0 %v1055
  %1066 = vmatprep.subr.mxu0 0.0
  %1067 = vmatpush1.msra.mxu0 %v1056
  %1068 = vmatprep.subr.mxu0 0.0
  %1069 = vmatpush1.msra.mxu0 0.0
  %1070 = vmatprep.subr.mxu0 0.0
  %1071 = vmatpush1.msra.mxu0 0.0
  %1072 = vmatprep.subr.mxu0 0.0
  %1073 = vmatpush1.msra.mxu0 0.0
  %1074 = vmatprep.subr.mxu0 0.0
  %1075 = vmatpush1.msra.mxu0 0.0
  %1076 = vmatprep.subr.mxu0 0.0
  %1077 = vmatpush1.msra.mxu0 0.0
  %1078 = vmatprep.subr.mxu0 0.0
  %1079 = vmatpush1.msra.mxu0 0.0
  %1080 = vmatprep.subr.mxu0 0.0
  %1081 = vmatpush1.msra.mxu0 0.0
  %1082 = vmatprep.subr.mxu0 0.0
  %1083 = vmatpush1.msra.mxu0 0.0
  %1084 = vmatprep.subr.mxu0 0.0
  %1085 = vmatpush1.msra.mxu0 0.0
  %1086 = vmatprep.subr.mxu0 0.0
  %1087 = vmatpush1.msra.mxu0 0.0
  %1088 = vmatprep.subr.mxu0 0.0
  %1089 = vmatpush1.msra.mxu0 0.0
  %1090 = vmatprep.subr.mxu0 0.0
  %1091 = vmatpush1.msra.mxu0 0.0
  %1092 = vmatprep.subr.mxu0 0.0
  %1093 = vmatpush1.msra.mxu0 0.0
  %1094 = vmatprep.subr.mxu0 0.0
  %1095 = vmatpush1.msra.mxu0 0.0
  %1096 = vmatprep.subr.mxu0 0.0
  %1097 = vmatpush1.msra.mxu0 0.0
  %1098 = vmatprep.subr.mxu0 0.0
  %1099 = vmatpush1.msra.mxu0 0.0
  %1100 = vmatprep.subr.mxu0 0.0
  %1101 = vmatpush1.msra.mxu0 0.0
  %1102 = vmatprep.subr.mxu0 0.0
  %1103 = vmatpush1.msra.mxu0 0.0
  %1104 = vmatprep.subr.mxu0 0.0
  %1105 = vmatpush1.msra.mxu0 0.0
  %1106 = vmatprep.subr.mxu0 0.0
  %1107 = vmatpush1.msra.mxu0 0.0
  %1108 = vmatprep.subr.mxu0 0.0
  %1109 = vmatpush1.msra.mxu0 0.0
  %1110 = vmatprep.subr.mxu0 0.0
  %1111 = vmatpush1.msra.mxu0 0.0
  %1112 = vmatprep.subr.mxu0 0.0
  %1113 = vmatpush1.msra.mxu0 0.0
  %1114 = vmatprep.subr.mxu0 0.0
  %1115 = vmatpush1.msra.mxu0 0.0
  %1116 = vmatprep.subr.mxu0 0.0
  %1117 = vmatpush1.msra.mxu0 0.0
  %1118 = vmatprep.subr.mxu0 0.0
  %1119 = vmatpush1.msra.mxu0 0.0
  %1120 = vmatprep.subr.mxu0 0.0
  %1121 = vmatpush1.msra.mxu0 0.0
  %1122 = vmatprep.subr.mxu0 0.0
  %1123 = vmatpush1.msra.mxu0 0.0
  %1124 = vmatprep.mubr.f32.mxu0 0.0
  %1125 = vmatmul.mubr.f32.gmra.mrb[0].mxu0 %v1058
  %v1126 = vpop.f32.mrb[0].mxu0
  %v1127 = vadd.f32 0.0, %v1126
  %v1128 = vpop.f32.mrb[0].mxu0
  %1129 = vdwg.mxu0
  %v1130 = vadd.f32 %v1052, %v1127
  %v1131 = vxor.u32 %v1130, 2147483648
  %v1132 = vmul.f32 %v1131, 1.442695
  %v1133 = vpow.pop %v1132
  %v1134 = vadd.f32 %v1133, 1.0
  %v1135 = vrcp.pop %v1134
  %v1136 = vmul.f32 1.0, %v1135
  %v1137 = vtanh.pop %v1130
  %1139 = vrot.lane.b32.xlu0 %v1050, 32
  %v1140 = vpop.permute.xlu0 %1139
  %v1142 = vmul.f32 %v1136, %v1140
  %1144 = vrot.lane.b32.xlu0 %v1137, 64
  %v1145 = vpop.permute.xlu0 %1144
  %v1147 = vmul.f32 %v1136, %v1145
  %1149 = vrot.lane.b32.xlu0 %v1147, 32
  %v1150 = vpop.permute.xlu0 %1149
  %v1152 = vadd.f32 %v1142, %v1150
  %v1153 = vtanh.pop %v1152
  %1155 = vrot.lane.b32.xlu0 %v1153, 64
  %v1156 = vpop.permute.xlu0 %1155
  %v1158 = vmul.f32 %v1136, %v1156
  %v1159 = vstv %s1048
  %vm1160 = vcmp.lt.s32.totalorder %v1159, %v67
  %v1161 = vsel %vm1160, 1, 0
  %1162 = vset.pattern.permute.xlu0 0
  %1163 = vperm.xlu0 %1162, %v1161
  %v1164 = vpop.permute.xlu0 %1163
  %vm1165 = vcmp.eq.s32.totalorder %v1164, 1
  %v1166 = vsel %vm1165, %v1152, %v1140
  %1168 = vrot.lane.b32.xlu0 %v1166, 96
  %v1169 = vpop.permute.xlu0 %1168
  %1171 = vst.msk [vmem:[#allocation5] sm:$0x3] %vm191, %v1169
  %1172 = vrot.lane.b32.xlu0 %v1049, 96
  %v1173 = vpop.permute.xlu0 %1172
  %v1175 = vsel %vm1165, %v1158, %v1173
  %1177 = vrot.lane.b32.xlu0 %v1175, 32
  %v1178 = vpop.permute.xlu0 %1177
  %1180 = vst.msk [vmem:[#allocation4] sm:$0x3] %vm191, %v1178
  %v1181 = vsel %vm1165, %v1158, 0.0
  %1183 = vrot.lane.b32.xlu0 %v1181, 32
  %v1184 = vpop.permute.xlu0 %1183
  %s1186 = scalar_lea.vmem %s55, 8
  %1187 = vst.msk [vmem:[%s1186] sm:$0x3] %vm191, %v1184
  %s1188 = sadd.s32 %s68, 4
  %v1189 = vld [vmem:[#allocation2] sm:$0x3]
  %v1190 = vld [vmem:[#allocation3] sm:$0x3]
  %s1191 = scalar_lea.vmem %s0, 8
  %v1192 = vld [vmem:[%s1191] sm:$0x3]
  %v1193 = vld [vmem:[%s2] sm:$0xff]
  %v1194 = vld [vmem:[%s2 + $0x8] sm:$0xff]
  %v1195 = vld [vmem:[%s2 + $0x10] sm:$0xff]
  %v1196 = vld [vmem:[%s2 + $0x18] sm:$0xff]
  %v1198 = vsel %vm76, %v1189, 0
  %1200 = vmatprep.subr.mxu0 0.0
  %1201 = vmatpush1.msra.mxu0 %v1193
  %1202 = vmatprep.subr.mxu0 0.0
  %1203 = vmatpush1.msra.mxu0 %v1194
  %1204 = vmatprep.subr.mxu0 0.0
  %1205 = vmatpush1.msra.mxu0 %v1195
  %1206 = vmatprep.subr.mxu0 0.0
  %1207 = vmatpush1.msra.mxu0 %v1196
  %1208 = vmatprep.subr.mxu0 0.0
  %1209 = vmatpush1.msra.mxu0 0.0
  %1210 = vmatprep.subr.mxu0 0.0
  %1211 = vmatpush1.msra.mxu0 0.0
  %1212 = vmatprep.subr.mxu0 0.0
  %1213 = vmatpush1.msra.mxu0 0.0
  %1214 = vmatprep.subr.mxu0 0.0
  %1215 = vmatpush1.msra.mxu0 0.0
  %1216 = vmatprep.subr.mxu0 0.0
  %1217 = vmatpush1.msra.mxu0 0.0
  %1218 = vmatprep.subr.mxu0 0.0
  %1219 = vmatpush1.msra.mxu0 0.0
  %1220 = vmatprep.subr.mxu0 0.0
  %1221 = vmatpush1.msra.mxu0 0.0
  %1222 = vmatprep.subr.mxu0 0.0
  %1223 = vmatpush1.msra.mxu0 0.0
  %1224 = vmatprep.subr.mxu0 0.0
  %1225 = vmatpush1.msra.mxu0 0.0
  %1226 = vmatprep.subr.mxu0 0.0
  %1227 = vmatpush1.msra.mxu0 0.0
  %1228 = vmatprep.subr.mxu0 0.0
  %1229 = vmatpush1.msra.mxu0 0.0
  %1230 = vmatprep.subr.mxu0 0.0
  %1231 = vmatpush1.msra.mxu0 0.0
  %1232 = vmatprep.subr.mxu0 0.0
  %1233 = vmatpush1.msra.mxu0 0.0
  %1234 = vmatprep.subr.mxu0 0.0
  %1235 = vmatpush1.msra.mxu0 0.0
  %1236 = vmatprep.subr.mxu0 0.0
  %1237 = vmatpush1.msra.mxu0 0.0
  %1238 = vmatprep.subr.mxu0 0.0
  %1239 = vmatpush1.msra.mxu0 0.0
  %1240 = vmatprep.subr.mxu0 0.0
  %1241 = vmatpush1.msra.mxu0 0.0
  %1242 = vmatprep.subr.mxu0 0.0
  %1243 = vmatpush1.msra.mxu0 0.0
  %1244 = vmatprep.subr.mxu0 0.0
  %1245 = vmatpush1.msra.mxu0 0.0
  %1246 = vmatprep.subr.mxu0 0.0
  %1247 = vmatpush1.msra.mxu0 0.0
  %1248 = vmatprep.subr.mxu0 0.0
  %1249 = vmatpush1.msra.mxu0 0.0
  %1250 = vmatprep.subr.mxu0 0.0
  %1251 = vmatpush1.msra.mxu0 0.0
  %1252 = vmatprep.subr.mxu0 0.0
  %1253 = vmatpush1.msra.mxu0 0.0
  %1254 = vmatprep.subr.mxu0 0.0
  %1255 = vmatpush1.msra.mxu0 0.0
  %1256 = vmatprep.subr.mxu0 0.0
  %1257 = vmatpush1.msra.mxu0 0.0
  %1258 = vmatprep.subr.mxu0 0.0
  %1259 = vmatpush1.msra.mxu0 0.0
  %1260 = vmatprep.subr.mxu0 0.0
  %1261 = vmatpush1.msra.mxu0 0.0
  %1262 = vmatprep.subr.mxu0 0.0
  %1263 = vmatpush1.msra.mxu0 0.0
  %1264 = vmatprep.mubr.f32.mxu0 0.0
  %1265 = vmatmul.mubr.f32.gmra.mrb[0].mxu0 %v1198
  %v1266 = vpop.f32.mrb[0].mxu0
  %v1267 = vadd.f32 0.0, %v1266
  %v1268 = vpop.f32.mrb[0].mxu0
  %1269 = vdwg.mxu0
  %v1270 = vadd.f32 %v1192, %v1267
  %v1271 = vxor.u32 %v1270, 2147483648
  %v1272 = vmul.f32 %v1271, 1.442695
  %v1273 = vpow.pop %v1272
  %v1274 = vadd.f32 %v1273, 1.0
  %v1275 = vrcp.pop %v1274
  %v1276 = vmul.f32 1.0, %v1275
  %v1277 = vtanh.pop %v1270
  %1279 = vrot.lane.b32.xlu0 %v1190, 32
  %v1280 = vpop.permute.xlu0 %1279
  %v1282 = vmul.f32 %v1276, %v1280
  %1284 = vrot.lane.b32.xlu0 %v1277, 64
  %v1285 = vpop.permute.xlu0 %1284
  %v1287 = vmul.f32 %v1276, %v1285
  %1289 = vrot.lane.b32.xlu0 %v1287, 32
  %v1290 = vpop.permute.xlu0 %1289
  %v1292 = vadd.f32 %v1282, %v1290
  %v1293 = vtanh.pop %v1292
  %1295 = vrot.lane.b32.xlu0 %v1293, 64
  %v1296 = vpop.permute.xlu0 %1295
  %v1298 = vmul.f32 %v1276, %v1296
  %v1299 = vstv %s1188
  %vm1300 = vcmp.lt.s32.totalorder %v1299, %v67
  %v1301 = vsel %vm1300, 1, 0
  %1302 = vset.pattern.permute.xlu0 0
  %1303 = vperm.xlu0 %1302, %v1301
  %v1304 = vpop.permute.xlu0 %1303
  %vm1305 = vcmp.eq.s32.totalorder %v1304, 1
  %v1306 = vsel %vm1305, %v1292, %v1280
  %1308 = vrot.lane.b32.xlu0 %v1306, 96
  %v1309 = vpop.permute.xlu0 %1308
  %1311 = vst.msk [vmem:[#allocation3] sm:$0x3] %vm191, %v1309
  %1312 = vrot.lane.b32.xlu0 %v1189, 96
  %v1313 = vpop.permute.xlu0 %1312
  %v1315 = vsel %vm1305, %v1298, %v1313
  %1317 = vrot.lane.b32.xlu0 %v1315, 32
  %v1318 = vpop.permute.xlu0 %1317
  %1320 = vst.msk [vmem:[#allocation2] sm:$0x3] %vm191, %v1318
  %v1321 = vsel %vm1305, %v1298, 0.0
  %1323 = vrot.lane.b32.xlu0 %v1321, 32
  %v1324 = vpop.permute.xlu0 %1323
  %s1326 = scalar_lea.vmem %s5, 8
  %1327 = vst.msk [vmem:[%s1326] sm:$0x3] %vm191, %v1324
  %s1328 = ssub.s32 3, %s68
  %v1329 = vld [vmem:[#allocation4] sm:$0x3]
  %v1330 = vld [vmem:[#allocation5] sm:$0x3]
  %s1331 = scalar_lea.vmem %s47, 6
  %v1332 = vld [vmem:[%s1331] sm:$0x3]
  %v1333 = vld [vmem:[%s3] sm:$0xff]
  %v1334 = vld [vmem:[%s3 + $0x8] sm:$0xff]
  %v1335 = vld [vmem:[%s3 + $0x10] sm:$0xff]
  %v1336 = vld [vmem:[%s3 + $0x18] sm:$0xff]
  %v1338 = vsel %vm76, %v1329, 0
  %1340 = vmatprep.subr.mxu0 0.0
  %1341 = vmatpush1.msra.mxu0 %v1333
  %1342 = vmatprep.subr.mxu0 0.0
  %1343 = vmatpush1.msra.mxu0 %v1334
  %1344 = vmatprep.subr.mxu0 0.0
  %1345 = vmatpush1.msra.mxu0 %v1335
  %1346 = vmatprep.subr.mxu0 0.0
  %1347 = vmatpush1.msra.mxu0 %v1336
  %1348 = vmatprep.subr.mxu0 0.0
  %1349 = vmatpush1.msra.mxu0 0.0
  %1350 = vmatprep.subr.mxu0 0.0
  %1351 = vmatpush1.msra.mxu0 0.0
  %1352 = vmatprep.subr.mxu0 0.0
  %1353 = vmatpush1.msra.mxu0 0.0
  %1354 = vmatprep.subr.mxu0 0.0
  %1355 = vmatpush1.msra.mxu0 0.0
  %1356 = vmatprep.subr.mxu0 0.0
  %1357 = vmatpush1.msra.mxu0 0.0
  %1358 = vmatprep.subr.mxu0 0.0
  %1359 = vmatpush1.msra.mxu0 0.0
  %1360 = vmatprep.subr.mxu0 0.0
  %1361 = vmatpush1.msra.mxu0 0.0
  %1362 = vmatprep.subr.mxu0 0.0
  %1363 = vmatpush1.msra.mxu0 0.0
  %1364 = vmatprep.subr.mxu0 0.0
  %1365 = vmatpush1.msra.mxu0 0.0
  %1366 = vmatprep.subr.mxu0 0.0
  %1367 = vmatpush1.msra.mxu0 0.0
  %1368 = vmatprep.subr.mxu0 0.0
  %1369 = vmatpush1.msra.mxu0 0.0
  %1370 = vmatprep.subr.mxu0 0.0
  %1371 = vmatpush1.msra.mxu0 0.0
  %1372 = vmatprep.subr.mxu0 0.0
  %1373 = vmatpush1.msra.mxu0 0.0
  %1374 = vmatprep.subr.mxu0 0.0
  %1375 = vmatpush1.msra.mxu0 0.0
  %1376 = vmatprep.subr.mxu0 0.0
  %1377 = vmatpush1.msra.mxu0 0.0
  %1378 = vmatprep.subr.mxu0 0.0
  %1379 = vmatpush1.msra.mxu0 0.0
  %1380 = vmatprep.subr.mxu0 0.0
  %1381 = vmatpush1.msra.mxu0 0.0
  %1382 = vmatprep.subr.mxu0 0.0
  %1383 = vmatpush1.msra.mxu0 0.0
  %1384 = vmatprep.subr.mxu0 0.0
  %1385 = vmatpush1.msra.mxu0 0.0
  %1386 = vmatprep.subr.mxu0 0.0
  %1387 = vmatpush1.msra.mxu0 0.0
  %1388 = vmatprep.subr.mxu0 0.0
  %1389 = vmatpush1.msra.mxu0 0.0
  %1390 = vmatprep.subr.mxu0 0.0
  %1391 = vmatpush1.msra.mxu0 0.0
  %1392 = vmatprep.subr.mxu0 0.0
  %1393 = vmatpush1.msra.mxu0 0.0
  %1394 = vmatprep.subr.mxu0 0.0
  %1395 = vmatpush1.msra.mxu0 0.0
  %1396 = vmatprep.subr.mxu0 0.0
  %1397 = vmatpush1.msra.mxu0 0.0
  %1398 = vmatprep.subr.mxu0 0.0
  %1399 = vmatpush1.msra.mxu0 0.0
  %1400 = vmatprep.subr.mxu0 0.0
  %1401 = vmatpush1.msra.mxu0 0.0
  %1402 = vmatprep.subr.mxu0 0.0
  %1403 = vmatpush1.msra.mxu0 0.0
  %1404 = vmatprep.mubr.f32.mxu0 0.0
  %1405 = vmatmul.mubr.f32.gmra.mrb[0].mxu0 %v1338
  %v1406 = vpop.f32.mrb[0].mxu0
  %v1407 = vadd.f32 0.0, %v1406
  %v1408 = vpop.f32.mrb[0].mxu0
  %1409 = vdwg.mxu0
  %v1410 = vadd.f32 %v1332, %v1407
  %v1411 = vxor.u32 %v1410, 2147483648
  %v1412 = vmul.f32 %v1411, 1.442695
  %v1413 = vpow.pop %v1412
  %v1414 = vadd.f32 %v1413, 1.0
  %v1415 = vrcp.pop %v1414
  %v1416 = vmul.f32 1.0, %v1415
  %v1417 = vtanh.pop %v1410
  %1419 = vrot.lane.b32.xlu0 %v1330, 32
  %v1420 = vpop.permute.xlu0 %1419
  %v1422 = vmul.f32 %v1416, %v1420
  %1424 = vrot.lane.b32.xlu0 %v1417, 64
  %v1425 = vpop.permute.xlu0 %1424
  %v1427 = vmul.f32 %v1416, %v1425
  %1429 = vrot.lane.b32.xlu0 %v1427, 32
  %v1430 = vpop.permute.xlu0 %1429
  %v1432 = vadd.f32 %v1422, %v1430
  %v1433 = vtanh.pop %v1432
  %1435 = vrot.lane.b32.xlu0 %v1433, 64
  %v1436 = vpop.permute.xlu0 %1435
  %v1438 = vmul.f32 %v1416, %v1436
  %v1439 = vstv %s1328
  %vm1440 = vcmp.lt.s32.totalorder %v1439, %v67
  %v1441 = vsel %vm1440, 1, 0
  %1442 = vset.pattern.permute.xlu0 0
  %1443 = vperm.xlu0 %1442, %v1441
  %v1444 = vpop.permute.xlu0 %1443
  %vm1445 = vcmp.eq.s32.totalorder %v1444, 1
  %v1446 = vsel %vm1445, %v1432, %v1420
  %1448 = vrot.lane.b32.xlu0 %v1446, 96
  %v1449 = vpop.permute.xlu0 %1448
  %1451 = vst.msk [vmem:[#allocation5] sm:$0x3] %vm191, %v1449
  %1452 = vrot.lane.b32.xlu0 %v1329, 96
  %v1453 = vpop.permute.xlu0 %1452
  %v1455 = vsel %vm1445, %v1438, %v1453
  %1457 = vrot.lane.b32.xlu0 %v1455, 32
  %v1458 = vpop.permute.xlu0 %1457
  %1460 = vst.msk [vmem:[#allocation4] sm:$0x3] %vm191, %v1458
  %v1461 = vsel %vm1445, %v1438, 0.0
  %1463 = vrot.lane.b32.xlu0 %v1461, 32
  %v1464 = vpop.permute.xlu0 %1463
  %s1466 = scalar_lea.vmem %s55, 6
  %1467 = vst.msk [vmem:[%s1466] sm:$0x3] %vm191, %v1464
  %s1468 = sadd.s32 %s68, 5
  %v1469 = vld [vmem:[#allocation2] sm:$0x3]
  %v1470 = vld [vmem:[#allocation3] sm:$0x3]
  %s1471 = scalar_lea.vmem %s0, 10
  %v1472 = vld [vmem:[%s1471] sm:$0x3]
  %v1473 = vld [vmem:[%s2] sm:$0xff]
  %v1474 = vld [vmem:[%s2 + $0x8] sm:$0xff]
  %v1475 = vld [vmem:[%s2 + $0x10] sm:$0xff]
  %v1476 = vld [vmem:[%s2 + $0x18] sm:$0xff]
  %v1478 = vsel %vm76, %v1469, 0
  %1480 = vmatprep.subr.mxu0 0.0
  %1481 = vmatpush1.msra.mxu0 %v1473
  %1482 = vmatprep.subr.mxu0 0.0
  %1483 = vmatpush1.msra.mxu0 %v1474
  %1484 = vmatprep.subr.mxu0 0.0
  %1485 = vmatpush1.msra.mxu0 %v1475
  %1486 = vmatprep.subr.mxu0 0.0
  %1487 = vmatpush1.msra.mxu0 %v1476
  %1488 = vmatprep.subr.mxu0 0.0
  %1489 = vmatpush1.msra.mxu0 0.0
  %1490 = vmatprep.subr.mxu0 0.0
  %1491 = vmatpush1.msra.mxu0 0.0
  %1492 = vmatprep.subr.mxu0 0.0
  %1493 = vmatpush1.msra.mxu0 0.0
  %1494 = vmatprep.subr.mxu0 0.0
  %1495 = vmatpush1.msra.mxu0 0.0
  %1496 = vmatprep.subr.mxu0 0.0
  %1497 = vmatpush1.msra.mxu0 0.0
  %1498 = vmatprep.subr.mxu0 0.0
  %1499 = vmatpush1.msra.mxu0 0.0
  %1500 = vmatprep.subr.mxu0 0.0
  %1501 = vmatpush1.msra.mxu0 0.0
  %1502 = vmatprep.subr.mxu0 0.0
  %1503 = vmatpush1.msra.mxu0 0.0
  %1504 = vmatprep.subr.mxu0 0.0
  %1505 = vmatpush1.msra.mxu0 0.0
  %1506 = vmatprep.subr.mxu0 0.0
  %1507 = vmatpush1.msra.mxu0 0.0
  %1508 = vmatprep.subr.mxu0 0.0
  %1509 = vmatpush1.msra.mxu0 0.0
  %1510 = vmatprep.subr.mxu0 0.0
  %1511 = vmatpush1.msra.mxu0 0.0
  %1512 = vmatprep.subr.mxu0 0.0
  %1513 = vmatpush1.msra.mxu0 0.0
  %1514 = vmatprep.subr.mxu0 0.0
  %1515 = vmatpush1.msra.mxu0 0.0
  %1516 = vmatprep.subr.mxu0 0.0
  %1517 = vmatpush1.msra.mxu0 0.0
  %1518 = vmatprep.subr.mxu0 0.0
  %1519 = vmatpush1.msra.mxu0 0.0
  %1520 = vmatprep.subr.mxu0 0.0
  %1521 = vmatpush1.msra.mxu0 0.0
  %1522 = vmatprep.subr.mxu0 0.0
  %1523 = vmatpush1.msra.mxu0 0.0
  %1524 = vmatprep.subr.mxu0 0.0
  %1525 = vmatpush1.msra.mxu0 0.0
  %1526 = vmatprep.subr.mxu0 0.0
  %1527 = vmatpush1.msra.mxu0 0.0
  %1528 = vmatprep.subr.mxu0 0.0
  %1529 = vmatpush1.msra.mxu0 0.0
  %1530 = vmatprep.subr.mxu0 0.0
  %1531 = vmatpush1.msra.mxu0 0.0
  %1532 = vmatprep.subr.mxu0 0.0
  %1533 = vmatpush1.msra.mxu0 0.0
  %1534 = vmatprep.subr.mxu0 0.0
  %1535 = vmatpush1.msra.mxu0 0.0
  %1536 = vmatprep.subr.mxu0 0.0
  %1537 = vmatpush1.msra.mxu0 0.0
  %1538 = vmatprep.subr.mxu0 0.0
  %1539 = vmatpush1.msra.mxu0 0.0
  %1540 = vmatprep.subr.mxu0 0.0
  %1541 = vmatpush1.msra.mxu0 0.0
  %1542 = vmatprep.subr.mxu0 0.0
  %1543 = vmatpush1.msra.mxu0 0.0
  %1544 = vmatprep.mubr.f32.mxu0 0.0
  %1545 = vmatmul.mubr.f32.gmra.mrb[0].mxu0 %v1478
  %v1546 = vpop.f32.mrb[0].mxu0
  %v1547 = vadd.f32 0.0, %v1546
  %v1548 = vpop.f32.mrb[0].mxu0
  %1549 = vdwg.mxu0
  %v1550 = vadd.f32 %v1472, %v1547
  %v1551 = vxor.u32 %v1550, 2147483648
  %v1552 = vmul.f32 %v1551, 1.442695
  %v1553 = vpow.pop %v1552
  %v1554 = vadd.f32 %v1553, 1.0
  %v1555 = vrcp.pop %v1554
  %v1556 = vmul.f32 1.0, %v1555
  %v1557 = vtanh.pop %v1550
  %1559 = vrot.lane.b32.xlu0 %v1470, 32
  %v1560 = vpop.permute.xlu0 %1559
  %v1562 = vmul.f32 %v1556, %v1560
  %1564 = vrot.lane.b32.xlu0 %v1557, 64
  %v1565 = vpop.permute.xlu0 %1564
  %v1567 = vmul.f32 %v1556, %v1565
  %1569 = vrot.lane.b32.xlu0 %v1567, 32
  %v1570 = vpop.permute.xlu0 %1569
  %v1572 = vadd.f32 %v1562, %v1570
  %v1573 = vtanh.pop %v1572
  %1575 = vrot.lane.b32.xlu0 %v1573, 64
  %v1576 = vpop.permute.xlu0 %1575
  %v1578 = vmul.f32 %v1556, %v1576
  %v1579 = vstv %s1468
  %vm1580 = vcmp.lt.s32.totalorder %v1579, %v67
  %v1581 = vsel %vm1580, 1, 0
  %1582 = vset.pattern.permute.xlu0 0
  %1583 = vperm.xlu0 %1582, %v1581
  %v1584 = vpop.permute.xlu0 %1583
  %vm1585 = vcmp.eq.s32.totalorder %v1584, 1
  %v1586 = vsel %vm1585, %v1572, %v1560
  %1588 = vrot.lane.b32.xlu0 %v1586, 96
  %v1589 = vpop.permute.xlu0 %1588
  %1591 = vst.msk [vmem:[#allocation3] sm:$0x3] %vm191, %v1589
  %1592 = vrot.lane.b32.xlu0 %v1469, 96
  %v1593 = vpop.permute.xlu0 %1592
  %v1595 = vsel %vm1585, %v1578, %v1593
  %1597 = vrot.lane.b32.xlu0 %v1595, 32
  %v1598 = vpop.permute.xlu0 %1597
  %1600 = vst.msk [vmem:[#allocation2] sm:$0x3] %vm191, %v1598
  %v1601 = vsel %vm1585, %v1578, 0.0
  %1603 = vrot.lane.b32.xlu0 %v1601, 32
  %v1604 = vpop.permute.xlu0 %1603
  %s1606 = scalar_lea.vmem %s5, 10
  %1607 = vst.msk [vmem:[%s1606] sm:$0x3] %vm191, %v1604
  %s1608 = ssub.s32 2, %s68
  %v1609 = vld [vmem:[#allocation4] sm:$0x3]
  %v1610 = vld [vmem:[#allocation5] sm:$0x3]
  %s1611 = scalar_lea.vmem %s47, 4
  %v1612 = vld [vmem:[%s1611] sm:$0x3]
  %v1613 = vld [vmem:[%s3] sm:$0xff]
  %v1614 = vld [vmem:[%s3 + $0x8] sm:$0xff]
  %v1615 = vld [vmem:[%s3 + $0x10] sm:$0xff]
  %v1616 = vld [vmem:[%s3 + $0x18] sm:$0xff]
  %v1618 = vsel %vm76, %v1609, 0
  %1620 = vmatprep.subr.mxu0 0.0
  %1621 = vmatpush1.msra.mxu0 %v1613
  %1622 = vmatprep.subr.mxu0 0.0
  %1623 = vmatpush1.msra.mxu0 %v1614
  %1624 = vmatprep.subr.mxu0 0.0
  %1625 = vmatpush1.msra.mxu0 %v1615
  %1626 = vmatprep.subr.mxu0 0.0
  %1627 = vmatpush1.msra.mxu0 %v1616
  %1628 = vmatprep.subr.mxu0 0.0
  %1629 = vmatpush1.msra.mxu0 0.0
  %1630 = vmatprep.subr.mxu0 0.0
  %1631 = vmatpush1.msra.mxu0 0.0
  %1632 = vmatprep.subr.mxu0 0.0
  %1633 = vmatpush1.msra.mxu0 0.0
  %1634 = vmatprep.subr.mxu0 0.0
  %1635 = vmatpush1.msra.mxu0 0.0
  %1636 = vmatprep.subr.mxu0 0.0
  %1637 = vmatpush1.msra.mxu0 0.0
  %1638 = vmatprep.subr.mxu0 0.0
  %1639 = vmatpush1.msra.mxu0 0.0
  %1640 = vmatprep.subr.mxu0 0.0
  %1641 = vmatpush1.msra.mxu0 0.0
  %1642 = vmatprep.subr.mxu0 0.0
  %1643 = vmatpush1.msra.mxu0 0.0
  %1644 = vmatprep.subr.mxu0 0.0
  %1645 = vmatpush1.msra.mxu0 0.0
  %1646 = vmatprep.subr.mxu0 0.0
  %1647 = vmatpush1.msra.mxu0 0.0
  %1648 = vmatprep.subr.mxu0 0.0
  %1649 = vmatpush1.msra.mxu0 0.0
  %1650 = vmatprep.subr.mxu0 0.0
  %1651 = vmatpush1.msra.mxu0 0.0
  %1652 = vmatprep.subr.mxu0 0.0
  %1653 = vmatpush1.msra.mxu0 0.0
  %1654 = vmatprep.subr.mxu0 0.0
  %1655 = vmatpush1.msra.mxu0 0.0
  %1656 = vmatprep.subr.mxu0 0.0
  %1657 = vmatpush1.msra.mxu0 0.0
  %1658 = vmatprep.subr.mxu0 0.0
  %1659 = vmatpush1.msra.mxu0 0.0
  %1660 = vmatprep.subr.mxu0 0.0
  %1661 = vmatpush1.msra.mxu0 0.0
  %1662 = vmatprep.subr.mxu0 0.0
  %1663 = vmatpush1.msra.mxu0 0.0
  %1664 = vmatprep.subr.mxu0 0.0
  %1665 = vmatpush1.msra.mxu0 0.0
  %1666 = vmatprep.subr.mxu0 0.0
  %1667 = vmatpush1.msra.mxu0 0.0
  %1668 = vmatprep.subr.mxu0 0.0
  %1669 = vmatpush1.msra.mxu0 0.0
  %1670 = vmatprep.subr.mxu0 0.0
  %1671 = vmatpush1.msra.mxu0 0.0
  %1672 = vmatprep.subr.mxu0 0.0
  %1673 = vmatpush1.msra.mxu0 0.0
  %1674 = vmatprep.subr.mxu0 0.0
  %1675 = vmatpush1.msra.mxu0 0.0
  %1676 = vmatprep.subr.mxu0 0.0
  %1677 = vmatpush1.msra.mxu0 0.0
  %1678 = vmatprep.subr.mxu0 0.0
  %1679 = vmatpush1.msra.mxu0 0.0
  %1680 = vmatprep.subr.mxu0 0.0
  %1681 = vmatpush1.msra.mxu0 0.0
  %1682 = vmatprep.subr.mxu0 0.0
  %1683 = vmatpush1.msra.mxu0 0.0
  %1684 = vmatprep.mubr.f32.mxu0 0.0
  %1685 = vmatmul.mubr.f32.gmra.mrb[0].mxu0 %v1618
  %v1686 = vpop.f32.mrb[0].mxu0
  %v1687 = vadd.f32 0.0, %v1686
  %v1688 = vpop.f32.mrb[0].mxu0
  %1689 = vdwg.mxu0
  %v1690 = vadd.f32 %v1612, %v1687
  %v1691 = vxor.u32 %v1690, 2147483648
  %v1692 = vmul.f32 %v1691, 1.442695
  %v1693 = vpow.pop %v1692
  %v1694 = vadd.f32 %v1693, 1.0
  %v1695 = vrcp.pop %v1694
  %v1696 = vmul.f32 1.0, %v1695
  %v1697 = vtanh.pop %v1690
  %1699 = vrot.lane.b32.xlu0 %v1610, 32
  %v1700 = vpop.permute.xlu0 %1699
  %v1702 = vmul.f32 %v1696, %v1700
  %1704 = vrot.lane.b32.xlu0 %v1697, 64
  %v1705 = vpop.permute.xlu0 %1704
  %v1707 = vmul.f32 %v1696, %v1705
  %1709 = vrot.lane.b32.xlu0 %v1707, 32
  %v1710 = vpop.permute.xlu0 %1709
  %v1712 = vadd.f32 %v1702, %v1710
  %v1713 = vtanh.pop %v1712
  %1715 = vrot.lane.b32.xlu0 %v1713, 64
  %v1716 = vpop.permute.xlu0 %1715
  %v1718 = vmul.f32 %v1696, %v1716
  %v1719 = vstv %s1608
  %vm1720 = vcmp.lt.s32.totalorder %v1719, %v67
  %v1721 = vsel %vm1720, 1, 0
  %1722 = vset.pattern.permute.xlu0 0
  %1723 = vperm.xlu0 %1722, %v1721
  %v1724 = vpop.permute.xlu0 %1723
  %vm1725 = vcmp.eq.s32.totalorder %v1724, 1
  %v1726 = vsel %vm1725, %v1712, %v1700
  %1728 = vrot.lane.b32.xlu0 %v1726, 96
  %v1729 = vpop.permute.xlu0 %1728
  %1731 = vst.msk [vmem:[#allocation5] sm:$0x3] %vm191, %v1729
  %1732 = vrot.lane.b32.xlu0 %v1609, 96
  %v1733 = vpop.permute.xlu0 %1732
  %v1735 = vsel %vm1725, %v1718, %v1733
  %1737 = vrot.lane.b32.xlu0 %v1735, 32
  %v1738 = vpop.permute.xlu0 %1737
  %1740 = vst.msk [vmem:[#allocation4] sm:$0x3] %vm191, %v1738
  %v1741 = vsel %vm1725, %v1718, 0.0
  %1743 = vrot.lane.b32.xlu0 %v1741, 32
  %v1744 = vpop.permute.xlu0 %1743
  %s1746 = scalar_lea.vmem %s55, 4
  %1747 = vst.msk [vmem:[%s1746] sm:$0x3] %vm191, %v1744
  %s1748 = sadd.s32 %s68, 6
  %v1749 = vld [vmem:[#allocation2] sm:$0x3]
  %v1750 = vld [vmem:[#allocation3] sm:$0x3]
  %s1751 = scalar_lea.vmem %s0, 12
  %v1752 = vld [vmem:[%s1751] sm:$0x3]
  %v1753 = vld [vmem:[%s2] sm:$0xff]
  %v1754 = vld [vmem:[%s2 + $0x8] sm:$0xff]
  %v1755 = vld [vmem:[%s2 + $0x10] sm:$0xff]
  %v1756 = vld [vmem:[%s2 + $0x18] sm:$0xff]
  %v1758 = vsel %vm76, %v1749, 0
  %1760 = vmatprep.subr.mxu0 0.0
  %1761 = vmatpush1.msra.mxu0 %v1753
  %1762 = vmatprep.subr.mxu0 0.0
  %1763 = vmatpush1.msra.mxu0 %v1754
  %1764 = vmatprep.subr.mxu0 0.0
  %1765 = vmatpush1.msra.mxu0 %v1755
  %1766 = vmatprep.subr.mxu0 0.0
  %1767 = vmatpush1.msra.mxu0 %v1756
  %1768 = vmatprep.subr.mxu0 0.0
  %1769 = vmatpush1.msra.mxu0 0.0
  %1770 = vmatprep.subr.mxu0 0.0
  %1771 = vmatpush1.msra.mxu0 0.0
  %1772 = vmatprep.subr.mxu0 0.0
  %1773 = vmatpush1.msra.mxu0 0.0
  %1774 = vmatprep.subr.mxu0 0.0
  %1775 = vmatpush1.msra.mxu0 0.0
  %1776 = vmatprep.subr.mxu0 0.0
  %1777 = vmatpush1.msra.mxu0 0.0
  %1778 = vmatprep.subr.mxu0 0.0
  %1779 = vmatpush1.msra.mxu0 0.0
  %1780 = vmatprep.subr.mxu0 0.0
  %1781 = vmatpush1.msra.mxu0 0.0
  %1782 = vmatprep.subr.mxu0 0.0
  %1783 = vmatpush1.msra.mxu0 0.0
  %1784 = vmatprep.subr.mxu0 0.0
  %1785 = vmatpush1.msra.mxu0 0.0
  %1786 = vmatprep.subr.mxu0 0.0
  %1787 = vmatpush1.msra.mxu0 0.0
  %1788 = vmatprep.subr.mxu0 0.0
  %1789 = vmatpush1.msra.mxu0 0.0
  %1790 = vmatprep.subr.mxu0 0.0
  %1791 = vmatpush1.msra.mxu0 0.0
  %1792 = vmatprep.subr.mxu0 0.0
  %1793 = vmatpush1.msra.mxu0 0.0
  %1794 = vmatprep.subr.mxu0 0.0
  %1795 = vmatpush1.msra.mxu0 0.0
  %1796 = vmatprep.subr.mxu0 0.0
  %1797 = vmatpush1.msra.mxu0 0.0
  %1798 = vmatprep.subr.mxu0 0.0
  %1799 = vmatpush1.msra.mxu0 0.0
  %1800 = vmatprep.subr.mxu0 0.0
  %1801 = vmatpush1.msra.mxu0 0.0
  %1802 = vmatprep.subr.mxu0 0.0
  %1803 = vmatpush1.msra.mxu0 0.0
  %1804 = vmatprep.subr.mxu0 0.0
  %1805 = vmatpush1.msra.mxu0 0.0
  %1806 = vmatprep.subr.mxu0 0.0
  %1807 = vmatpush1.msra.mxu0 0.0
  %1808 = vmatprep.subr.mxu0 0.0
  %1809 = vmatpush1.msra.mxu0 0.0
  %1810 = vmatprep.subr.mxu0 0.0
  %1811 = vmatpush1.msra.mxu0 0.0
  %1812 = vmatprep.subr.mxu0 0.0
  %1813 = vmatpush1.msra.mxu0 0.0
  %1814 = vmatprep.subr.mxu0 0.0
  %1815 = vmatpush1.msra.mxu0 0.0
  %1816 = vmatprep.subr.mxu0 0.0
  %1817 = vmatpush1.msra.mxu0 0.0
  %1818 = vmatprep.subr.mxu0 0.0
  %1819 = vmatpush1.msra.mxu0 0.0
  %1820 = vmatprep.subr.mxu0 0.0
  %1821 = vmatpush1.msra.mxu0 0.0
  %1822 = vmatprep.subr.mxu0 0.0
  %1823 = vmatpush1.msra.mxu0 0.0
  %1824 = vmatprep.mubr.f32.mxu0 0.0
  %1825 = vmatmul.mubr.f32.gmra.mrb[0].mxu0 %v1758
  %v1826 = vpop.f32.mrb[0].mxu0
  %v1827 = vadd.f32 0.0, %v1826
  %v1828 = vpop.f32.mrb[0].mxu0
  %1829 = vdwg.mxu0
  %v1830 = vadd.f32 %v1752, %v1827
  %v1831 = vxor.u32 %v1830, 2147483648
  %v1832 = vmul.f32 %v1831, 1.442695
  %v1833 = vpow.pop %v1832
  %v1834 = vadd.f32 %v1833, 1.0
  %v1835 = vrcp.pop %v1834
  %v1836 = vmul.f32 1.0, %v1835
  %v1837 = vtanh.pop %v1830
  %1839 = vrot.lane.b32.xlu0 %v1750, 32
  %v1840 = vpop.permute.xlu0 %1839
  %v1842 = vmul.f32 %v1836, %v1840
  %1844 = vrot.lane.b32.xlu0 %v1837, 64
  %v1845 = vpop.permute.xlu0 %1844
  %v1847 = vmul.f32 %v1836, %v1845
  %1849 = vrot.lane.b32.xlu0 %v1847, 32
  %v1850 = vpop.permute.xlu0 %1849
  %v1852 = vadd.f32 %v1842, %v1850
  %v1853 = vtanh.pop %v1852
  %1855 = vrot.lane.b32.xlu0 %v1853, 64
  %v1856 = vpop.permute.xlu0 %1855
  %v1858 = vmul.f32 %v1836, %v1856
  %v1859 = vstv %s1748
  %vm1860 = vcmp.lt.s32.totalorder %v1859, %v67
  %v1861 = vsel %vm1860, 1, 0
  %1862 = vset.pattern.permute.xlu0 0
  %1863 = vperm.xlu0 %1862, %v1861
  %v1864 = vpop.permute.xlu0 %1863
  %vm1865 = vcmp.eq.s32.totalorder %v1864, 1
  %v1866 = vsel %vm1865, %v1852, %v1840
  %1868 = vrot.lane.b32.xlu0 %v1866, 96
  %v1869 = vpop.permute.xlu0 %1868
  %1871 = vst.msk [vmem:[#allocation3] sm:$0x3] %vm191, %v1869
  %1872 = vrot.lane.b32.xlu0 %v1749, 96
  %v1873 = vpop.permute.xlu0 %1872
  %v1875 = vsel %vm1865, %v1858, %v1873
  %1877 = vrot.lane.b32.xlu0 %v1875, 32
  %v1878 = vpop.permute.xlu0 %1877
  %1880 = vst.msk [vmem:[#allocation2] sm:$0x3] %vm191, %v1878
  %v1881 = vsel %vm1865, %v1858, 0.0
  %1883 = vrot.lane.b32.xlu0 %v1881, 32
  %v1884 = vpop.permute.xlu0 %1883
  %s1886 = scalar_lea.vmem %s5, 12
  %1887 = vst.msk [vmem:[%s1886] sm:$0x3] %vm191, %v1884
  %s1888 = ssub.s32 1, %s68
  %v1889 = vld [vmem:[#allocation4] sm:$0x3]
  %v1890 = vld [vmem:[#allocation5] sm:$0x3]
  %s1891 = scalar_lea.vmem %s47, 2
  %v1892 = vld [vmem:[%s1891] sm:$0x3]
  %v1893 = vld [vmem:[%s3] sm:$0xff]
  %v1894 = vld [vmem:[%s3 + $0x8] sm:$0xff]
  %v1895 = vld [vmem:[%s3 + $0x10] sm:$0xff]
  %v1896 = vld [vmem:[%s3 + $0x18] sm:$0xff]
  %v1898 = vsel %vm76, %v1889, 0
  %1900 = vmatprep.subr.mxu0 0.0
  %1901 = vmatpush1.msra.mxu0 %v1893
  %1902 = vmatprep.subr.mxu0 0.0
  %1903 = vmatpush1.msra.mxu0 %v1894
  %1904 = vmatprep.subr.mxu0 0.0
  %1905 = vmatpush1.msra.mxu0 %v1895
  %1906 = vmatprep.subr.mxu0 0.0
  %1907 = vmatpush1.msra.mxu0 %v1896
  %1908 = vmatprep.subr.mxu0 0.0
  %1909 = vmatpush1.msra.mxu0 0.0
  %1910 = vmatprep.subr.mxu0 0.0
  %1911 = vmatpush1.msra.mxu0 0.0
  %1912 = vmatprep.subr.mxu0 0.0
  %1913 = vmatpush1.msra.mxu0 0.0
  %1914 = vmatprep.subr.mxu0 0.0
  %1915 = vmatpush1.msra.mxu0 0.0
  %1916 = vmatprep.subr.mxu0 0.0
  %1917 = vmatpush1.msra.mxu0 0.0
  %1918 = vmatprep.subr.mxu0 0.0
  %1919 = vmatpush1.msra.mxu0 0.0
  %1920 = vmatprep.subr.mxu0 0.0
  %1921 = vmatpush1.msra.mxu0 0.0
  %1922 = vmatprep.subr.mxu0 0.0
  %1923 = vmatpush1.msra.mxu0 0.0
  %1924 = vmatprep.subr.mxu0 0.0
  %1925 = vmatpush1.msra.mxu0 0.0
  %1926 = vmatprep.subr.mxu0 0.0
  %1927 = vmatpush1.msra.mxu0 0.0
  %1928 = vmatprep.subr.mxu0 0.0
  %1929 = vmatpush1.msra.mxu0 0.0
  %1930 = vmatprep.subr.mxu0 0.0
  %1931 = vmatpush1.msra.mxu0 0.0
  %1932 = vmatprep.subr.mxu0 0.0
  %1933 = vmatpush1.msra.mxu0 0.0
  %1934 = vmatprep.subr.mxu0 0.0
  %1935 = vmatpush1.msra.mxu0 0.0
  %1936 = vmatprep.subr.mxu0 0.0
  %1937 = vmatpush1.msra.mxu0 0.0
  %1938 = vmatprep.subr.mxu0 0.0
  %1939 = vmatpush1.msra.mxu0 0.0
  %1940 = vmatprep.subr.mxu0 0.0
  %1941 = vmatpush1.msra.mxu0 0.0
  %1942 = vmatprep.subr.mxu0 0.0
  %1943 = vmatpush1.msra.mxu0 0.0
  %1944 = vmatprep.subr.mxu0 0.0
  %1945 = vmatpush1.msra.mxu0 0.0
  %1946 = vmatprep.subr.mxu0 0.0
  %1947 = vmatpush1.msra.mxu0 0.0
  %1948 = vmatprep.subr.mxu0 0.0
  %1949 = vmatpush1.msra.mxu0 0.0
  %1950 = vmatprep.subr.mxu0 0.0
  %1951 = vmatpush1.msra.mxu0 0.0
  %1952 = vmatprep.subr.mxu0 0.0
  %1953 = vmatpush1.msra.mxu0 0.0
  %1954 = vmatprep.subr.mxu0 0.0
  %1955 = vmatpush1.msra.mxu0 0.0
  %1956 = vmatprep.subr.mxu0 0.0
  %1957 = vmatpush1.msra.mxu0 0.0
  %1958 = vmatprep.subr.mxu0 0.0
  %1959 = vmatpush1.msra.mxu0 0.0
  %1960 = vmatprep.subr.mxu0 0.0
  %1961 = vmatpush1.msra.mxu0 0.0
  %1962 = vmatprep.subr.mxu0 0.0
  %1963 = vmatpush1.msra.mxu0 0.0
  %1964 = vmatprep.mubr.f32.mxu0 0.0
  %1965 = vmatmul.mubr.f32.gmra.mrb[0].mxu0 %v1898
  %v1966 = vpop.f32.mrb[0].mxu0
  %v1967 = vadd.f32 0.0, %v1966
  %v1968 = vpop.f32.mrb[0].mxu0
  %1969 = vdwg.mxu0
  %v1970 = vadd.f32 %v1892, %v1967
  %v1971 = vxor.u32 %v1970, 2147483648
  %v1972 = vmul.f32 %v1971, 1.442695
  %v1973 = vpow.pop %v1972
  %v1974 = vadd.f32 %v1973, 1.0
  %v1975 = vrcp.pop %v1974
  %v1976 = vmul.f32 1.0, %v1975
  %v1977 = vtanh.pop %v1970
  %1979 = vrot.lane.b32.xlu0 %v1890, 32
  %v1980 = vpop.permute.xlu0 %1979
  %v1982 = vmul.f32 %v1976, %v1980
  %1984 = vrot.lane.b32.xlu0 %v1977, 64
  %v1985 = vpop.permute.xlu0 %1984
  %v1987 = vmul.f32 %v1976, %v1985
  %1989 = vrot.lane.b32.xlu0 %v1987, 32
  %v1990 = vpop.permute.xlu0 %1989
  %v1992 = vadd.f32 %v1982, %v1990
  %v1993 = vtanh.pop %v1992
  %1995 = vrot.lane.b32.xlu0 %v1993, 64
  %v1996 = vpop.permute.xlu0 %1995
  %v1998 = vmul.f32 %v1976, %v1996
  %v1999 = vstv %s1888
  %vm2000 = vcmp.lt.s32.totalorder %v1999, %v67
  %v2001 = vsel %vm2000, 1, 0
  %2002 = vset.pattern.permute.xlu0 0
  %2003 = vperm.xlu0 %2002, %v2001
  %v2004 = vpop.permute.xlu0 %2003
  %vm2005 = vcmp.eq.s32.totalorder %v2004, 1
  %v2006 = vsel %vm2005, %v1992, %v1980
  %2008 = vrot.lane.b32.xlu0 %v2006, 96
  %v2009 = vpop.permute.xlu0 %2008
  %2011 = vst.msk [vmem:[#allocation5] sm:$0x3] %vm191, %v2009
  %2012 = vrot.lane.b32.xlu0 %v1889, 96
  %v2013 = vpop.permute.xlu0 %2012
  %v2015 = vsel %vm2005, %v1998, %v2013
  %2017 = vrot.lane.b32.xlu0 %v2015, 32
  %v2018 = vpop.permute.xlu0 %2017
  %2020 = vst.msk [vmem:[#allocation4] sm:$0x3] %vm191, %v2018
  %v2021 = vsel %vm2005, %v1998, 0.0
  %2023 = vrot.lane.b32.xlu0 %v2021, 32
  %v2024 = vpop.permute.xlu0 %2023
  %s2026 = scalar_lea.vmem %s55, 2
  %2027 = vst.msk [vmem:[%s2026] sm:$0x3] %vm191, %v2024
  %s2028 = sadd.s32 %s68, 7
  %v2029 = vld [vmem:[#allocation2] sm:$0x3]
  %v2030 = vld [vmem:[#allocation3] sm:$0x3]
  %s2031 = scalar_lea.vmem %s0, 14
  %v2032 = vld [vmem:[%s2031] sm:$0x3]
  %v2033 = vld [vmem:[%s2] sm:$0xff]
  %v2034 = vld [vmem:[%s2 + $0x8] sm:$0xff]
  %v2035 = vld [vmem:[%s2 + $0x10] sm:$0xff]
  %v2036 = vld [vmem:[%s2 + $0x18] sm:$0xff]
  %v2038 = vsel %vm76, %v2029, 0
  %2040 = vmatprep.subr.mxu0 0.0
  %2041 = vmatpush1.msra.mxu0 %v2033
  %2042 = vmatprep.subr.mxu0 0.0
  %2043 = vmatpush1.msra.mxu0 %v2034
  %2044 = vmatprep.subr.mxu0 0.0
  %2045 = vmatpush1.msra.mxu0 %v2035
  %2046 = vmatprep.subr.mxu0 0.0
  %2047 = vmatpush1.msra.mxu0 %v2036
  %2048 = vmatprep.subr.mxu0 0.0
  %2049 = vmatpush1.msra.mxu0 0.0
  %2050 = vmatprep.subr.mxu0 0.0
  %2051 = vmatpush1.msra.mxu0 0.0
  %2052 = vmatprep.subr.mxu0 0.0
  %2053 = vmatpush1.msra.mxu0 0.0
  %2054 = vmatprep.subr.mxu0 0.0
  %2055 = vmatpush1.msra.mxu0 0.0
  %2056 = vmatprep.subr.mxu0 0.0
  %2057 = vmatpush1.msra.mxu0 0.0
  %2058 = vmatprep.subr.mxu0 0.0
  %2059 = vmatpush1.msra.mxu0 0.0
  %2060 = vmatprep.subr.mxu0 0.0
  %2061 = vmatpush1.msra.mxu0 0.0
  %2062 = vmatprep.subr.mxu0 0.0
  %2063 = vmatpush1.msra.mxu0 0.0
  %2064 = vmatprep.subr.mxu0 0.0
  %2065 = vmatpush1.msra.mxu0 0.0
  %2066 = vmatprep.subr.mxu0 0.0
  %2067 = vmatpush1.msra.mxu0 0.0
  %2068 = vmatprep.subr.mxu0 0.0
  %2069 = vmatpush1.msra.mxu0 0.0
  %2070 = vmatprep.subr.mxu0 0.0
  %2071 = vmatpush1.msra.mxu0 0.0
  %2072 = vmatprep.subr.mxu0 0.0
  %2073 = vmatpush1.msra.mxu0 0.0
  %2074 = vmatprep.subr.mxu0 0.0
  %2075 = vmatpush1.msra.mxu0 0.0
  %2076 = vmatprep.subr.mxu0 0.0
  %2077 = vmatpush1.msra.mxu0 0.0
  %2078 = vmatprep.subr.mxu0 0.0
  %2079 = vmatpush1.msra.mxu0 0.0
  %2080 = vmatprep.subr.mxu0 0.0
  %2081 = vmatpush1.msra.mxu0 0.0
  %2082 = vmatprep.subr.mxu0 0.0
  %2083 = vmatpush1.msra.mxu0 0.0
  %2084 = vmatprep.subr.mxu0 0.0
  %2085 = vmatpush1.msra.mxu0 0.0
  %2086 = vmatprep.subr.mxu0 0.0
  %2087 = vmatpush1.msra.mxu0 0.0
  %2088 = vmatprep.subr.mxu0 0.0
  %2089 = vmatpush1.msra.mxu0 0.0
  %2090 = vmatprep.subr.mxu0 0.0
  %2091 = vmatpush1.msra.mxu0 0.0
  %2092 = vmatprep.subr.mxu0 0.0
  %2093 = vmatpush1.msra.mxu0 0.0
  %2094 = vmatprep.subr.mxu0 0.0
  %2095 = vmatpush1.msra.mxu0 0.0
  %2096 = vmatprep.subr.mxu0 0.0
  %2097 = vmatpush1.msra.mxu0 0.0
  %2098 = vmatprep.subr.mxu0 0.0
  %2099 = vmatpush1.msra.mxu0 0.0
  %2100 = vmatprep.subr.mxu0 0.0
  %2101 = vmatpush1.msra.mxu0 0.0
  %2102 = vmatprep.subr.mxu0 0.0
  %2103 = vmatpush1.msra.mxu0 0.0
  %2104 = vmatprep.mubr.f32.mxu0 0.0
  %2105 = vmatmul.mubr.f32.gmra.mrb[0].mxu0 %v2038
  %v2106 = vpop.f32.mrb[0].mxu0
  %v2107 = vadd.f32 0.0, %v2106
  %v2108 = vpop.f32.mrb[0].mxu0
  %2109 = vdwg.mxu0
  %v2110 = vadd.f32 %v2032, %v2107
  %v2111 = vxor.u32 %v2110, 2147483648
  %v2112 = vmul.f32 %v2111, 1.442695
  %v2113 = vpow.pop %v2112
  %v2114 = vadd.f32 %v2113, 1.0
  %v2115 = vrcp.pop %v2114
  %v2116 = vmul.f32 1.0, %v2115
  %v2117 = vtanh.pop %v2110
  %2119 = vrot.lane.b32.xlu0 %v2030, 32
  %v2120 = vpop.permute.xlu0 %2119
  %v2122 = vmul.f32 %v2116, %v2120
  %2124 = vrot.lane.b32.xlu0 %v2117, 64
  %v2125 = vpop.permute.xlu0 %2124
  %v2127 = vmul.f32 %v2116, %v2125
  %2129 = vrot.lane.b32.xlu0 %v2127, 32
  %v2130 = vpop.permute.xlu0 %2129
  %v2132 = vadd.f32 %v2122, %v2130
  %v2133 = vtanh.pop %v2132
  %2135 = vrot.lane.b32.xlu0 %v2133, 64
  %v2136 = vpop.permute.xlu0 %2135
  %v2138 = vmul.f32 %v2116, %v2136
  %v2139 = vstv %s2028
  %vm2140 = vcmp.lt.s32.totalorder %v2139, %v67
  %v2141 = vsel %vm2140, 1, 0
  %2142 = vset.pattern.permute.xlu0 0
  %2143 = vperm.xlu0 %2142, %v2141
  %v2144 = vpop.permute.xlu0 %2143
  %vm2145 = vcmp.eq.s32.totalorder %v2144, 1
  %v2146 = vsel %vm2145, %v2132, %v2120
  %2148 = vrot.lane.b32.xlu0 %v2146, 96
  %v2149 = vpop.permute.xlu0 %2148
  %2151 = vst.msk [vmem:[#allocation3] sm:$0x3] %vm191, %v2149
  %2152 = vrot.lane.b32.xlu0 %v2029, 96
  %v2153 = vpop.permute.xlu0 %2152
  %v2155 = vsel %vm2145, %v2138, %v2153
  %2157 = vrot.lane.b32.xlu0 %v2155, 32
  %v2158 = vpop.permute.xlu0 %2157
  %2160 = vst.msk [vmem:[#allocation2] sm:$0x3] %vm191, %v2158
  %v2161 = vsel %vm2145, %v2138, 0.0
  %2163 = vrot.lane.b32.xlu0 %v2161, 32
  %v2164 = vpop.permute.xlu0 %2163
  %s2166 = scalar_lea.vmem %s5, 14
  %2167 = vst.msk [vmem:[%s2166] sm:$0x3] %vm191, %v2164
  %s2168 = ssub.s32 0, %s68
  %v2169 = vld [vmem:[#allocation4] sm:$0x3]
  %v2170 = vld [vmem:[#allocation5] sm:$0x3]
  %v2171 = vld [vmem:[%s47] sm:$0x3]
  %v2172 = vld [vmem:[%s3] sm:$0xff]
  %v2173 = vld [vmem:[%s3 + $0x8] sm:$0xff]
  %v2174 = vld [vmem:[%s3 + $0x10] sm:$0xff]
  %v2175 = vld [vmem:[%s3 + $0x18] sm:$0xff]
  %v2177 = vsel %vm76, %v2169, 0
  %2179 = vmatprep.subr.mxu0 0.0
  %2180 = vmatpush1.msra.mxu0 %v2172
  %2181 = vmatprep.subr.mxu0 0.0
  %2182 = vmatpush1.msra.mxu0 %v2173
  %2183 = vmatprep.subr.mxu0 0.0
  %2184 = vmatpush1.msra.mxu0 %v2174
  %2185 = vmatprep.subr.mxu0 0.0
  %2186 = vmatpush1.msra.mxu0 %v2175
  %2187 = vmatprep.subr.mxu0 0.0
  %2188 = vmatpush1.msra.mxu0 0.0
  %2189 = vmatprep.subr.mxu0 0.0
  %2190 = vmatpush1.msra.mxu0 0.0
  %2191 = vmatprep.subr.mxu0 0.0
  %2192 = vmatpush1.msra.mxu0 0.0
  %2193 = vmatprep.subr.mxu0 0.0
  %2194 = vmatpush1.msra.mxu0 0.0
  %2195 = vmatprep.subr.mxu0 0.0
  %2196 = vmatpush1.msra.mxu0 0.0
  %2197 = vmatprep.subr.mxu0 0.0
  %2198 = vmatpush1.msra.mxu0 0.0
  %2199 = vmatprep.subr.mxu0 0.0
  %2200 = vmatpush1.msra.mxu0 0.0
  %2201 = vmatprep.subr.mxu0 0.0
  %2202 = vmatpush1.msra.mxu0 0.0
  %2203 = vmatprep.subr.mxu0 0.0
  %2204 = vmatpush1.msra.mxu0 0.0
  %2205 = vmatprep.subr.mxu0 0.0
  %2206 = vmatpush1.msra.mxu0 0.0
  %2207 = vmatprep.subr.mxu0 0.0
  %2208 = vmatpush1.msra.mxu0 0.0
  %2209 = vmatprep.subr.mxu0 0.0
  %2210 = vmatpush1.msra.mxu0 0.0
  %2211 = vmatprep.subr.mxu0 0.0
  %2212 = vmatpush1.msra.mxu0 0.0
  %2213 = vmatprep.subr.mxu0 0.0
  %2214 = vmatpush1.msra.mxu0 0.0
  %2215 = vmatprep.subr.mxu0 0.0
  %2216 = vmatpush1.msra.mxu0 0.0
  %2217 = vmatprep.subr.mxu0 0.0
  %2218 = vmatpush1.msra.mxu0 0.0
  %2219 = vmatprep.subr.mxu0 0.0
  %2220 = vmatpush1.msra.mxu0 0.0
  %2221 = vmatprep.subr.mxu0 0.0
  %2222 = vmatpush1.msra.mxu0 0.0
  %2223 = vmatprep.subr.mxu0 0.0
  %2224 = vmatpush1.msra.mxu0 0.0
  %2225 = vmatprep.subr.mxu0 0.0
  %2226 = vmatpush1.msra.mxu0 0.0
  %2227 = vmatprep.subr.mxu0 0.0
  %2228 = vmatpush1.msra.mxu0 0.0
  %2229 = vmatprep.subr.mxu0 0.0
  %2230 = vmatpush1.msra.mxu0 0.0
  %2231 = vmatprep.subr.mxu0 0.0
  %2232 = vmatpush1.msra.mxu0 0.0
  %2233 = vmatprep.subr.mxu0 0.0
  %2234 = vmatpush1.msra.mxu0 0.0
  %2235 = vmatprep.subr.mxu0 0.0
  %2236 = vmatpush1.msra.mxu0 0.0
  %2237 = vmatprep.subr.mxu0 0.0
  %2238 = vmatpush1.msra.mxu0 0.0
  %2239 = vmatprep.subr.mxu0 0.0
  %2240 = vmatpush1.msra.mxu0 0.0
  %2241 = vmatprep.subr.mxu0 0.0
  %2242 = vmatpush1.msra.mxu0 0.0
  %2243 = vmatprep.mubr.f32.mxu0 0.0
  %2244 = vmatmul.mubr.f32.gmra.mrb[0].mxu0 %v2177
  %v2245 = vpop.f32.mrb[0].mxu0
  %v2246 = vadd.f32 0.0, %v2245
  %v2247 = vpop.f32.mrb[0].mxu0
  %2248 = vdwg.mxu0
  %v2249 = vadd.f32 %v2171, %v2246
  %v2250 = vxor.u32 %v2249, 2147483648
  %v2251 = vmul.f32 %v2250, 1.442695
  %v2252 = vpow.pop %v2251
  %v2253 = vadd.f32 %v2252, 1.0
  %v2254 = vrcp.pop %v2253
  %v2255 = vmul.f32 1.0, %v2254
  %v2256 = vtanh.pop %v2249
  %2258 = vrot.lane.b32.xlu0 %v2170, 32
  %v2259 = vpop.permute.xlu0 %2258
  %v2261 = vmul.f32 %v2255, %v2259
  %2263 = vrot.lane.b32.xlu0 %v2256, 64
  %v2264 = vpop.permute.xlu0 %2263
  %v2266 = vmul.f32 %v2255, %v2264
  %2268 = vrot.lane.b32.xlu0 %v2266, 32
  %v2269 = vpop.permute.xlu0 %2268
  %v2271 = vadd.f32 %v2261, %v2269
  %v2272 = vtanh.pop %v2271
  %2274 = vrot.lane.b32.xlu0 %v2272, 64
  %v2275 = vpop.permute.xlu0 %2274
  %v2277 = vmul.f32 %v2255, %v2275
  %v2278 = vstv %s2168
  %vm2279 = vcmp.lt.s32.totalorder %v2278, %v67
  %v2280 = vsel %vm2279, 1, 0
  %2281 = vset.pattern.permute.xlu0 0
  %2282 = vperm.xlu0 %2281, %v2280
  %v2283 = vpop.permute.xlu0 %2282
  %vm2284 = vcmp.eq.s32.totalorder %v2283, 1
  %v2285 = vsel %vm2284, %v2271, %v2259
  %2287 = vrot.lane.b32.xlu0 %v2285, 96
  %v2288 = vpop.permute.xlu0 %2287
  %2290 = vst.msk [vmem:[#allocation5] sm:$0x3] %vm191, %v2288
  %2291 = vrot.lane.b32.xlu0 %v2169, 96
  %v2292 = vpop.permute.xlu0 %2291
  %v2294 = vsel %vm2284, %v2277, %v2292
  %2296 = vrot.lane.b32.xlu0 %v2294, 32
  %v2297 = vpop.permute.xlu0 %2296
  %2299 = vst.msk [vmem:[#allocation4] sm:$0x3] %vm191, %v2297
  %v2300 = vsel %vm2284, %v2277, 0.0
  %2302 = vrot.lane.b32.xlu0 %v2300, 32
  %v2303 = vpop.permute.xlu0 %2302
  %2305 = vst.msk [vmem:[%s55] sm:$0x3] %vm191, %v2303
  %s2306 = ssub.s32 0, 0
  %s2307 = smul.u32 8, %s2306
  %p2308 = scmp.lt.s32.totalorder %s2307, 7
  %s2309 = scalar_select %p2308, %s2307, 7
  %s2310 = smul.addr %s2309, 2
  %s2311 = scalar_lea.vmem %s6, %s2310
  // Predicated region
  $region26: #{blstm_forward.9} parent=0 // pred_check
    _
  $region27: #{blstm_forward.9} parent=0 // pred_check_branch
    %2313 = sbr.rel (0) target = $region29
  $region28: #{blstm_forward.9} parent=0 // pred_region
    _
  $region29: #{blstm_forward.9} parent=0 // pred_fallthru
    _
  // Predicated region
  $region30: #{blstm_forward.9} parent=0 // pred_check
    _
  $region31: #{blstm_forward.9} parent=0 // pred_check_branch
    %2315 = sbr.rel (0) target = $region33
  $region32: #{blstm_forward.9} parent=0 // pred_region
    %s2316 = ssub.s32 0, 0
    %s2317 = smul.u32 8, %s2316
  $region33: #{blstm_forward.9} parent=0 // pred_fallthru
    _
  // Predicated region
  $region34: #{blstm_forward.9} parent=0 // pred_check
    _
  $region35: #{blstm_forward.9} parent=0 // pred_check_branch
    %2319 = sbr.rel (0) target = $region37
  $region36: #{blstm_forward.9} parent=0 // pred_region
    _
  $region37: #{blstm_forward.9} parent=0 // pred_fallthru
    _
  // Predicated region
  $region38: #{blstm_forward.9} parent=0 // pred_check
    _
  $region39: #{blstm_forward.9} parent=0 // pred_check_branch
    %2321 = sbr.rel (0) target = $region41
  $region40: #{blstm_forward.9} parent=0 // pred_region
    %s2322 = ssub.s32 0, 0
    %s2323 = smul.u32 8, %s2322
    %p2324 = scmp.lt.s32.totalorder %s2323, 7
    %s2325 = scalar_select %p2324, %s2323, 7
    %s2326 = smul.addr %s2325, 2
    %s2327 = scalar_lea.vmem %s6, %s2326
  $region41: #{blstm_forward.9} parent=0 // pred_fallthru
    _

</llo_original>
